<compile_context>
chip_gen: v7x
topology: tpu7x:2x2x1
jax: 0.10.0
libtpu: 0.0.40
codegen_flags: <defaults>
</compile_context>

<pallas_src>
import jax
import jax.numpy as jnp
from jax.experimental import pallas as pl
from jax.experimental.pallas import tpu as pltpu

H = W = 28
HW = H * W              # 784
C_OUT = 10              # conv output channels
HID = 64                # hidden width of first Linear
OUT = 10                # final output width
FLAT = C_OUT * HW       # 7840
TILE_N = 256            # max batch rows per grid step


# ------------------------------ fused kernel --------------------------------

def fused_kernel(wc_ref, bc_ref, mask_ref, x_ref, w1_ref, b1_ref, w2_ref,
                 b2_ref, o_ref):
    # wc_ref: SMEM (10, 4) conv taps ordered [kh*2 + kw]; bc_ref: SMEM (10,)
    # mask_ref: VMEM (1, 784) f32, 1.0 where w < 27 else 0.0 (resident)
    # x_ref : VMEM (T, 784) flat single-channel image tile (p = h*28 + w)
    # w1_ref: VMEM (7840, 64); b1_ref: (1, 64); w2_ref: (64, 10); b2_ref: (1, 10)
    # o_ref : VMEM (T, 10)
    xf = x_ref[...]                                       # (T, 784), f32
    t = xf.shape[0]
    m = mask_ref[...]                                     # (1, 784)

    # 'same' padding for kernel_size=2 pads 0 before / 1 after on H and W, so
    # tap (kh, kw) is the flat image shifted left by kh*28 + kw with zero fill;
    # kw=1 taps additionally zero the wrapped w==27 column via the mask.
    z1 = jnp.zeros((t, 1), jnp.float32)
    z28 = jnp.zeros((t, W), jnp.float32)
    z29 = jnp.zeros((t, W + 1), jnp.float32)
    x00 = xf                                              # tap (0, 0)
    x01 = jnp.concatenate([xf[:, 1:], z1], axis=1) * m    # tap (0, 1)
    x10 = jnp.concatenate([xf[:, W:], z28], axis=1)       # tap (1, 0)
    x11 = jnp.concatenate([xf[:, W + 1:], z29], axis=1) * m   # tap (1, 1)

    # Conv + ReLU per output channel on lane-dense (T, 784) slabs, each slab
    # immediately reduced onto a small (T, 64) accumulator through the MXU.
    # Channel-major slab order reproduces torch.nn.Flatten on NCHW.
    h = jnp.zeros((t, HID), jnp.float32)
    for c in range(C_OUT):                                # static unroll (10)
        y = (x00 * wc_ref[c, 0] + x01 * wc_ref[c, 1]
             + x10 * wc_ref[c, 2] + x11 * wc_ref[c, 3] + bc_ref[c])
        y = jnp.maximum(y, 0.0)                           # (T, 784)
        h = h + jnp.dot(y, w1_ref[c * HW:(c + 1) * HW, :],
                        preferred_element_type=jnp.float32)

    # MLP tail: bias + ReLU, then Linear(64, 10).
    h = jnp.maximum(h + b1_ref[...], 0.0)                 # (T, 64)
    o_ref[...] = (jnp.dot(h, w2_ref[...], preferred_element_type=jnp.float32)
                  + b2_ref[...])


# -------------------------------- wrappers -----------------------------------

def prepare_params(params):
    """One-time (offline) parameter prep: flatten conv taps, pre-transpose the
    Linear weights and precompute the w<27 interior mask so no transpose /
    reshape / iota work runs in the forward path."""
    conv_w, conv_b, w1, b1, w2, b2 = params
    col = jnp.arange(HW, dtype=jnp.int32) % W
    interior = (col < (W - 1)).astype(jnp.float32).reshape(1, HW)  # (1, 784)
    return (conv_w.reshape(C_OUT, 4).astype(jnp.float32),     # (10, 4)
            conv_b.astype(jnp.float32),                       # (10,)
            interior,                                         # (1, 784)
            jnp.asarray(w1.T, jnp.float32),                   # (7840, 64)
            b1.reshape(1, HID).astype(jnp.float32),           # (1, 64)
            jnp.asarray(w2.T, jnp.float32),                   # (64, 10)
            b2.reshape(1, OUT).astype(jnp.float32))           # (1, 10)


def _pick_tile(n):
    """Batch tile: exact size for tiny batches; otherwise cap at TILE_N while
    aiming for >= 2 grid steps so v7x's two TensorCores both get work."""
    if n <= 8:
        return n
    half = -(-n // 2)                 # cdiv(n, 2)
    half = ((half + 7) // 8) * 8      # sublane-aligned
    return int(min(TILE_N, half))


@jax.jit
def model1_forward(x, prepared):
    wc, bc, mask, w1t, b1r, w2t, b2r = prepared
    n = x.shape[0]
    xflat = x.reshape(n, HW)                 # (N,1,28,28) -> (N,784), contiguous
    tile = _pick_tile(n)
    grid = (pl.cdiv(n, tile),)
    return pl.pallas_call(
        fused_kernel,
        out_shape=jax.ShapeDtypeStruct((n, OUT), jnp.float32),
        grid=grid,
        in_specs=[
            pl.BlockSpec(memory_space=pltpu.MemorySpace.SMEM),   # conv taps
            pl.BlockSpec(memory_space=pltpu.MemorySpace.SMEM),   # conv bias
            pl.BlockSpec((1, HW), lambda i: (0, 0)),             # interior mask
            pl.BlockSpec((tile, HW), lambda i: (i, 0)),          # image tile
            pl.BlockSpec((FLAT, HID), lambda i: (0, 0)),         # w1^T, resident
            pl.BlockSpec((1, HID), lambda i: (0, 0)),            # b1
            pl.BlockSpec((HID, OUT), lambda i: (0, 0)),          # w2^T, resident
            pl.BlockSpec((1, OUT), lambda i: (0, 0)),            # b2
        ],
        out_specs=pl.BlockSpec((tile, OUT), lambda i: (i, 0)),
        compiler_params=pltpu.CompilerParams(
            dimension_semantics=("parallel",)),
    )(wc, bc, mask, xflat, w1t, b1r, w2t, b2r)


# ----------------------------- pure-JAX reference ----------------------------

def model1_reference(x, params):
    conv_w, conv_b, w1, b1, w2, b2 = params
    y = jax.lax.conv_general_dilated(
        x, conv_w, window_strides=(1, 1), padding=((0, 1), (0, 1)),
        dimension_numbers=("NCHW", "OIHW", "NCHW"))
    y = jnp.maximum(y + conv_b[None, :, None, None], 0.0)
    flat = y.reshape(x.shape[0], -1)
    h = jnp.maximum(flat @ w1.T + b1, 0.0)
    return h @ w2.T + b2


# ----------------------------------- main ------------------------------------

if __name__ == "__main__":
    key = jax.random.PRNGKey(0)
    k = jax.random.split(key, 8)

    # Deterministic synthetic parameters (shapes per Model1.__init__).
    conv_w = jax.random.normal(k[0], (C_OUT, 1, 2, 2), jnp.float32) * 0.5
    conv_b = jax.random.normal(k[1], (C_OUT,), jnp.float32) * 0.1
    w1 = jax.random.normal(k[2], (HID, FLAT), jnp.float32) * 0.02
    b1 = jax.random.normal(k[3], (HID,), jnp.float32) * 0.1
    w2 = jax.random.normal(k[4], (OUT, HID), jnp.float32) * 0.1
    b2 = jax.random.normal(k[5], (OUT,), jnp.float32) * 0.1
    params = (conv_w, conv_b, w1, b1, w2, b2)

    prepared = prepare_params(params)        # one-time offline weight prep

    # batch=2 (single tile) and batch=20 (multi-tile with a partial last tile:
    # exercises Pallas masking of padded output rows).
    for kk, n in ((k[6], 2), (k[7], 20)):
        x = jax.random.normal(kk, (n, 1, H, W), jnp.float32)
        out = jax.block_until_ready(model1_forward(x, prepared))
        ref = jax.block_until_ready(model1_reference(x, params))
        assert out.shape == (n, OUT)
        assert jnp.allclose(out, ref, rtol=5e-3, atol=5e-3), (
            f"n={n}: max abs diff {jnp.max(jnp.abs(out - ref))}")

    print("KERNEL_OK")
</pallas_src>

<mosaic_0001>
module attributes {stable_mosaic.version = 11 : i64} {
  func.func @fused_kernel(%arg0: i32, %arg1: memref<10x4xf32, #tpu.memory_space<smem>>, %arg2: memref<10xf32, #tpu.memory_space<smem>>, %arg3: memref<1x784xf32, #tpu.memory_space<vmem>>, %arg4: memref<2x784xf32, #tpu.memory_space<vmem>>, %arg5: memref<7840x64xf32, #tpu.memory_space<vmem>>, %arg6: memref<1x64xf32, #tpu.memory_space<vmem>>, %arg7: memref<64x10xf32, #tpu.memory_space<vmem>>, %arg8: memref<1x10xf32, #tpu.memory_space<vmem>>, %arg9: memref<2x10xf32, #tpu.memory_space<vmem>>) attributes {dimension_semantics = [#tpu.dimension_semantics<parallel>], iteration_bounds = array<i64: 1>, scalar_prefetch = 0 : i64, scratch_operands = 0 : i64, tpu.core_type = #tpu.core_type<tc>, window_params = [{transform_indices = @transform_0, window_bounds = array<i64: 10, 4>}, {transform_indices = @transform_1, window_bounds = array<i64: 10>}, {pipeline_mode = #tpu.pipeline_mode<synchronous>, transform_indices = @transform_2, window_bounds = array<i64: 1, 784>}, {transform_indices = @transform_3, window_bounds = array<i64: 2, 784>}, {pipeline_mode = #tpu.pipeline_mode<synchronous>, transform_indices = @transform_4, window_bounds = array<i64: 7840, 64>}, {pipeline_mode = #tpu.pipeline_mode<synchronous>, transform_indices = @transform_5, window_bounds = array<i64: 1, 64>}, {pipeline_mode = #tpu.pipeline_mode<synchronous>, transform_indices = @transform_6, window_bounds = array<i64: 64, 10>}, {pipeline_mode = #tpu.pipeline_mode<synchronous>, transform_indices = @transform_7, window_bounds = array<i64: 1, 10>}, {transform_indices = @transform_8, window_bounds = array<i64: 2, 10>}]} {
    %c0 = arith.constant 0 : index
    %c0_0 = arith.constant 0 : index
    %0 = vector.load %arg4[%c0, %c0_0] : memref<2x784xf32, #tpu.memory_space<vmem>>, vector<2x784xf32>
    %c0_1 = arith.constant 0 : index
    %c0_2 = arith.constant 0 : index
    %1 = vector.load %arg3[%c0_1, %c0_2] : memref<1x784xf32, #tpu.memory_space<vmem>>, vector<1x784xf32>
    %cst = arith.constant 0.000000e+00 : f32
    %2 = vector.broadcast %cst : f32 to vector<2x1xf32>
    %cst_3 = arith.constant 0.000000e+00 : f32
    %3 = vector.broadcast %cst_3 : f32 to vector<2x28xf32>
    %cst_4 = arith.constant 0.000000e+00 : f32
    %4 = vector.broadcast %cst_4 : f32 to vector<2x29xf32>
    %5 = vector.extract_strided_slice %0 {offsets = [0, 1], sizes = [2, 783], strides = [1, 1]} : vector<2x784xf32> to vector<2x783xf32>
    %6 = tpu.concatenate %5, %2 in 1 : vector<2x783xf32>, vector<2x1xf32> -> vector<2x784xf32>
    %7 = vector.broadcast %1 : vector<1x784xf32> to vector<2x784xf32>
    %8 = arith.mulf %6, %7 : vector<2x784xf32>
    %9 = vector.extract_strided_slice %0 {offsets = [0, 28], sizes = [2, 756], strides = [1, 1]} : vector<2x784xf32> to vector<2x756xf32>
    %10 = tpu.concatenate %9, %3 in 1 : vector<2x756xf32>, vector<2x28xf32> -> vector<2x784xf32>
    %11 = vector.extract_strided_slice %0 {offsets = [0, 29], sizes = [2, 755], strides = [1, 1]} : vector<2x784xf32> to vector<2x755xf32>
    %12 = tpu.concatenate %11, %4 in 1 : vector<2x755xf32>, vector<2x29xf32> -> vector<2x784xf32>
    %13 = vector.broadcast %1 : vector<1x784xf32> to vector<2x784xf32>
    %14 = arith.mulf %12, %13 : vector<2x784xf32>
    %cst_5 = arith.constant 0.000000e+00 : f32
    %15 = vector.broadcast %cst_5 : f32 to vector<2x64xf32>
    %c0_6 = arith.constant 0 : index
    %c0_7 = arith.constant 0 : index
    %16 = memref.load %arg1[%c0_6, %c0_7] : memref<10x4xf32, #tpu.memory_space<smem>>
    %17 = vector.broadcast %16 : f32 to vector<2x784xf32>
    %18 = arith.mulf %0, %17 : vector<2x784xf32>
    %c0_8 = arith.constant 0 : index
    %c1 = arith.constant 1 : index
    %19 = memref.load %arg1[%c0_8, %c1] : memref<10x4xf32, #tpu.memory_space<smem>>
    %20 = vector.broadcast %19 : f32 to vector<2x784xf32>
    %21 = arith.mulf %8, %20 : vector<2x784xf32>
    %22 = arith.addf %18, %21 : vector<2x784xf32>
    %c0_9 = arith.constant 0 : index
    %c2 = arith.constant 2 : index
    %23 = memref.load %arg1[%c0_9, %c2] : memref<10x4xf32, #tpu.memory_space<smem>>
    %24 = vector.broadcast %23 : f32 to vector<2x784xf32>
    %25 = arith.mulf %10, %24 : vector<2x784xf32>
    %26 = arith.addf %22, %25 : vector<2x784xf32>
    %c0_10 = arith.constant 0 : index
    %c3 = arith.constant 3 : index
    %27 = memref.load %arg1[%c0_10, %c3] : memref<10x4xf32, #tpu.memory_space<smem>>
    %28 = vector.broadcast %27 : f32 to vector<2x784xf32>
    %29 = arith.mulf %14, %28 : vector<2x784xf32>
    %30 = arith.addf %26, %29 : vector<2x784xf32>
    %c0_11 = arith.constant 0 : index
    %31 = memref.load %arg2[%c0_11] : memref<10xf32, #tpu.memory_space<smem>>
    %32 = vector.broadcast %31 : f32 to vector<2x784xf32>
    %33 = arith.addf %30, %32 : vector<2x784xf32>
    %cst_12 = arith.constant 0.000000e+00 : f32
    %34 = vector.broadcast %cst_12 : f32 to vector<2x784xf32>
    %35 = arith.maximumf %33, %34 : vector<2x784xf32>
    %c0_13 = arith.constant 0 : index
    %c0_14 = arith.constant 0 : index
    %36 = vector.load %arg5[%c0_13, %c0_14] : memref<7840x64xf32, #tpu.memory_space<vmem>>, vector<784x64xf32>
    %cst_15 = arith.constant dense<0.000000e+00> : vector<2x64xf32>
    %37 = tpu.matmul %35, %36, %cst_15 {dimension_numbers = #tpu.dot_dimension_numbers<[1], [0], [0], [1], [0, 0, 1, 1], [], []>} : vector<2x784xf32>, vector<784x64xf32>, vector<2x64xf32> -> vector<2x64xf32>
    %38 = arith.addf %15, %37 : vector<2x64xf32>
    %c1_16 = arith.constant 1 : index
    %c0_17 = arith.constant 0 : index
    %39 = memref.load %arg1[%c1_16, %c0_17] : memref<10x4xf32, #tpu.memory_space<smem>>
    %40 = vector.broadcast %39 : f32 to vector<2x784xf32>
    %41 = arith.mulf %0, %40 : vector<2x784xf32>
    %c1_18 = arith.constant 1 : index
    %c1_19 = arith.constant 1 : index
    %42 = memref.load %arg1[%c1_18, %c1_19] : memref<10x4xf32, #tpu.memory_space<smem>>
    %43 = vector.broadcast %42 : f32 to vector<2x784xf32>
    %44 = arith.mulf %8, %43 : vector<2x784xf32>
    %45 = arith.addf %41, %44 : vector<2x784xf32>
    %c1_20 = arith.constant 1 : index
    %c2_21 = arith.constant 2 : index
    %46 = memref.load %arg1[%c1_20, %c2_21] : memref<10x4xf32, #tpu.memory_space<smem>>
    %47 = vector.broadcast %46 : f32 to vector<2x784xf32>
    %48 = arith.mulf %10, %47 : vector<2x784xf32>
    %49 = arith.addf %45, %48 : vector<2x784xf32>
    %c1_22 = arith.constant 1 : index
    %c3_23 = arith.constant 3 : index
    %50 = memref.load %arg1[%c1_22, %c3_23] : memref<10x4xf32, #tpu.memory_space<smem>>
    %51 = vector.broadcast %50 : f32 to vector<2x784xf32>
    %52 = arith.mulf %14, %51 : vector<2x784xf32>
    %53 = arith.addf %49, %52 : vector<2x784xf32>
    %c1_24 = arith.constant 1 : index
    %54 = memref.load %arg2[%c1_24] : memref<10xf32, #tpu.memory_space<smem>>
    %55 = vector.broadcast %54 : f32 to vector<2x784xf32>
    %56 = arith.addf %53, %55 : vector<2x784xf32>
    %cst_25 = arith.constant 0.000000e+00 : f32
    %57 = vector.broadcast %cst_25 : f32 to vector<2x784xf32>
    %58 = arith.maximumf %56, %57 : vector<2x784xf32>
    %c784 = arith.constant 784 : index
    %c0_26 = arith.constant 0 : index
    %59 = vector.load %arg5[%c784, %c0_26] : memref<7840x64xf32, #tpu.memory_space<vmem>>, vector<784x64xf32>
    %cst_27 = arith.constant dense<0.000000e+00> : vector<2x64xf32>
    %60 = tpu.matmul %58, %59, %cst_27 {dimension_numbers = #tpu.dot_dimension_numbers<[1], [0], [0], [1], [0, 0, 1, 1], [], []>} : vector<2x784xf32>, vector<784x64xf32>, vector<2x64xf32> -> vector<2x64xf32>
    %61 = arith.addf %38, %60 : vector<2x64xf32>
    %c2_28 = arith.constant 2 : index
    %c0_29 = arith.constant 0 : index
    %62 = memref.load %arg1[%c2_28, %c0_29] : memref<10x4xf32, #tpu.memory_space<smem>>
    %63 = vector.broadcast %62 : f32 to vector<2x784xf32>
    %64 = arith.mulf %0, %63 : vector<2x784xf32>
    %c2_30 = arith.constant 2 : index
    %c1_31 = arith.constant 1 : index
    %65 = memref.load %arg1[%c2_30, %c1_31] : memref<10x4xf32, #tpu.memory_space<smem>>
    %66 = vector.broadcast %65 : f32 to vector<2x784xf32>
    %67 = arith.mulf %8, %66 : vector<2x784xf32>
    %68 = arith.addf %64, %67 : vector<2x784xf32>
    %c2_32 = arith.constant 2 : index
    %c2_33 = arith.constant 2 : index
    %69 = memref.load %arg1[%c2_32, %c2_33] : memref<10x4xf32, #tpu.memory_space<smem>>
    %70 = vector.broadcast %69 : f32 to vector<2x784xf32>
    %71 = arith.mulf %10, %70 : vector<2x784xf32>
    %72 = arith.addf %68, %71 : vector<2x784xf32>
    %c2_34 = arith.constant 2 : index
    %c3_35 = arith.constant 3 : index
    %73 = memref.load %arg1[%c2_34, %c3_35] : memref<10x4xf32, #tpu.memory_space<smem>>
    %74 = vector.broadcast %73 : f32 to vector<2x784xf32>
    %75 = arith.mulf %14, %74 : vector<2x784xf32>
    %76 = arith.addf %72, %75 : vector<2x784xf32>
    %c2_36 = arith.constant 2 : index
    %77 = memref.load %arg2[%c2_36] : memref<10xf32, #tpu.memory_space<smem>>
    %78 = vector.broadcast %77 : f32 to vector<2x784xf32>
    %79 = arith.addf %76, %78 : vector<2x784xf32>
    %cst_37 = arith.constant 0.000000e+00 : f32
    %80 = vector.broadcast %cst_37 : f32 to vector<2x784xf32>
    %81 = arith.maximumf %79, %80 : vector<2x784xf32>
    %c1568 = arith.constant 1568 : index
    %c0_38 = arith.constant 0 : index
    %82 = vector.load %arg5[%c1568, %c0_38] : memref<7840x64xf32, #tpu.memory_space<vmem>>, vector<784x64xf32>
    %cst_39 = arith.constant dense<0.000000e+00> : vector<2x64xf32>
    %83 = tpu.matmul %81, %82, %cst_39 {dimension_numbers = #tpu.dot_dimension_numbers<[1], [0], [0], [1], [0, 0, 1, 1], [], []>} : vector<2x784xf32>, vector<784x64xf32>, vector<2x64xf32> -> vector<2x64xf32>
    %84 = arith.addf %61, %83 : vector<2x64xf32>
    %c3_40 = arith.constant 3 : index
    %c0_41 = arith.constant 0 : index
    %85 = memref.load %arg1[%c3_40, %c0_41] : memref<10x4xf32, #tpu.memory_space<smem>>
    %86 = vector.broadcast %85 : f32 to vector<2x784xf32>
    %87 = arith.mulf %0, %86 : vector<2x784xf32>
    %c3_42 = arith.constant 3 : index
    %c1_43 = arith.constant 1 : index
    %88 = memref.load %arg1[%c3_42, %c1_43] : memref<10x4xf32, #tpu.memory_space<smem>>
    %89 = vector.broadcast %88 : f32 to vector<2x784xf32>
    %90 = arith.mulf %8, %89 : vector<2x784xf32>
    %91 = arith.addf %87, %90 : vector<2x784xf32>
    %c3_44 = arith.constant 3 : index
    %c2_45 = arith.constant 2 : index
    %92 = memref.load %arg1[%c3_44, %c2_45] : memref<10x4xf32, #tpu.memory_space<smem>>
    %93 = vector.broadcast %92 : f32 to vector<2x784xf32>
    %94 = arith.mulf %10, %93 : vector<2x784xf32>
    %95 = arith.addf %91, %94 : vector<2x784xf32>
    %c3_46 = arith.constant 3 : index
    %c3_47 = arith.constant 3 : index
    %96 = memref.load %arg1[%c3_46, %c3_47] : memref<10x4xf32, #tpu.memory_space<smem>>
    %97 = vector.broadcast %96 : f32 to vector<2x784xf32>
    %98 = arith.mulf %14, %97 : vector<2x784xf32>
    %99 = arith.addf %95, %98 : vector<2x784xf32>
    %c3_48 = arith.constant 3 : index
    %100 = memref.load %arg2[%c3_48] : memref<10xf32, #tpu.memory_space<smem>>
    %101 = vector.broadcast %100 : f32 to vector<2x784xf32>
    %102 = arith.addf %99, %101 : vector<2x784xf32>
    %cst_49 = arith.constant 0.000000e+00 : f32
    %103 = vector.broadcast %cst_49 : f32 to vector<2x784xf32>
    %104 = arith.maximumf %102, %103 : vector<2x784xf32>
    %c2352 = arith.constant 2352 : index
    %c0_50 = arith.constant 0 : index
    %105 = vector.load %arg5[%c2352, %c0_50] : memref<7840x64xf32, #tpu.memory_space<vmem>>, vector<784x64xf32>
    %cst_51 = arith.constant dense<0.000000e+00> : vector<2x64xf32>
    %106 = tpu.matmul %104, %105, %cst_51 {dimension_numbers = #tpu.dot_dimension_numbers<[1], [0], [0], [1], [0, 0, 1, 1], [], []>} : vector<2x784xf32>, vector<784x64xf32>, vector<2x64xf32> -> vector<2x64xf32>
    %107 = arith.addf %84, %106 : vector<2x64xf32>
    %c4 = arith.constant 4 : index
    %c0_52 = arith.constant 0 : index
    %108 = memref.load %arg1[%c4, %c0_52] : memref<10x4xf32, #tpu.memory_space<smem>>
    %109 = vector.broadcast %108 : f32 to vector<2x784xf32>
    %110 = arith.mulf %0, %109 : vector<2x784xf32>
    %c4_53 = arith.constant 4 : index
    %c1_54 = arith.constant 1 : index
    %111 = memref.load %arg1[%c4_53, %c1_54] : memref<10x4xf32, #tpu.memory_space<smem>>
    %112 = vector.broadcast %111 : f32 to vector<2x784xf32>
    %113 = arith.mulf %8, %112 : vector<2x784xf32>
    %114 = arith.addf %110, %113 : vector<2x784xf32>
    %c4_55 = arith.constant 4 : index
    %c2_56 = arith.constant 2 : index
    %115 = memref.load %arg1[%c4_55, %c2_56] : memref<10x4xf32, #tpu.memory_space<smem>>
    %116 = vector.broadcast %115 : f32 to vector<2x784xf32>
    %117 = arith.mulf %10, %116 : vector<2x784xf32>
    %118 = arith.addf %114, %117 : vector<2x784xf32>
    %c4_57 = arith.constant 4 : index
    %c3_58 = arith.constant 3 : index
    %119 = memref.load %arg1[%c4_57, %c3_58] : memref<10x4xf32, #tpu.memory_space<smem>>
    %120 = vector.broadcast %119 : f32 to vector<2x784xf32>
    %121 = arith.mulf %14, %120 : vector<2x784xf32>
    %122 = arith.addf %118, %121 : vector<2x784xf32>
    %c4_59 = arith.constant 4 : index
    %123 = memref.load %arg2[%c4_59] : memref<10xf32, #tpu.memory_space<smem>>
    %124 = vector.broadcast %123 : f32 to vector<2x784xf32>
    %125 = arith.addf %122, %124 : vector<2x784xf32>
    %cst_60 = arith.constant 0.000000e+00 : f32
    %126 = vector.broadcast %cst_60 : f32 to vector<2x784xf32>
    %127 = arith.maximumf %125, %126 : vector<2x784xf32>
    %c3136 = arith.constant 3136 : index
    %c0_61 = arith.constant 0 : index
    %128 = vector.load %arg5[%c3136, %c0_61] : memref<7840x64xf32, #tpu.memory_space<vmem>>, vector<784x64xf32>
    %cst_62 = arith.constant dense<0.000000e+00> : vector<2x64xf32>
    %129 = tpu.matmul %127, %128, %cst_62 {dimension_numbers = #tpu.dot_dimension_numbers<[1], [0], [0], [1], [0, 0, 1, 1], [], []>} : vector<2x784xf32>, vector<784x64xf32>, vector<2x64xf32> -> vector<2x64xf32>
    %130 = arith.addf %107, %129 : vector<2x64xf32>
    %c5 = arith.constant 5 : index
    %c0_63 = arith.constant 0 : index
    %131 = memref.load %arg1[%c5, %c0_63] : memref<10x4xf32, #tpu.memory_space<smem>>
    %132 = vector.broadcast %131 : f32 to vector<2x784xf32>
    %133 = arith.mulf %0, %132 : vector<2x784xf32>
    %c5_64 = arith.constant 5 : index
    %c1_65 = arith.constant 1 : index
    %134 = memref.load %arg1[%c5_64, %c1_65] : memref<10x4xf32, #tpu.memory_space<smem>>
    %135 = vector.broadcast %134 : f32 to vector<2x784xf32>
    %136 = arith.mulf %8, %135 : vector<2x784xf32>
    %137 = arith.addf %133, %136 : vector<2x784xf32>
    %c5_66 = arith.constant 5 : index
    %c2_67 = arith.constant 2 : index
    %138 = memref.load %arg1[%c5_66, %c2_67] : memref<10x4xf32, #tpu.memory_space<smem>>
    %139 = vector.broadcast %138 : f32 to vector<2x784xf32>
    %140 = arith.mulf %10, %139 : vector<2x784xf32>
    %141 = arith.addf %137, %140 : vector<2x784xf32>
    %c5_68 = arith.constant 5 : index
    %c3_69 = arith.constant 3 : index
    %142 = memref.load %arg1[%c5_68, %c3_69] : memref<10x4xf32, #tpu.memory_space<smem>>
    %143 = vector.broadcast %142 : f32 to vector<2x784xf32>
    %144 = arith.mulf %14, %143 : vector<2x784xf32>
    %145 = arith.addf %141, %144 : vector<2x784xf32>
    %c5_70 = arith.constant 5 : index
    %146 = memref.load %arg2[%c5_70] : memref<10xf32, #tpu.memory_space<smem>>
    %147 = vector.broadcast %146 : f32 to vector<2x784xf32>
    %148 = arith.addf %145, %147 : vector<2x784xf32>
    %cst_71 = arith.constant 0.000000e+00 : f32
    %149 = vector.broadcast %cst_71 : f32 to vector<2x784xf32>
    %150 = arith.maximumf %148, %149 : vector<2x784xf32>
    %c3920 = arith.constant 3920 : index
    %c0_72 = arith.constant 0 : index
    %151 = vector.load %arg5[%c3920, %c0_72] : memref<7840x64xf32, #tpu.memory_space<vmem>>, vector<784x64xf32>
    %cst_73 = arith.constant dense<0.000000e+00> : vector<2x64xf32>
    %152 = tpu.matmul %150, %151, %cst_73 {dimension_numbers = #tpu.dot_dimension_numbers<[1], [0], [0], [1], [0, 0, 1, 1], [], []>} : vector<2x784xf32>, vector<784x64xf32>, vector<2x64xf32> -> vector<2x64xf32>
    %153 = arith.addf %130, %152 : vector<2x64xf32>
    %c6 = arith.constant 6 : index
    %c0_74 = arith.constant 0 : index
    %154 = memref.load %arg1[%c6, %c0_74] : memref<10x4xf32, #tpu.memory_space<smem>>
    %155 = vector.broadcast %154 : f32 to vector<2x784xf32>
    %156 = arith.mulf %0, %155 : vector<2x784xf32>
    %c6_75 = arith.constant 6 : index
    %c1_76 = arith.constant 1 : index
    %157 = memref.load %arg1[%c6_75, %c1_76] : memref<10x4xf32, #tpu.memory_space<smem>>
    %158 = vector.broadcast %157 : f32 to vector<2x784xf32>
    %159 = arith.mulf %8, %158 : vector<2x784xf32>
    %160 = arith.addf %156, %159 : vector<2x784xf32>
    %c6_77 = arith.constant 6 : index
    %c2_78 = arith.constant 2 : index
    %161 = memref.load %arg1[%c6_77, %c2_78] : memref<10x4xf32, #tpu.memory_space<smem>>
    %162 = vector.broadcast %161 : f32 to vector<2x784xf32>
    %163 = arith.mulf %10, %162 : vector<2x784xf32>
    %164 = arith.addf %160, %163 : vector<2x784xf32>
    %c6_79 = arith.constant 6 : index
    %c3_80 = arith.constant 3 : index
    %165 = memref.load %arg1[%c6_79, %c3_80] : memref<10x4xf32, #tpu.memory_space<smem>>
    %166 = vector.broadcast %165 : f32 to vector<2x784xf32>
    %167 = arith.mulf %14, %166 : vector<2x784xf32>
    %168 = arith.addf %164, %167 : vector<2x784xf32>
    %c6_81 = arith.constant 6 : index
    %169 = memref.load %arg2[%c6_81] : memref<10xf32, #tpu.memory_space<smem>>
    %170 = vector.broadcast %169 : f32 to vector<2x784xf32>
    %171 = arith.addf %168, %170 : vector<2x784xf32>
    %cst_82 = arith.constant 0.000000e+00 : f32
    %172 = vector.broadcast %cst_82 : f32 to vector<2x784xf32>
    %173 = arith.maximumf %171, %172 : vector<2x784xf32>
    %c4704 = arith.constant 4704 : index
    %c0_83 = arith.constant 0 : index
    %174 = vector.load %arg5[%c4704, %c0_83] : memref<7840x64xf32, #tpu.memory_space<vmem>>, vector<784x64xf32>
    %cst_84 = arith.constant dense<0.000000e+00> : vector<2x64xf32>
    %175 = tpu.matmul %173, %174, %cst_84 {dimension_numbers = #tpu.dot_dimension_numbers<[1], [0], [0], [1], [0, 0, 1, 1], [], []>} : vector<2x784xf32>, vector<784x64xf32>, vector<2x64xf32> -> vector<2x64xf32>
    %176 = arith.addf %153, %175 : vector<2x64xf32>
    %c7 = arith.constant 7 : index
    %c0_85 = arith.constant 0 : index
    %177 = memref.load %arg1[%c7, %c0_85] : memref<10x4xf32, #tpu.memory_space<smem>>
    %178 = vector.broadcast %177 : f32 to vector<2x784xf32>
    %179 = arith.mulf %0, %178 : vector<2x784xf32>
    %c7_86 = arith.constant 7 : index
    %c1_87 = arith.constant 1 : index
    %180 = memref.load %arg1[%c7_86, %c1_87] : memref<10x4xf32, #tpu.memory_space<smem>>
    %181 = vector.broadcast %180 : f32 to vector<2x784xf32>
    %182 = arith.mulf %8, %181 : vector<2x784xf32>
    %183 = arith.addf %179, %182 : vector<2x784xf32>
    %c7_88 = arith.constant 7 : index
    %c2_89 = arith.constant 2 : index
    %184 = memref.load %arg1[%c7_88, %c2_89] : memref<10x4xf32, #tpu.memory_space<smem>>
    %185 = vector.broadcast %184 : f32 to vector<2x784xf32>
    %186 = arith.mulf %10, %185 : vector<2x784xf32>
    %187 = arith.addf %183, %186 : vector<2x784xf32>
    %c7_90 = arith.constant 7 : index
    %c3_91 = arith.constant 3 : index
    %188 = memref.load %arg1[%c7_90, %c3_91] : memref<10x4xf32, #tpu.memory_space<smem>>
    %189 = vector.broadcast %188 : f32 to vector<2x784xf32>
    %190 = arith.mulf %14, %189 : vector<2x784xf32>
    %191 = arith.addf %187, %190 : vector<2x784xf32>
    %c7_92 = arith.constant 7 : index
    %192 = memref.load %arg2[%c7_92] : memref<10xf32, #tpu.memory_space<smem>>
    %193 = vector.broadcast %192 : f32 to vector<2x784xf32>
    %194 = arith.addf %191, %193 : vector<2x784xf32>
    %cst_93 = arith.constant 0.000000e+00 : f32
    %195 = vector.broadcast %cst_93 : f32 to vector<2x784xf32>
    %196 = arith.maximumf %194, %195 : vector<2x784xf32>
    %c5488 = arith.constant 5488 : index
    %c0_94 = arith.constant 0 : index
    %197 = vector.load %arg5[%c5488, %c0_94] : memref<7840x64xf32, #tpu.memory_space<vmem>>, vector<784x64xf32>
    %cst_95 = arith.constant dense<0.000000e+00> : vector<2x64xf32>
    %198 = tpu.matmul %196, %197, %cst_95 {dimension_numbers = #tpu.dot_dimension_numbers<[1], [0], [0], [1], [0, 0, 1, 1], [], []>} : vector<2x784xf32>, vector<784x64xf32>, vector<2x64xf32> -> vector<2x64xf32>
    %199 = arith.addf %176, %198 : vector<2x64xf32>
    %c8 = arith.constant 8 : index
    %c0_96 = arith.constant 0 : index
    %200 = memref.load %arg1[%c8, %c0_96] : memref<10x4xf32, #tpu.memory_space<smem>>
    %201 = vector.broadcast %200 : f32 to vector<2x784xf32>
    %202 = arith.mulf %0, %201 : vector<2x784xf32>
    %c8_97 = arith.constant 8 : index
    %c1_98 = arith.constant 1 : index
    %203 = memref.load %arg1[%c8_97, %c1_98] : memref<10x4xf32, #tpu.memory_space<smem>>
    %204 = vector.broadcast %203 : f32 to vector<2x784xf32>
    %205 = arith.mulf %8, %204 : vector<2x784xf32>
    %206 = arith.addf %202, %205 : vector<2x784xf32>
    %c8_99 = arith.constant 8 : index
    %c2_100 = arith.constant 2 : index
    %207 = memref.load %arg1[%c8_99, %c2_100] : memref<10x4xf32, #tpu.memory_space<smem>>
    %208 = vector.broadcast %207 : f32 to vector<2x784xf32>
    %209 = arith.mulf %10, %208 : vector<2x784xf32>
    %210 = arith.addf %206, %209 : vector<2x784xf32>
    %c8_101 = arith.constant 8 : index
    %c3_102 = arith.constant 3 : index
    %211 = memref.load %arg1[%c8_101, %c3_102] : memref<10x4xf32, #tpu.memory_space<smem>>
    %212 = vector.broadcast %211 : f32 to vector<2x784xf32>
    %213 = arith.mulf %14, %212 : vector<2x784xf32>
    %214 = arith.addf %210, %213 : vector<2x784xf32>
    %c8_103 = arith.constant 8 : index
    %215 = memref.load %arg2[%c8_103] : memref<10xf32, #tpu.memory_space<smem>>
    %216 = vector.broadcast %215 : f32 to vector<2x784xf32>
    %217 = arith.addf %214, %216 : vector<2x784xf32>
    %cst_104 = arith.constant 0.000000e+00 : f32
    %218 = vector.broadcast %cst_104 : f32 to vector<2x784xf32>
    %219 = arith.maximumf %217, %218 : vector<2x784xf32>
    %c6272 = arith.constant 6272 : index
    %c0_105 = arith.constant 0 : index
    %220 = vector.load %arg5[%c6272, %c0_105] : memref<7840x64xf32, #tpu.memory_space<vmem>>, vector<784x64xf32>
    %cst_106 = arith.constant dense<0.000000e+00> : vector<2x64xf32>
    %221 = tpu.matmul %219, %220, %cst_106 {dimension_numbers = #tpu.dot_dimension_numbers<[1], [0], [0], [1], [0, 0, 1, 1], [], []>} : vector<2x784xf32>, vector<784x64xf32>, vector<2x64xf32> -> vector<2x64xf32>
    %222 = arith.addf %199, %221 : vector<2x64xf32>
    %c9 = arith.constant 9 : index
    %c0_107 = arith.constant 0 : index
    %223 = memref.load %arg1[%c9, %c0_107] : memref<10x4xf32, #tpu.memory_space<smem>>
    %224 = vector.broadcast %223 : f32 to vector<2x784xf32>
    %225 = arith.mulf %0, %224 : vector<2x784xf32>
    %c9_108 = arith.constant 9 : index
    %c1_109 = arith.constant 1 : index
    %226 = memref.load %arg1[%c9_108, %c1_109] : memref<10x4xf32, #tpu.memory_space<smem>>
    %227 = vector.broadcast %226 : f32 to vector<2x784xf32>
    %228 = arith.mulf %8, %227 : vector<2x784xf32>
    %229 = arith.addf %225, %228 : vector<2x784xf32>
    %c9_110 = arith.constant 9 : index
    %c2_111 = arith.constant 2 : index
    %230 = memref.load %arg1[%c9_110, %c2_111] : memref<10x4xf32, #tpu.memory_space<smem>>
    %231 = vector.broadcast %230 : f32 to vector<2x784xf32>
    %232 = arith.mulf %10, %231 : vector<2x784xf32>
    %233 = arith.addf %229, %232 : vector<2x784xf32>
    %c9_112 = arith.constant 9 : index
    %c3_113 = arith.constant 3 : index
    %234 = memref.load %arg1[%c9_112, %c3_113] : memref<10x4xf32, #tpu.memory_space<smem>>
    %235 = vector.broadcast %234 : f32 to vector<2x784xf32>
    %236 = arith.mulf %14, %235 : vector<2x784xf32>
    %237 = arith.addf %233, %236 : vector<2x784xf32>
    %c9_114 = arith.constant 9 : index
    %238 = memref.load %arg2[%c9_114] : memref<10xf32, #tpu.memory_space<smem>>
    %239 = vector.broadcast %238 : f32 to vector<2x784xf32>
    %240 = arith.addf %237, %239 : vector<2x784xf32>
    %cst_115 = arith.constant 0.000000e+00 : f32
    %241 = vector.broadcast %cst_115 : f32 to vector<2x784xf32>
    %242 = arith.maximumf %240, %241 : vector<2x784xf32>
    %c7056 = arith.constant 7056 : index
    %c0_116 = arith.constant 0 : index
    %243 = vector.load %arg5[%c7056, %c0_116] : memref<7840x64xf32, #tpu.memory_space<vmem>>, vector<784x64xf32>
    %cst_117 = arith.constant dense<0.000000e+00> : vector<2x64xf32>
    %244 = tpu.matmul %242, %243, %cst_117 {dimension_numbers = #tpu.dot_dimension_numbers<[1], [0], [0], [1], [0, 0, 1, 1], [], []>} : vector<2x784xf32>, vector<784x64xf32>, vector<2x64xf32> -> vector<2x64xf32>
    %245 = arith.addf %222, %244 : vector<2x64xf32>
    %c0_118 = arith.constant 0 : index
    %c0_119 = arith.constant 0 : index
    %246 = vector.load %arg6[%c0_118, %c0_119] : memref<1x64xf32, #tpu.memory_space<vmem>>, vector<1x64xf32>
    %247 = vector.broadcast %246 : vector<1x64xf32> to vector<2x64xf32>
    %248 = arith.addf %245, %247 : vector<2x64xf32>
    %cst_120 = arith.constant 0.000000e+00 : f32
    %249 = vector.broadcast %cst_120 : f32 to vector<2x64xf32>
    %250 = arith.maximumf %248, %249 : vector<2x64xf32>
    %c0_121 = arith.constant 0 : index
    %c0_122 = arith.constant 0 : index
    %251 = vector.load %arg7[%c0_121, %c0_122] : memref<64x10xf32, #tpu.memory_space<vmem>>, vector<64x10xf32>
    %cst_123 = arith.constant dense<0.000000e+00> : vector<2x10xf32>
    %252 = tpu.matmul %250, %251, %cst_123 {dimension_numbers = #tpu.dot_dimension_numbers<[1], [0], [0], [1], [0, 0, 1, 1], [], []>} : vector<2x64xf32>, vector<64x10xf32>, vector<2x10xf32> -> vector<2x10xf32>
    %c0_124 = arith.constant 0 : index
    %c0_125 = arith.constant 0 : index
    %253 = vector.load %arg8[%c0_124, %c0_125] : memref<1x10xf32, #tpu.memory_space<vmem>>, vector<1x10xf32>
    %254 = vector.broadcast %253 : vector<1x10xf32> to vector<2x10xf32>
    %255 = arith.addf %252, %254 : vector<2x10xf32>
    %c0_126 = arith.constant 0 : index
    %c0_127 = arith.constant 0 : index
    %256 = vector.load %arg9[%c0_126, %c0_127] : memref<2x10xf32, #tpu.memory_space<vmem>>, vector<2x10xf32>
    tpu.vector_store %arg9[%c0_126, %c0_127], %255 {strides = array<i32>} : memref<2x10xf32, #tpu.memory_space<vmem>>, vector<2x10xf32>,
    return
  }
  func.func @transform_0(%arg0: i32) -> (i32, i32) {
    %c0_i32 = arith.constant 0 : i32
    %c0_i32_0 = arith.constant 0 : i32
    %c0_i32_1 = arith.constant 0 : i32
    return %c0_i32, %c0_i32_0 : i32, i32
  }
  func.func @transform_1(%arg0: i32) -> i32 {
    %c0_i32 = arith.constant 0 : i32
    %c0_i32_0 = arith.constant 0 : i32
    return %c0_i32 : i32
  }
  func.func @transform_2(%arg0: i32) -> (i32, i32) {
    %c0_i32 = arith.constant 0 : i32
    %c0_i32_0 = arith.constant 0 : i32
    %c0_i32_1 = arith.constant 0 : i32
    return %c0_i32, %c0_i32_0 : i32, i32
  }
  func.func @transform_3(%arg0: i32) -> (i32, i32) {
    %c0_i32 = arith.constant 0 : i32
    %c0_i32_0 = arith.constant 0 : i32
    return %arg0, %c0_i32 : i32, i32
  }
  func.func @transform_4(%arg0: i32) -> (i32, i32) {
    %c0_i32 = arith.constant 0 : i32
    %c0_i32_0 = arith.constant 0 : i32
    %c0_i32_1 = arith.constant 0 : i32
    return %c0_i32, %c0_i32_0 : i32, i32
  }
  func.func @transform_5(%arg0: i32) -> (i32, i32) {
    %c0_i32 = arith.constant 0 : i32
    %c0_i32_0 = arith.constant 0 : i32
    %c0_i32_1 = arith.constant 0 : i32
    return %c0_i32, %c0_i32_0 : i32, i32
  }
  func.func @transform_6(%arg0: i32) -> (i32, i32) {
    %c0_i32 = arith.constant 0 : i32
    %c0_i32_0 = arith.constant 0 : i32
    %c0_i32_1 = arith.constant 0 : i32
    return %c0_i32, %c0_i32_0 : i32, i32
  }
  func.func @transform_7(%arg0: i32) -> (i32, i32) {
    %c0_i32 = arith.constant 0 : i32
    %c0_i32_0 = arith.constant 0 : i32
    %c0_i32_1 = arith.constant 0 : i32
    return %c0_i32, %c0_i32_0 : i32, i32
  }
  func.func @transform_8(%arg0: i32) -> (i32, i32) {
    %c0_i32 = arith.constant 0 : i32
    %c0_i32_0 = arith.constant 0 : i32
    return %arg0, %c0_i32 : i32, i32
  }
}

</mosaic_0001>

<llo_original>
// kernel: model1_forward.1
$region0: #{model1_forward.1}
  #allocation0 [shape = 'u32[]', space=smem, size = 0x4, offset = 0x4, fixed_abs, tag = 'smem constant byte address 0x4 - core index']
  #allocation1 [shape = 'u32[144,128]{1,0:T(1,128)}', space=vmem, size = 0x12000, scoped, tag = 'internal scratch']
  %s0 = inlined_call_operand.vmem [shape: f32[10,4], index: 0, kind: input, shape index: {}]
  %s1 = inlined_call_operand.vmem [shape: f32[10], index: 1, kind: input, shape index: {}]
  %s2 = inlined_call_operand.vmem [shape: f32[1,784], index: 2, kind: input, shape index: {}]
  %s3 = inlined_call_operand.vmem [shape: f32[2,784], index: 3, kind: input, shape index: {}]
  %s4 = inlined_call_operand.vmem [shape: f32[7840,64], index: 4, kind: input, shape index: {}]
  %s5 = inlined_call_operand.vmem [shape: f32[1,64], index: 5, kind: input, shape index: {}]
  %s6 = inlined_call_operand.vmem [shape: f32[64,10], index: 6, kind: input, shape index: {}]
  %s7 = inlined_call_operand.vmem [shape: f32[1,10], index: 7, kind: input, shape index: {}]
  %s8 = inlined_call_operand.hbm [shape: f32[2,10], index: 8, kind: output, shape index: {}]
  %s9 = sld [smem:[#allocation0]]
  $region50: #{model1_forward.1} parent=0
    _
  %s11 = ssub.s32 1, %s9
  %s12 = scalar_select 0, %s11, %s9
  $region1: #{model1_forward.1} parent=0
    #allocation2 [shape = 'u8[8192]{0}', space=smem, size = 0x2000, scoped, tag = 'input window, operand 0, single buffered']
    #allocation3 [shape = 's32[1]{0}', space=sflag, size = 0x4, scoped, tag = 'scoped memory for model1_forward.1']
    #allocation4 [shape = 's32[1]{0}', space=sflag, size = 0x4, scoped, tag = 'scoped memory for model1_forward.1']
    #allocation5 [shape = 'u8[512]{0}', space=smem, size = 0x200, scoped, tag = 'input window, operand 1, single buffered']
    #allocation6 [shape = 's32[1]{0}', space=sflag, size = 0x4, scoped, tag = 'scoped memory for model1_forward.1']
    #allocation7 [shape = 'u8[1024]{0}', space=vmem, size = 0x400, scoped, tag = 'output window, operand 0, single buffered']
    %13 = vsyncpa [#allocation4], 0
    %14 = vsyncpa [#allocation6], 0
    %15 = vsyncpa [#allocation3], 0
    // Predicated region
    $region2: #{model1_forward.1} parent=1 // pred_check
      _
    $region3: #{model1_forward.1} parent=1 // pred_check_branch
      %17 = sbr.rel (0) target = $region5
    $region4: #{model1_forward.1} parent=1 // pred_region
      %s19 = ssub.s32 256, 256
      %20 = vsyncadd [#allocation4], %s19
      %s21 = sshll.u32 %s0, 4
      %s22 = int_to_ptr.vmem [resolvable:$true] %s21
      %27 = dma.vmem_to_smem %s22, 256, [#allocation2], [#allocation4], 128, 128, 8
    $region5: #{model1_forward.1} parent=1 // pred_fallthru
      _
    // Predicated region
    $region6: #{model1_forward.1} parent=1 // pred_check
      _
    $region7: #{model1_forward.1} parent=1 // pred_check_branch
      %29 = sbr.rel (0) target = $region9
    $region8: #{model1_forward.1} parent=1 // pred_region
      %s31 = ssub.s32 16, 16
      %32 = vsyncadd [#allocation6], %s31
      %s34 = sshll.u32 %s1, 4
      %s35 = int_to_ptr.vmem [resolvable:$true] %s34
      %37 = dma.vmem_to_smem %s35, 16, [#allocation5], [#allocation6]
    $region9: #{model1_forward.1} parent=1 // pred_fallthru
      _
    // Predicated region
    $region10: #{model1_forward.1} parent=1 // pred_check
      _
    $region11: #{model1_forward.1} parent=1 // pred_check_branch
      %39 = sbr.rel (0) target = $region13
    $region12: #{model1_forward.1} parent=1 // pred_region
      _
    $region13: #{model1_forward.1} parent=1 // pred_fallthru
      _
    // Predicated region
    $region14: #{model1_forward.1} parent=1 // pred_check
      _
    $region15: #{model1_forward.1} parent=1 // pred_check_branch
      %41 = sbr.rel (0) target = $region17
    $region16: #{model1_forward.1} parent=1 // pred_region
      _
    $region17: #{model1_forward.1} parent=1 // pred_fallthru
      _
    // Predicated region
    $region18: #{model1_forward.1} parent=1 // pred_check
      _
    $region19: #{model1_forward.1} parent=1 // pred_check_branch
      %43 = sbr.rel (0) target = $region21
    $region20: #{model1_forward.1} parent=1 // pred_region
      _
    $region21: #{model1_forward.1} parent=1 // pred_fallthru
      _
    // Predicated region
    $region22: #{model1_forward.1} parent=1 // pred_check
      _
    $region23: #{model1_forward.1} parent=1 // pred_check_branch
      %45 = sbr.rel (0) target = $region25
    $region24: #{model1_forward.1} parent=1 // pred_region
      _
    $region25: #{model1_forward.1} parent=1 // pred_fallthru
      _
    // Predicated region
    $region26: #{model1_forward.1} parent=1 // pred_check
      _
    $region27: #{model1_forward.1} parent=1 // pred_check_branch
      %47 = sbr.rel (0) target = $region29
    $region28: #{model1_forward.1} parent=1 // pred_region
      _
    $region29: #{model1_forward.1} parent=1 // pred_fallthru
      _
    // Predicated region
    $region30: #{model1_forward.1} parent=1 // pred_check
      _
    $region31: #{model1_forward.1} parent=1 // pred_check_branch
      %49 = sbr.rel (0) target = $region33
    $region32: #{model1_forward.1} parent=1 // pred_region
      _
    $region33: #{model1_forward.1} parent=1 // pred_fallthru
      _
    // Predicated region
    $region34: #{model1_forward.1} parent=1 // pred_check
      _
    $region35: #{model1_forward.1} parent=1 // pred_check_branch
      %51 = sbr.rel (0) target = $region37
    $region36: #{model1_forward.1} parent=1 // pred_region
      %52 = dma.done [#allocation4], 256
    $region37: #{model1_forward.1} parent=1 // pred_fallthru
      _
    // Predicated region
    $region38: #{model1_forward.1} parent=1 // pred_check
      _
    $region39: #{model1_forward.1} parent=1 // pred_check_branch
      %54 = sbr.rel (0) target = $region41
    $region40: #{model1_forward.1} parent=1 // pred_region
      %55 = dma.done [#allocation6], 16
    $region41: #{model1_forward.1} parent=1 // pred_fallthru
      _
    %56 = sfence
    %v57 = vld [vmem:[%s3] sm:$0xff]
    %v58 = vld [vmem:[%s3 + $0x8] sm:$0x3f]
    %v59 = vld [vmem:[%s2] sm:$0x7f]
    %v62 = vcombine.high %v57, %v57
    %v64 = vunpack.c.l.s4 1983009808
    %v65 = vunpack.c.0.s8 %v64
    %v66 = vlaneseq
    %v67 = vshrl.u32 %v66, 7
    %v68 = vsub.s32 %v65, %v67
    %v69 = vrot.slane %v57, %v68
    %v71 = vunpack.c.l.s4 1983009808
    %v72 = vunpack.c.0.s8 %v71
    %v73 = vlaneseq
    %v74 = vshrl.u32 %v73, 7
    %v75 = vsub.s32 %v72, %v74
    %v76 = vrot.slane %v62, %v75
    %v77 = vcombine.high %v69, %v69
    %v78 = vcombine.high %v76, %v76
    %v79 = vcombine.high %v58, %v58
    %v81 = vunpack.c.l.s4 1983009808
    %v82 = vunpack.c.0.s8 %v81
    %v83 = vlaneseq
    %v84 = vshrl.u32 %v83, 7
    %v85 = vsub.s32 %v82, %v84
    %v86 = vrot.slane %v58, %v85
    %v88 = vunpack.c.l.s4 1983009808
    %v89 = vunpack.c.0.s8 %v88
    %v90 = vlaneseq
    %v91 = vshrl.u32 %v90, 7
    %v92 = vsub.s32 %v89, %v91
    %v93 = vrot.slane %v79, %v92
    %v94 = vcombine.high %v86, %v86
    %95 = vrot.lane.b32.xlu0 %v69, 127
    %v96 = vpop.permute.xlu0 %95
    %97 = vrot.lane.b32.xlu0 %v77, 127
    %v98 = vpop.permute.xlu0 %97
    %99 = vrot.lane.b32.xlu0 %v76, 127
    %v100 = vpop.permute.xlu0 %99
    %101 = vrot.lane.b32.xlu0 %v78, 127
    %v102 = vpop.permute.xlu0 %101
    %103 = vrot.lane.b32.xlu0 %v86, 127
    %v104 = vpop.permute.xlu0 %103
    %105 = vrot.lane.b32.xlu0 %v94, 127
    %v106 = vpop.permute.xlu0 %105
    %107 = vrot.lane.b32.xlu0 %v93, 127
    %v108 = vpop.permute.xlu0 %107
    %vm109 = vcmask 1039360
    %v110 = vsel %vm109, %v96, %v98
    %v111 = vsel %vm109, %v98, %v100
    %v112 = vsel %vm109, %v100, %v102
    %v113 = vsel %vm109, %v102, %v104
    %v114 = vsel %vm109, %v104, %v106
    %v115 = vsel %vm109, %v106, %v108
    %vm123 = vcmask 121856
    %v124 = vsel %vm123, %v108, 0.0
    %v126 = vlaneseq
    %v127 = vshrl.u32 %v126, 7
    %v128 = vsub.s32 0, %v127
    %v129 = vrot.slane %v59, %v128
    %v130 = vlaneseq
    %v131 = vshrl.u32 %v130, 7
    %v132 = vsub.s32 1, %v131
    %v133 = vrot.slane %v59, %v132
    %v134 = vlaneseq
    %v135 = vshrl.u32 %v134, 7
    %v136 = vsub.s32 2, %v135
    %v137 = vrot.slane %v59, %v136
    %v138 = vlaneseq
    %v139 = vshrl.u32 %v138, 7
    %v140 = vsub.s32 3, %v139
    %v141 = vrot.slane %v59, %v140
    %v142 = vlaneseq
    %v143 = vshrl.u32 %v142, 7
    %v144 = vsub.s32 4, %v143
    %v145 = vrot.slane %v59, %v144
    %v146 = vlaneseq
    %v147 = vshrl.u32 %v146, 7
    %v148 = vsub.s32 5, %v147
    %v149 = vrot.slane %v59, %v148
    %v150 = vlaneseq
    %v151 = vshrl.u32 %v150, 7
    %v152 = vsub.s32 6, %v151
    %v153 = vrot.slane %v59, %v152
    %v161 = vmul.f32 %v110, %v129
    %v162 = vmul.f32 %v111, %v133
    %v163 = vmul.f32 %v112, %v137
    %v164 = vmul.f32 %v113, %v141
    %v165 = vmul.f32 %v114, %v145
    %v166 = vmul.f32 %v115, %v149
    %v167 = vmul.f32 %v124, %v153
    %168 = vrot.lane.b32.xlu0 %v69, 100
    %v169 = vpop.permute.xlu0 %168
    %170 = vrot.lane.b32.xlu0 %v77, 100
    %v171 = vpop.permute.xlu0 %170
    %172 = vrot.lane.b32.xlu0 %v76, 100
    %v173 = vpop.permute.xlu0 %172
    %174 = vrot.lane.b32.xlu0 %v78, 100
    %v175 = vpop.permute.xlu0 %174
    %176 = vrot.lane.b32.xlu0 %v86, 100
    %v177 = vpop.permute.xlu0 %176
    %178 = vrot.lane.b32.xlu0 %v94, 100
    %v179 = vpop.permute.xlu0 %178
    %180 = vrot.lane.b32.xlu0 %v93, 100
    %v181 = vpop.permute.xlu0 %180
    %vm182 = vcmask 818176
    %v183 = vsel %vm182, %v169, %v171
    %v184 = vsel %vm182, %v171, %v173
    %v185 = vsel %vm182, %v173, %v175
    %v186 = vsel %vm182, %v175, %v177
    %v187 = vsel %vm182, %v177, %v179
    %v188 = vsel %vm182, %v179, %v181
    %vm195 = vcmask 949248
    %v196 = vsel %vm195, %v188, 0.0
    %197 = vrot.lane.b32.xlu0 %v69, 99
    %v198 = vpop.permute.xlu0 %197
    %199 = vrot.lane.b32.xlu0 %v77, 99
    %v200 = vpop.permute.xlu0 %199
    %201 = vrot.lane.b32.xlu0 %v76, 99
    %v202 = vpop.permute.xlu0 %201
    %203 = vrot.lane.b32.xlu0 %v78, 99
    %v204 = vpop.permute.xlu0 %203
    %205 = vrot.lane.b32.xlu0 %v86, 99
    %v206 = vpop.permute.xlu0 %205
    %207 = vrot.lane.b32.xlu0 %v94, 99
    %v208 = vpop.permute.xlu0 %207
    %209 = vrot.lane.b32.xlu0 %v93, 99
    %v210 = vpop.permute.xlu0 %209
    %vm211 = vcmask 809984
    %v212 = vsel %vm211, %v198, %v200
    %v213 = vsel %vm211, %v200, %v202
    %v214 = vsel %vm211, %v202, %v204
    %v215 = vsel %vm211, %v204, %v206
    %v216 = vsel %vm211, %v206, %v208
    %v217 = vsel %vm211, %v208, %v210
    %vm224 = vcmask 941056
    %v225 = vsel %vm224, %v217, 0.0
    %v226 = vmul.f32 %v212, %v129
    %v227 = vmul.f32 %v213, %v133
    %v228 = vmul.f32 %v214, %v137
    %v229 = vmul.f32 %v215, %v141
    %v230 = vmul.f32 %v216, %v145
    %v231 = vmul.f32 %v225, %v149
    %v232 = vmul.f32 %v153, 0.0
    %s233 = sld [smem:[#allocation2]]
    %v234 = vstv %s233
    %v235 = vmul.f32 %v57, %v234
    %v236 = vmul.f32 %v58, %v234
    %s237 = sld [smem:[#allocation2 + $0x1]]
    %v238 = vstv %s237
    %v239 = vmul.f32 %v161, %v238
    %v240 = vmul.f32 %v162, %v238
    %v241 = vmul.f32 %v163, %v238
    %v242 = vmul.f32 %v164, %v238
    %v243 = vmul.f32 %v165, %v238
    %v244 = vmul.f32 %v166, %v238
    %v245 = vmul.f32 %v167, %v238
    %v253 = vcombine.low %v239, %v240
    %v254 = vcombine.low %v241, %v242
    %v256 = vunpack.c.l.s4 1983009808
    %v257 = vunpack.c.0.s8 %v256
    %v258 = vlaneseq
    %v259 = vshrl.u32 %v258, 7
    %v260 = vsub.s32 %v257, %v259
    %v261 = vrot.slane %v253, %v260
    %v263 = vunpack.c.l.s4 1983009808
    %v264 = vunpack.c.0.s8 %v263
    %v265 = vlaneseq
    %v266 = vshrl.u32 %v265, 7
    %v267 = vsub.s32 %v264, %v266
    %v268 = vrot.slane %v254, %v267
    %v269 = vcombine.low %v261, %v268
    %v270 = vcombine.low %v243, %v244
    %v272 = vunpack.c.l.s4 1983009808
    %v273 = vunpack.c.0.s8 %v272
    %v274 = vlaneseq
    %v275 = vshrl.u32 %v274, 7
    %v276 = vsub.s32 %v273, %v275
    %v277 = vrot.slane %v270, %v276
    %v279 = vunpack.c.l.s4 1983009808
    %v280 = vunpack.c.0.s8 %v279
    %v281 = vlaneseq
    %v282 = vshrl.u32 %v281, 7
    %v283 = vsub.s32 %v280, %v282
    %v284 = vrot.slane %v245, %v283
    %v285 = vcombine.low %v277, %v284
    %v288 = vadd.f32 %v235, %v269
    %v289 = vadd.f32 %v236, %v285
    %s290 = sld [smem:[#allocation2 + $0x2]]
    %v291 = vstv %s290
    %v292 = vmul.f32 %v183, %v291
    %v293 = vmul.f32 %v184, %v291
    %v294 = vmul.f32 %v185, %v291
    %v295 = vmul.f32 %v186, %v291
    %v296 = vmul.f32 %v187, %v291
    %v297 = vmul.f32 %v196, %v291
    %v298 = vmul.f32 %v291, 0.0
    %v306 = vcombine.low %v292, %v293
    %v307 = vcombine.low %v294, %v295
    %v309 = vunpack.c.l.s4 1983009808
    %v310 = vunpack.c.0.s8 %v309
    %v311 = vlaneseq
    %v312 = vshrl.u32 %v311, 7
    %v313 = vsub.s32 %v310, %v312
    %v314 = vrot.slane %v306, %v313
    %v316 = vunpack.c.l.s4 1983009808
    %v317 = vunpack.c.0.s8 %v316
    %v318 = vlaneseq
    %v319 = vshrl.u32 %v318, 7
    %v320 = vsub.s32 %v317, %v319
    %v321 = vrot.slane %v307, %v320
    %v322 = vcombine.low %v314, %v321
    %v323 = vcombine.low %v296, %v297
    %v325 = vunpack.c.l.s4 1983009808
    %v326 = vunpack.c.0.s8 %v325
    %v327 = vlaneseq
    %v328 = vshrl.u32 %v327, 7
    %v329 = vsub.s32 %v326, %v328
    %v330 = vrot.slane %v323, %v329
    %v332 = vunpack.c.l.s4 1983009808
    %v333 = vunpack.c.0.s8 %v332
    %v334 = vlaneseq
    %v335 = vshrl.u32 %v334, 7
    %v336 = vsub.s32 %v333, %v335
    %v337 = vrot.slane %v298, %v336
    %v338 = vcombine.low %v330, %v337
    %v341 = vadd.f32 %v288, %v322
    %v342 = vadd.f32 %v289, %v338
    %s343 = sld [smem:[#allocation2 + $0x3]]
    %v344 = vstv %s343
    %v345 = vmul.f32 %v226, %v344
    %v346 = vmul.f32 %v227, %v344
    %v347 = vmul.f32 %v228, %v344
    %v348 = vmul.f32 %v229, %v344
    %v349 = vmul.f32 %v230, %v344
    %v350 = vmul.f32 %v231, %v344
    %v351 = vmul.f32 %v232, %v344
    %v359 = vcombine.low %v345, %v346
    %v360 = vcombine.low %v347, %v348
    %v362 = vunpack.c.l.s4 1983009808
    %v363 = vunpack.c.0.s8 %v362
    %v364 = vlaneseq
    %v365 = vshrl.u32 %v364, 7
    %v366 = vsub.s32 %v363, %v365
    %v367 = vrot.slane %v359, %v366
    %v369 = vunpack.c.l.s4 1983009808
    %v370 = vunpack.c.0.s8 %v369
    %v371 = vlaneseq
    %v372 = vshrl.u32 %v371, 7
    %v373 = vsub.s32 %v370, %v372
    %v374 = vrot.slane %v360, %v373
    %v375 = vcombine.low %v367, %v374
    %v376 = vcombine.low %v349, %v350
    %v378 = vunpack.c.l.s4 1983009808
    %v379 = vunpack.c.0.s8 %v378
    %v380 = vlaneseq
    %v381 = vshrl.u32 %v380, 7
    %v382 = vsub.s32 %v379, %v381
    %v383 = vrot.slane %v376, %v382
    %v385 = vunpack.c.l.s4 1983009808
    %v386 = vunpack.c.0.s8 %v385
    %v387 = vlaneseq
    %v388 = vshrl.u32 %v387, 7
    %v389 = vsub.s32 %v386, %v388
    %v390 = vrot.slane %v351, %v389
    %v391 = vcombine.low %v383, %v390
    %v394 = vadd.f32 %v341, %v375
    %v395 = vadd.f32 %v342, %v391
    %s396 = sld [smem:[#allocation5]]
    %v397 = vstv %s396
    %v398 = vadd.f32 %v394, %v397
    %v399 = vadd.f32 %v395, %v397
    %v400 = vmax.f32 %v398, 0.0
    %v401 = vmax.f32 %v399, 0.0
    %v402 = vld [vmem:[%s4] sm:$0xff]
    %v403 = vld [vmem:[%s4 + $0x8] sm:$0xff]
    %v404 = vld [vmem:[%s4 + $0x10] sm:$0xff]
    %v405 = vld [vmem:[%s4 + $0x18] sm:$0xff]
    %v406 = vld [vmem:[%s4 + $0x20] sm:$0xff]
    %v407 = vld [vmem:[%s4 + $0x28] sm:$0xff]
    %v408 = vld [vmem:[%s4 + $0x30] sm:$0xff]
    %v409 = vld [vmem:[%s4 + $0x38] sm:$0xff]
    %v410 = vld [vmem:[%s4 + $0x40] sm:$0xff]
    %v411 = vld [vmem:[%s4 + $0x48] sm:$0xff]
    %v412 = vld [vmem:[%s4 + $0x50] sm:$0xff]
    %v413 = vld [vmem:[%s4 + $0x58] sm:$0xff]
    %v414 = vld [vmem:[%s4 + $0x60] sm:$0xff]
    %v415 = vld [vmem:[%s4 + $0x68] sm:$0xff]
    %v416 = vld [vmem:[%s4 + $0x70] sm:$0xff]
    %v417 = vld [vmem:[%s4 + $0x78] sm:$0xff]
    %v418 = vld [vmem:[%s4 + $0x80] sm:$0xff]
    %v419 = vld [vmem:[%s4 + $0x88] sm:$0xff]
    %v420 = vld [vmem:[%s4 + $0x90] sm:$0xff]
    %v421 = vld [vmem:[%s4 + $0x98] sm:$0xff]
    %v422 = vld [vmem:[%s4 + $0xa0] sm:$0xff]
    %v423 = vld [vmem:[%s4 + $0xa8] sm:$0xff]
    %v424 = vld [vmem:[%s4 + $0xb0] sm:$0xff]
    %v425 = vld [vmem:[%s4 + $0xb8] sm:$0xff]
    %v426 = vld [vmem:[%s4 + $0xc0] sm:$0xff]
    %v427 = vld [vmem:[%s4 + $0xc8] sm:$0xff]
    %v428 = vld [vmem:[%s4 + $0xd0] sm:$0xff]
    %v429 = vld [vmem:[%s4 + $0xd8] sm:$0xff]
    %v430 = vld [vmem:[%s4 + $0xe0] sm:$0xff]
    %v431 = vld [vmem:[%s4 + $0xe8] sm:$0xff]
    %v432 = vld [vmem:[%s4 + $0xf0] sm:$0xff]
    %v433 = vld [vmem:[%s4 + $0xf8] sm:$0xff]
    %v434 = vld [vmem:[%s4 + $0x100] sm:$0xff]
    %v435 = vld [vmem:[%s4 + $0x108] sm:$0xff]
    %v436 = vld [vmem:[%s4 + $0x110] sm:$0xff]
    %v437 = vld [vmem:[%s4 + $0x118] sm:$0xff]
    %v438 = vld [vmem:[%s4 + $0x120] sm:$0xff]
    %v439 = vld [vmem:[%s4 + $0x128] sm:$0xff]
    %v440 = vld [vmem:[%s4 + $0x130] sm:$0xff]
    %v441 = vld [vmem:[%s4 + $0x138] sm:$0xff]
    %v442 = vld [vmem:[%s4 + $0x140] sm:$0xff]
    %v443 = vld [vmem:[%s4 + $0x148] sm:$0xff]
    %v444 = vld [vmem:[%s4 + $0x150] sm:$0xff]
    %v445 = vld [vmem:[%s4 + $0x158] sm:$0xff]
    %v446 = vld [vmem:[%s4 + $0x160] sm:$0xff]
    %v447 = vld [vmem:[%s4 + $0x168] sm:$0xff]
    %v448 = vld [vmem:[%s4 + $0x170] sm:$0xff]
    %v449 = vld [vmem:[%s4 + $0x178] sm:$0xff]
    %v450 = vld [vmem:[%s4 + $0x180] sm:$0xff]
    %v451 = vld [vmem:[%s4 + $0x188] sm:$0xff]
    %v452 = vld [vmem:[%s4 + $0x190] sm:$0xff]
    %v453 = vld [vmem:[%s4 + $0x198] sm:$0xff]
    %v454 = vld [vmem:[%s4 + $0x1a0] sm:$0xff]
    %v455 = vld [vmem:[%s4 + $0x1a8] sm:$0xff]
    %v456 = vld [vmem:[%s4 + $0x1b0] sm:$0xff]
    %v457 = vld [vmem:[%s4 + $0x1b8] sm:$0xff]
    %v458 = vld [vmem:[%s4 + $0x1c0] sm:$0xff]
    %v459 = vld [vmem:[%s4 + $0x1c8] sm:$0xff]
    %v460 = vld [vmem:[%s4 + $0x1d0] sm:$0xff]
    %v461 = vld [vmem:[%s4 + $0x1d8] sm:$0xff]
    %v462 = vld [vmem:[%s4 + $0x1e0] sm:$0xff]
    %v463 = vld [vmem:[%s4 + $0x1e8] sm:$0xff]
    %v464 = vld [vmem:[%s4 + $0x1f0] sm:$0xff]
    %v465 = vld [vmem:[%s4 + $0x1f8] sm:$0xff]
    %v466 = vld [vmem:[%s4 + $0x200] sm:$0xff]
    %v467 = vld [vmem:[%s4 + $0x208] sm:$0xff]
    %v468 = vld [vmem:[%s4 + $0x210] sm:$0xff]
    %v469 = vld [vmem:[%s4 + $0x218] sm:$0xff]
    %v470 = vld [vmem:[%s4 + $0x220] sm:$0xff]
    %v471 = vld [vmem:[%s4 + $0x228] sm:$0xff]
    %v472 = vld [vmem:[%s4 + $0x230] sm:$0xff]
    %v473 = vld [vmem:[%s4 + $0x238] sm:$0xff]
    %v474 = vld [vmem:[%s4 + $0x240] sm:$0xff]
    %v475 = vld [vmem:[%s4 + $0x248] sm:$0xff]
    %v476 = vld [vmem:[%s4 + $0x250] sm:$0xff]
    %v477 = vld [vmem:[%s4 + $0x258] sm:$0xff]
    %v478 = vld [vmem:[%s4 + $0x260] sm:$0xff]
    %v479 = vld [vmem:[%s4 + $0x268] sm:$0xff]
    %v480 = vld [vmem:[%s4 + $0x270] sm:$0xff]
    %v481 = vld [vmem:[%s4 + $0x278] sm:$0xff]
    %v482 = vld [vmem:[%s4 + $0x280] sm:$0xff]
    %v483 = vld [vmem:[%s4 + $0x288] sm:$0xff]
    %v484 = vld [vmem:[%s4 + $0x290] sm:$0xff]
    %v485 = vld [vmem:[%s4 + $0x298] sm:$0xff]
    %v486 = vld [vmem:[%s4 + $0x2a0] sm:$0xff]
    %v487 = vld [vmem:[%s4 + $0x2a8] sm:$0xff]
    %v488 = vld [vmem:[%s4 + $0x2b0] sm:$0xff]
    %v489 = vld [vmem:[%s4 + $0x2b8] sm:$0xff]
    %v490 = vld [vmem:[%s4 + $0x2c0] sm:$0xff]
    %v491 = vld [vmem:[%s4 + $0x2c8] sm:$0xff]
    %v492 = vld [vmem:[%s4 + $0x2d0] sm:$0xff]
    %v493 = vld [vmem:[%s4 + $0x2d8] sm:$0xff]
    %v494 = vld [vmem:[%s4 + $0x2e0] sm:$0xff]
    %v495 = vld [vmem:[%s4 + $0x2e8] sm:$0xff]
    %v496 = vld [vmem:[%s4 + $0x2f0] sm:$0xff]
    %v497 = vld [vmem:[%s4 + $0x2f8] sm:$0xff]
    %v498 = vld [vmem:[%s4 + $0x300] sm:$0xff]
    %v499 = vld [vmem:[%s4 + $0x308] sm:$0xff]
    %s500 = sld [smem:[#allocation2 + $0x80]]
    %v501 = vstv %s500
    %v502 = vmul.f32 %v57, %v501
    %v503 = vmul.f32 %v58, %v501
    %s504 = sld [smem:[#allocation2 + $0x81]]
    %v505 = vstv %s504
    %v506 = vmul.f32 %v161, %v505
    %v507 = vmul.f32 %v162, %v505
    %v508 = vmul.f32 %v163, %v505
    %v509 = vmul.f32 %v164, %v505
    %v510 = vmul.f32 %v165, %v505
    %v511 = vmul.f32 %v166, %v505
    %v512 = vmul.f32 %v167, %v505
    %v520 = vcombine.low %v506, %v507
    %v521 = vcombine.low %v508, %v509
    %v523 = vunpack.c.l.s4 1983009808
    %v524 = vunpack.c.0.s8 %v523
    %v525 = vlaneseq
    %v526 = vshrl.u32 %v525, 7
    %v527 = vsub.s32 %v524, %v526
    %v528 = vrot.slane %v520, %v527
    %v530 = vunpack.c.l.s4 1983009808
    %v531 = vunpack.c.0.s8 %v530
    %v532 = vlaneseq
    %v533 = vshrl.u32 %v532, 7
    %v534 = vsub.s32 %v531, %v533
    %v535 = vrot.slane %v521, %v534
    %v536 = vcombine.low %v528, %v535
    %v537 = vcombine.low %v510, %v511
    %v539 = vunpack.c.l.s4 1983009808
    %v540 = vunpack.c.0.s8 %v539
    %v541 = vlaneseq
    %v542 = vshrl.u32 %v541, 7
    %v543 = vsub.s32 %v540, %v542
    %v544 = vrot.slane %v537, %v543
    %v546 = vunpack.c.l.s4 1983009808
    %v547 = vunpack.c.0.s8 %v546
    %v548 = vlaneseq
    %v549 = vshrl.u32 %v548, 7
    %v550 = vsub.s32 %v547, %v549
    %v551 = vrot.slane %v512, %v550
    %v552 = vcombine.low %v544, %v551
    %v555 = vadd.f32 %v502, %v536
    %v556 = vadd.f32 %v503, %v552
    %s557 = sld [smem:[#allocation2 + $0x82]]
    %v558 = vstv %s557
    %v559 = vmul.f32 %v183, %v558
    %v560 = vmul.f32 %v184, %v558
    %v561 = vmul.f32 %v185, %v558
    %v562 = vmul.f32 %v186, %v558
    %v563 = vmul.f32 %v187, %v558
    %v564 = vmul.f32 %v196, %v558
    %v565 = vmul.f32 %v558, 0.0
    %v573 = vcombine.low %v559, %v560
    %v574 = vcombine.low %v561, %v562
    %v576 = vunpack.c.l.s4 1983009808
    %v577 = vunpack.c.0.s8 %v576
    %v578 = vlaneseq
    %v579 = vshrl.u32 %v578, 7
    %v580 = vsub.s32 %v577, %v579
    %v581 = vrot.slane %v573, %v580
    %v583 = vunpack.c.l.s4 1983009808
    %v584 = vunpack.c.0.s8 %v583
    %v585 = vlaneseq
    %v586 = vshrl.u32 %v585, 7
    %v587 = vsub.s32 %v584, %v586
    %v588 = vrot.slane %v574, %v587
    %v589 = vcombine.low %v581, %v588
    %v590 = vcombine.low %v563, %v564
    %v592 = vunpack.c.l.s4 1983009808
    %v593 = vunpack.c.0.s8 %v592
    %v594 = vlaneseq
    %v595 = vshrl.u32 %v594, 7
    %v596 = vsub.s32 %v593, %v595
    %v597 = vrot.slane %v590, %v596
    %v599 = vunpack.c.l.s4 1983009808
    %v600 = vunpack.c.0.s8 %v599
    %v601 = vlaneseq
    %v602 = vshrl.u32 %v601, 7
    %v603 = vsub.s32 %v600, %v602
    %v604 = vrot.slane %v565, %v603
    %v605 = vcombine.low %v597, %v604
    %v608 = vadd.f32 %v555, %v589
    %v609 = vadd.f32 %v556, %v605
    %s610 = sld [smem:[#allocation2 + $0x83]]
    %v611 = vstv %s610
    %v612 = vmul.f32 %v226, %v611
    %v613 = vmul.f32 %v227, %v611
    %v614 = vmul.f32 %v228, %v611
    %v615 = vmul.f32 %v229, %v611
    %v616 = vmul.f32 %v230, %v611
    %v617 = vmul.f32 %v231, %v611
    %v618 = vmul.f32 %v232, %v611
    %v626 = vcombine.low %v612, %v613
    %v627 = vcombine.low %v614, %v615
    %v629 = vunpack.c.l.s4 1983009808
    %v630 = vunpack.c.0.s8 %v629
    %v631 = vlaneseq
    %v632 = vshrl.u32 %v631, 7
    %v633 = vsub.s32 %v630, %v632
    %v634 = vrot.slane %v626, %v633
    %v636 = vunpack.c.l.s4 1983009808
    %v637 = vunpack.c.0.s8 %v636
    %v638 = vlaneseq
    %v639 = vshrl.u32 %v638, 7
    %v640 = vsub.s32 %v637, %v639
    %v641 = vrot.slane %v627, %v640
    %v642 = vcombine.low %v634, %v641
    %v643 = vcombine.low %v616, %v617
    %v645 = vunpack.c.l.s4 1983009808
    %v646 = vunpack.c.0.s8 %v645
    %v647 = vlaneseq
    %v648 = vshrl.u32 %v647, 7
    %v649 = vsub.s32 %v646, %v648
    %v650 = vrot.slane %v643, %v649
    %v652 = vunpack.c.l.s4 1983009808
    %v653 = vunpack.c.0.s8 %v652
    %v654 = vlaneseq
    %v655 = vshrl.u32 %v654, 7
    %v656 = vsub.s32 %v653, %v655
    %v657 = vrot.slane %v618, %v656
    %v658 = vcombine.low %v650, %v657
    %v661 = vadd.f32 %v608, %v642
    %v662 = vadd.f32 %v609, %v658
    %s663 = sld [smem:[#allocation5 + $0x1]]
    %v664 = vstv %s663
    %v665 = vadd.f32 %v661, %v664
    %v666 = vadd.f32 %v662, %v664
    %v667 = vmax.f32 %v665, 0.0
    %v668 = vmax.f32 %v666, 0.0
    %v669 = vld [vmem:[%s4 + $0x310] sm:$0xff]
    %v670 = vld [vmem:[%s4 + $0x318] sm:$0xff]
    %v671 = vld [vmem:[%s4 + $0x320] sm:$0xff]
    %v672 = vld [vmem:[%s4 + $0x328] sm:$0xff]
    %v673 = vld [vmem:[%s4 + $0x330] sm:$0xff]
    %v674 = vld [vmem:[%s4 + $0x338] sm:$0xff]
    %v675 = vld [vmem:[%s4 + $0x340] sm:$0xff]
    %v676 = vld [vmem:[%s4 + $0x348] sm:$0xff]
    %v677 = vld [vmem:[%s4 + $0x350] sm:$0xff]
    %v678 = vld [vmem:[%s4 + $0x358] sm:$0xff]
    %v679 = vld [vmem:[%s4 + $0x360] sm:$0xff]
    %v680 = vld [vmem:[%s4 + $0x368] sm:$0xff]
    %v681 = vld [vmem:[%s4 + $0x370] sm:$0xff]
    %v682 = vld [vmem:[%s4 + $0x378] sm:$0xff]
    %v683 = vld [vmem:[%s4 + $0x380] sm:$0xff]
    %v684 = vld [vmem:[%s4 + $0x388] sm:$0xff]
    %v685 = vld [vmem:[%s4 + $0x390] sm:$0xff]
    %v686 = vld [vmem:[%s4 + $0x398] sm:$0xff]
    %v687 = vld [vmem:[%s4 + $0x3a0] sm:$0xff]
    %v688 = vld [vmem:[%s4 + $0x3a8] sm:$0xff]
    %v689 = vld [vmem:[%s4 + $0x3b0] sm:$0xff]
    %v690 = vld [vmem:[%s4 + $0x3b8] sm:$0xff]
    %v691 = vld [vmem:[%s4 + $0x3c0] sm:$0xff]
    %v692 = vld [vmem:[%s4 + $0x3c8] sm:$0xff]
    %v693 = vld [vmem:[%s4 + $0x3d0] sm:$0xff]
    %v694 = vld [vmem:[%s4 + $0x3d8] sm:$0xff]
    %v695 = vld [vmem:[%s4 + $0x3e0] sm:$0xff]
    %v696 = vld [vmem:[%s4 + $0x3e8] sm:$0xff]
    %v697 = vld [vmem:[%s4 + $0x3f0] sm:$0xff]
    %v698 = vld [vmem:[%s4 + $0x3f8] sm:$0xff]
    %v699 = vld [vmem:[%s4 + $0x400] sm:$0xff]
    %v700 = vld [vmem:[%s4 + $0x408] sm:$0xff]
    %v701 = vld [vmem:[%s4 + $0x410] sm:$0xff]
    %v702 = vld [vmem:[%s4 + $0x418] sm:$0xff]
    %v703 = vld [vmem:[%s4 + $0x420] sm:$0xff]
    %v704 = vld [vmem:[%s4 + $0x428] sm:$0xff]
    %v705 = vld [vmem:[%s4 + $0x430] sm:$0xff]
    %v706 = vld [vmem:[%s4 + $0x438] sm:$0xff]
    %v707 = vld [vmem:[%s4 + $0x440] sm:$0xff]
    %v708 = vld [vmem:[%s4 + $0x448] sm:$0xff]
    %v709 = vld [vmem:[%s4 + $0x450] sm:$0xff]
    %v710 = vld [vmem:[%s4 + $0x458] sm:$0xff]
    %v711 = vld [vmem:[%s4 + $0x460] sm:$0xff]
    %v712 = vld [vmem:[%s4 + $0x468] sm:$0xff]
    %v713 = vld [vmem:[%s4 + $0x470] sm:$0xff]
    %v714 = vld [vmem:[%s4 + $0x478] sm:$0xff]
    %v715 = vld [vmem:[%s4 + $0x480] sm:$0xff]
    %v716 = vld [vmem:[%s4 + $0x488] sm:$0xff]
    %v717 = vld [vmem:[%s4 + $0x490] sm:$0xff]
    %v718 = vld [vmem:[%s4 + $0x498] sm:$0xff]
    %v719 = vld [vmem:[%s4 + $0x4a0] sm:$0xff]
    %v720 = vld [vmem:[%s4 + $0x4a8] sm:$0xff]
    %v721 = vld [vmem:[%s4 + $0x4b0] sm:$0xff]
    %v722 = vld [vmem:[%s4 + $0x4b8] sm:$0xff]
    %v723 = vld [vmem:[%s4 + $0x4c0] sm:$0xff]
    %v724 = vld [vmem:[%s4 + $0x4c8] sm:$0xff]
    %v725 = vld [vmem:[%s4 + $0x4d0] sm:$0xff]
    %v726 = vld [vmem:[%s4 + $0x4d8] sm:$0xff]
    %v727 = vld [vmem:[%s4 + $0x4e0] sm:$0xff]
    %v728 = vld [vmem:[%s4 + $0x4e8] sm:$0xff]
    %v729 = vld [vmem:[%s4 + $0x4f0] sm:$0xff]
    %v730 = vld [vmem:[%s4 + $0x4f8] sm:$0xff]
    %v731 = vld [vmem:[%s4 + $0x500] sm:$0xff]
    %v732 = vld [vmem:[%s4 + $0x508] sm:$0xff]
    %v733 = vld [vmem:[%s4 + $0x510] sm:$0xff]
    %v734 = vld [vmem:[%s4 + $0x518] sm:$0xff]
    %v735 = vld [vmem:[%s4 + $0x520] sm:$0xff]
    %v736 = vld [vmem:[%s4 + $0x528] sm:$0xff]
    %v737 = vld [vmem:[%s4 + $0x530] sm:$0xff]
    %v738 = vld [vmem:[%s4 + $0x538] sm:$0xff]
    %v739 = vld [vmem:[%s4 + $0x540] sm:$0xff]
    %v740 = vld [vmem:[%s4 + $0x548] sm:$0xff]
    %v741 = vld [vmem:[%s4 + $0x550] sm:$0xff]
    %v742 = vld [vmem:[%s4 + $0x558] sm:$0xff]
    %v743 = vld [vmem:[%s4 + $0x560] sm:$0xff]
    %v744 = vld [vmem:[%s4 + $0x568] sm:$0xff]
    %v745 = vld [vmem:[%s4 + $0x570] sm:$0xff]
    %v746 = vld [vmem:[%s4 + $0x578] sm:$0xff]
    %v747 = vld [vmem:[%s4 + $0x580] sm:$0xff]
    %v748 = vld [vmem:[%s4 + $0x588] sm:$0xff]
    %v749 = vld [vmem:[%s4 + $0x590] sm:$0xff]
    %v750 = vld [vmem:[%s4 + $0x598] sm:$0xff]
    %v751 = vld [vmem:[%s4 + $0x5a0] sm:$0xff]
    %v752 = vld [vmem:[%s4 + $0x5a8] sm:$0xff]
    %v753 = vld [vmem:[%s4 + $0x5b0] sm:$0xff]
    %v754 = vld [vmem:[%s4 + $0x5b8] sm:$0xff]
    %v755 = vld [vmem:[%s4 + $0x5c0] sm:$0xff]
    %v756 = vld [vmem:[%s4 + $0x5c8] sm:$0xff]
    %v757 = vld [vmem:[%s4 + $0x5d0] sm:$0xff]
    %v758 = vld [vmem:[%s4 + $0x5d8] sm:$0xff]
    %v759 = vld [vmem:[%s4 + $0x5e0] sm:$0xff]
    %v760 = vld [vmem:[%s4 + $0x5e8] sm:$0xff]
    %v761 = vld [vmem:[%s4 + $0x5f0] sm:$0xff]
    %v762 = vld [vmem:[%s4 + $0x5f8] sm:$0xff]
    %v763 = vld [vmem:[%s4 + $0x600] sm:$0xff]
    %v764 = vld [vmem:[%s4 + $0x608] sm:$0xff]
    %v765 = vld [vmem:[%s4 + $0x610] sm:$0xff]
    %v766 = vld [vmem:[%s4 + $0x618] sm:$0xff]
    %v769 = vcombine.high %v667, %v667
    %v771 = vunpack.c.l.s4 1983009808
    %v772 = vunpack.c.0.s8 %v771
    %v773 = vlaneseq
    %v774 = vshrl.u32 %v773, 7
    %v775 = vsub.s32 %v772, %v774
    %v776 = vrot.slane %v667, %v775
    %v778 = vunpack.c.l.s4 1983009808
    %v779 = vunpack.c.0.s8 %v778
    %v780 = vlaneseq
    %v781 = vshrl.u32 %v780, 7
    %v782 = vsub.s32 %v779, %v781
    %v783 = vrot.slane %v769, %v782
    %v784 = vcombine.high %v776, %v776
    %v785 = vcombine.high %v783, %v783
    %v786 = vcombine.high %v668, %v668
    %v788 = vunpack.c.l.s4 1983009808
    %v789 = vunpack.c.0.s8 %v788
    %v790 = vlaneseq
    %v791 = vshrl.u32 %v790, 7
    %v792 = vsub.s32 %v789, %v791
    %v793 = vrot.slane %v668, %v792
    %v795 = vunpack.c.l.s4 1983009808
    %v796 = vunpack.c.0.s8 %v795
    %v797 = vlaneseq
    %v798 = vshrl.u32 %v797, 7
    %v799 = vsub.s32 %v796, %v798
    %v800 = vrot.slane %v786, %v799
    %v801 = vcombine.high %v793, %v793
    %vm808 = vcmask 130048
    %v809 = vsel %vm808, %v800, 0
    %811 = vmatprep.subr.mxu0 0.0
    %812 = vmatpush1.msra.mxu0 %v669
    %813 = vmatprep.subr.mxu0 0.0
    %814 = vmatpush1.msra.mxu0 %v670
    %815 = vmatprep.subr.mxu0 0.0
    %816 = vmatpush1.msra.mxu0 %v671
    %817 = vmatprep.subr.mxu0 0.0
    %818 = vmatpush1.msra.mxu0 %v672
    %819 = vmatprep.subr.mxu0 0.0
    %820 = vmatpush1.msra.mxu0 %v673
    %821 = vmatprep.subr.mxu0 0.0
    %822 = vmatpush1.msra.mxu0 %v674
    %823 = vmatprep.subr.mxu0 0.0
    %824 = vmatpush1.msra.mxu0 %v675
    %825 = vmatprep.subr.mxu0 0.0
    %826 = vmatpush1.msra.mxu0 %v676
    %827 = vmatprep.subr.mxu0 0.0
    %828 = vmatpush1.msra.mxu0 %v677
    %829 = vmatprep.subr.mxu0 0.0
    %830 = vmatpush1.msra.mxu0 %v678
    %831 = vmatprep.subr.mxu0 0.0
    %832 = vmatpush1.msra.mxu0 %v679
    %833 = vmatprep.subr.mxu0 0.0
    %834 = vmatpush1.msra.mxu0 %v680
    %835 = vmatprep.subr.mxu0 0.0
    %836 = vmatpush1.msra.mxu0 %v681
    %837 = vmatprep.subr.mxu0 0.0
    %838 = vmatpush1.msra.mxu0 %v682
    %839 = vmatprep.subr.mxu0 0.0
    %840 = vmatpush1.msra.mxu0 %v683
    %841 = vmatprep.subr.mxu0 0.0
    %842 = vmatpush1.msra.mxu0 %v684
    %843 = vmatprep.subr.mxu0 0.0
    %844 = vmatpush1.msra.mxu0 %v685
    %845 = vmatprep.subr.mxu0 0.0
    %846 = vmatpush1.msra.mxu0 %v686
    %847 = vmatprep.subr.mxu0 0.0
    %848 = vmatpush1.msra.mxu0 %v687
    %849 = vmatprep.subr.mxu0 0.0
    %850 = vmatpush1.msra.mxu0 %v688
    %851 = vmatprep.subr.mxu0 0.0
    %852 = vmatpush1.msra.mxu0 %v689
    %853 = vmatprep.subr.mxu0 0.0
    %854 = vmatpush1.msra.mxu0 %v690
    %855 = vmatprep.subr.mxu0 0.0
    %856 = vmatpush1.msra.mxu0 %v691
    %857 = vmatprep.subr.mxu0 0.0
    %858 = vmatpush1.msra.mxu0 %v692
    %859 = vmatprep.subr.mxu0 0.0
    %860 = vmatpush1.msra.mxu0 %v693
    %861 = vmatprep.subr.mxu0 0.0
    %862 = vmatpush1.msra.mxu0 %v694
    %863 = vmatprep.subr.mxu0 0.0
    %864 = vmatpush1.msra.mxu0 %v695
    %865 = vmatprep.subr.mxu0 0.0
    %866 = vmatpush1.msra.mxu0 %v696
    %867 = vmatprep.subr.mxu0 0.0
    %868 = vmatpush1.msra.mxu0 %v697
    %869 = vmatprep.subr.mxu0 0.0
    %870 = vmatpush1.msra.mxu0 %v698
    %871 = vmatprep.subr.mxu0 0.0
    %872 = vmatpush1.msra.mxu0 %v699
    %873 = vmatprep.subr.mxu0 0.0
    %874 = vmatpush1.msra.mxu0 %v700
    %875 = vmatprep.mubr.f32.mxu0 %v784
    %876 = vmatmul.mubr.f32.gmra.mrb[0].mxu0 %v776
    %v877 = vpop.f32.mrb[0].mxu0
    %v878 = vadd.f32 0.0, %v877
    %v879 = vpop.f32.mrb[0].mxu0
    %880 = vdwg.mxu0
    %881 = vmatprep.subr.mxu0 0.0
    %882 = vmatpush1.msra.mxu0 %v701
    %883 = vmatprep.subr.mxu0 0.0
    %884 = vmatpush1.msra.mxu0 %v702
    %885 = vmatprep.subr.mxu0 0.0
    %886 = vmatpush1.msra.mxu0 %v703
    %887 = vmatprep.subr.mxu0 0.0
    %888 = vmatpush1.msra.mxu0 %v704
    %889 = vmatprep.subr.mxu0 0.0
    %890 = vmatpush1.msra.mxu0 %v705
    %891 = vmatprep.subr.mxu0 0.0
    %892 = vmatpush1.msra.mxu0 %v706
    %893 = vmatprep.subr.mxu0 0.0
    %894 = vmatpush1.msra.mxu0 %v707
    %895 = vmatprep.subr.mxu0 0.0
    %896 = vmatpush1.msra.mxu0 %v708
    %897 = vmatprep.subr.mxu0 0.0
    %898 = vmatpush1.msra.mxu0 %v709
    %899 = vmatprep.subr.mxu0 0.0
    %900 = vmatpush1.msra.mxu0 %v710
    %901 = vmatprep.subr.mxu0 0.0
    %902 = vmatpush1.msra.mxu0 %v711
    %903 = vmatprep.subr.mxu0 0.0
    %904 = vmatpush1.msra.mxu0 %v712
    %905 = vmatprep.subr.mxu0 0.0
    %906 = vmatpush1.msra.mxu0 %v713
    %907 = vmatprep.subr.mxu0 0.0
    %908 = vmatpush1.msra.mxu0 %v714
    %909 = vmatprep.subr.mxu0 0.0
    %910 = vmatpush1.msra.mxu0 %v715
    %911 = vmatprep.subr.mxu0 0.0
    %912 = vmatpush1.msra.mxu0 %v716
    %913 = vmatprep.subr.mxu0 0.0
    %914 = vmatpush1.msra.mxu0 %v717
    %915 = vmatprep.subr.mxu0 0.0
    %916 = vmatpush1.msra.mxu0 %v718
    %917 = vmatprep.subr.mxu0 0.0
    %918 = vmatpush1.msra.mxu0 %v719
    %919 = vmatprep.subr.mxu0 0.0
    %920 = vmatpush1.msra.mxu0 %v720
    %921 = vmatprep.subr.mxu0 0.0
    %922 = vmatpush1.msra.mxu0 %v721
    %923 = vmatprep.subr.mxu0 0.0
    %924 = vmatpush1.msra.mxu0 %v722
    %925 = vmatprep.subr.mxu0 0.0
    %926 = vmatpush1.msra.mxu0 %v723
    %927 = vmatprep.subr.mxu0 0.0
    %928 = vmatpush1.msra.mxu0 %v724
    %929 = vmatprep.subr.mxu0 0.0
    %930 = vmatpush1.msra.mxu0 %v725
    %931 = vmatprep.subr.mxu0 0.0
    %932 = vmatpush1.msra.mxu0 %v726
    %933 = vmatprep.subr.mxu0 0.0
    %934 = vmatpush1.msra.mxu0 %v727
    %935 = vmatprep.subr.mxu0 0.0
    %936 = vmatpush1.msra.mxu0 %v728
    %937 = vmatprep.subr.mxu0 0.0
    %938 = vmatpush1.msra.mxu0 %v729
    %939 = vmatprep.subr.mxu0 0.0
    %940 = vmatpush1.msra.mxu0 %v730
    %941 = vmatprep.subr.mxu0 0.0
    %942 = vmatpush1.msra.mxu0 %v731
    %943 = vmatprep.subr.mxu0 0.0
    %944 = vmatpush1.msra.mxu0 %v732
    %945 = vmatprep.mubr.f32.mxu0 %v785
    %946 = vmatmul.mubr.f32.gmra.mrb[0].mxu0 %v783
    %v947 = vpop.f32.mrb[0].mxu0
    %v948 = vadd.f32 %v878, %v947
    %v949 = vpop.f32.mrb[0].mxu0
    %950 = vdwg.mxu0
    %951 = vmatprep.subr.mxu0 0.0
    %952 = vmatpush1.msra.mxu0 %v733
    %953 = vmatprep.subr.mxu0 0.0
    %954 = vmatpush1.msra.mxu0 %v734
    %955 = vmatprep.subr.mxu0 0.0
    %956 = vmatpush1.msra.mxu0 %v735
    %957 = vmatprep.subr.mxu0 0.0
    %958 = vmatpush1.msra.mxu0 %v736
    %959 = vmatprep.subr.mxu0 0.0
    %960 = vmatpush1.msra.mxu0 %v737
    %961 = vmatprep.subr.mxu0 0.0
    %962 = vmatpush1.msra.mxu0 %v738
    %963 = vmatprep.subr.mxu0 0.0
    %964 = vmatpush1.msra.mxu0 %v739
    %965 = vmatprep.subr.mxu0 0.0
    %966 = vmatpush1.msra.mxu0 %v740
    %967 = vmatprep.subr.mxu0 0.0
    %968 = vmatpush1.msra.mxu0 %v741
    %969 = vmatprep.subr.mxu0 0.0
    %970 = vmatpush1.msra.mxu0 %v742
    %971 = vmatprep.subr.mxu0 0.0
    %972 = vmatpush1.msra.mxu0 %v743
    %973 = vmatprep.subr.mxu0 0.0
    %974 = vmatpush1.msra.mxu0 %v744
    %975 = vmatprep.subr.mxu0 0.0
    %976 = vmatpush1.msra.mxu0 %v745
    %977 = vmatprep.subr.mxu0 0.0
    %978 = vmatpush1.msra.mxu0 %v746
    %979 = vmatprep.subr.mxu0 0.0
    %980 = vmatpush1.msra.mxu0 %v747
    %981 = vmatprep.subr.mxu0 0.0
    %982 = vmatpush1.msra.mxu0 %v748
    %983 = vmatprep.subr.mxu0 0.0
    %984 = vmatpush1.msra.mxu0 %v749
    %985 = vmatprep.subr.mxu0 0.0
    %986 = vmatpush1.msra.mxu0 %v750
    %987 = vmatprep.subr.mxu0 0.0
    %988 = vmatpush1.msra.mxu0 %v751
    %989 = vmatprep.subr.mxu0 0.0
    %990 = vmatpush1.msra.mxu0 %v752
    %991 = vmatprep.subr.mxu0 0.0
    %992 = vmatpush1.msra.mxu0 %v753
    %993 = vmatprep.subr.mxu0 0.0
    %994 = vmatpush1.msra.mxu0 %v754
    %995 = vmatprep.subr.mxu0 0.0
    %996 = vmatpush1.msra.mxu0 %v755
    %997 = vmatprep.subr.mxu0 0.0
    %998 = vmatpush1.msra.mxu0 %v756
    %999 = vmatprep.subr.mxu0 0.0
    %1000 = vmatpush1.msra.mxu0 %v757
    %1001 = vmatprep.subr.mxu0 0.0
    %1002 = vmatpush1.msra.mxu0 %v758
    %1003 = vmatprep.subr.mxu0 0.0
    %1004 = vmatpush1.msra.mxu0 %v759
    %1005 = vmatprep.subr.mxu0 0.0
    %1006 = vmatpush1.msra.mxu0 %v760
    %1007 = vmatprep.subr.mxu0 0.0
    %1008 = vmatpush1.msra.mxu0 %v761
    %1009 = vmatprep.subr.mxu0 0.0
    %1010 = vmatpush1.msra.mxu0 %v762
    %1011 = vmatprep.subr.mxu0 0.0
    %1012 = vmatpush1.msra.mxu0 %v763
    %1013 = vmatprep.subr.mxu0 0.0
    %1014 = vmatpush1.msra.mxu0 %v764
    %1015 = vmatprep.mubr.f32.mxu0 %v801
    %1016 = vmatmul.mubr.f32.gmra.mrb[0].mxu0 %v793
    %v1017 = vpop.f32.mrb[0].mxu0
    %v1018 = vadd.f32 %v948, %v1017
    %v1019 = vpop.f32.mrb[0].mxu0
    %1020 = vdwg.mxu0
    %1021 = vmatprep.subr.mxu0 0.0
    %1022 = vmatpush1.msra.mxu0 %v765
    %1023 = vmatprep.subr.mxu0 0.0
    %1024 = vmatpush1.msra.mxu0 %v766
    %1025 = vmatprep.subr.mxu0 0.0
    %1026 = vmatpush1.msra.mxu0 0.0
    %1027 = vmatprep.subr.mxu0 0.0
    %1028 = vmatpush1.msra.mxu0 0.0
    %1029 = vmatprep.subr.mxu0 0.0
    %1030 = vmatpush1.msra.mxu0 0.0
    %1031 = vmatprep.subr.mxu0 0.0
    %1032 = vmatpush1.msra.mxu0 0.0
    %1033 = vmatprep.subr.mxu0 0.0
    %1034 = vmatpush1.msra.mxu0 0.0
    %1035 = vmatprep.subr.mxu0 0.0
    %1036 = vmatpush1.msra.mxu0 0.0
    %1037 = vmatprep.subr.mxu0 0.0
    %1038 = vmatpush1.msra.mxu0 0.0
    %1039 = vmatprep.subr.mxu0 0.0
    %1040 = vmatpush1.msra.mxu0 0.0
    %1041 = vmatprep.subr.mxu0 0.0
    %1042 = vmatpush1.msra.mxu0 0.0
    %1043 = vmatprep.subr.mxu0 0.0
    %1044 = vmatpush1.msra.mxu0 0.0
    %1045 = vmatprep.subr.mxu0 0.0
    %1046 = vmatpush1.msra.mxu0 0.0
    %1047 = vmatprep.subr.mxu0 0.0
    %1048 = vmatpush1.msra.mxu0 0.0
    %1049 = vmatprep.subr.mxu0 0.0
    %1050 = vmatpush1.msra.mxu0 0.0
    %1051 = vmatprep.subr.mxu0 0.0
    %1052 = vmatpush1.msra.mxu0 0.0
    %1053 = vmatprep.subr.mxu0 0.0
    %1054 = vmatpush1.msra.mxu0 0.0
    %1055 = vmatprep.subr.mxu0 0.0
    %1056 = vmatpush1.msra.mxu0 0.0
    %1057 = vmatprep.subr.mxu0 0.0
    %1058 = vmatpush1.msra.mxu0 0.0
    %1059 = vmatprep.subr.mxu0 0.0
    %1060 = vmatpush1.msra.mxu0 0.0
    %1061 = vmatprep.subr.mxu0 0.0
    %1062 = vmatpush1.msra.mxu0 0.0
    %1063 = vmatprep.subr.mxu0 0.0
    %1064 = vmatpush1.msra.mxu0 0.0
    %1065 = vmatprep.subr.mxu0 0.0
    %1066 = vmatpush1.msra.mxu0 0.0
    %1067 = vmatprep.subr.mxu0 0.0
    %1068 = vmatpush1.msra.mxu0 0.0
    %1069 = vmatprep.subr.mxu0 0.0
    %1070 = vmatpush1.msra.mxu0 0.0
    %1071 = vmatprep.subr.mxu0 0.0
    %1072 = vmatpush1.msra.mxu0 0.0
    %1073 = vmatprep.subr.mxu0 0.0
    %1074 = vmatpush1.msra.mxu0 0.0
    %1075 = vmatprep.subr.mxu0 0.0
    %1076 = vmatpush1.msra.mxu0 0.0
    %1077 = vmatprep.subr.mxu0 0.0
    %1078 = vmatpush1.msra.mxu0 0.0
    %1079 = vmatprep.subr.mxu0 0.0
    %1080 = vmatpush1.msra.mxu0 0.0
    %1081 = vmatprep.subr.mxu0 0.0
    %1082 = vmatpush1.msra.mxu0 0.0
    %1083 = vmatprep.subr.mxu0 0.0
    %1084 = vmatpush1.msra.mxu0 0.0
    %1085 = vmatprep.mubr.f32.mxu0 0.0
    %1086 = vmatmul.mubr.f32.gmra.mrb[0].mxu0 %v809
    %v1087 = vpop.f32.mrb[0].mxu0
    %v1088 = vadd.f32 %v1018, %v1087
    %v1089 = vpop.f32.mrb[0].mxu0
    %1090 = vdwg.mxu0
    %v1093 = vcombine.high %v400, %v400
    %v1095 = vunpack.c.l.s4 1983009808
    %v1096 = vunpack.c.0.s8 %v1095
    %v1097 = vlaneseq
    %v1098 = vshrl.u32 %v1097, 7
    %v1099 = vsub.s32 %v1096, %v1098
    %v1100 = vrot.slane %v400, %v1099
    %v1102 = vunpack.c.l.s4 1983009808
    %v1103 = vunpack.c.0.s8 %v1102
    %v1104 = vlaneseq
    %v1105 = vshrl.u32 %v1104, 7
    %v1106 = vsub.s32 %v1103, %v1105
    %v1107 = vrot.slane %v1093, %v1106
    %v1108 = vcombine.high %v1100, %v1100
    %v1109 = vcombine.high %v1107, %v1107
    %v1110 = vcombine.high %v401, %v401
    %v1112 = vunpack.c.l.s4 1983009808
    %v1113 = vunpack.c.0.s8 %v1112
    %v1114 = vlaneseq
    %v1115 = vshrl.u32 %v1114, 7
    %v1116 = vsub.s32 %v1113, %v1115
    %v1117 = vrot.slane %v401, %v1116
    %v1119 = vunpack.c.l.s4 1983009808
    %v1120 = vunpack.c.0.s8 %v1119
    %v1121 = vlaneseq
    %v1122 = vshrl.u32 %v1121, 7
    %v1123 = vsub.s32 %v1120, %v1122
    %v1124 = vrot.slane %v1110, %v1123
    %v1125 = vcombine.high %v1117, %v1117
    %v1132 = vsel %vm808, %v1124, 0
    %1134 = vmatprep.subr.mxu0 0.0
    %1135 = vmatpush1.msra.mxu0 %v402
    %1136 = vmatprep.subr.mxu0 0.0
    %1137 = vmatpush1.msra.mxu0 %v403
    %1138 = vmatprep.subr.mxu0 0.0
    %1139 = vmatpush1.msra.mxu0 %v404
    %1140 = vmatprep.subr.mxu0 0.0
    %1141 = vmatpush1.msra.mxu0 %v405
    %1142 = vmatprep.subr.mxu0 0.0
    %1143 = vmatpush1.msra.mxu0 %v406
    %1144 = vmatprep.subr.mxu0 0.0
    %1145 = vmatpush1.msra.mxu0 %v407
    %1146 = vmatprep.subr.mxu0 0.0
    %1147 = vmatpush1.msra.mxu0 %v408
    %1148 = vmatprep.subr.mxu0 0.0
    %1149 = vmatpush1.msra.mxu0 %v409
    %1150 = vmatprep.subr.mxu0 0.0
    %1151 = vmatpush1.msra.mxu0 %v410
    %1152 = vmatprep.subr.mxu0 0.0
    %1153 = vmatpush1.msra.mxu0 %v411
    %1154 = vmatprep.subr.mxu0 0.0
    %1155 = vmatpush1.msra.mxu0 %v412
    %1156 = vmatprep.subr.mxu0 0.0
    %1157 = vmatpush1.msra.mxu0 %v413
    %1158 = vmatprep.subr.mxu0 0.0
    %1159 = vmatpush1.msra.mxu0 %v414
    %1160 = vmatprep.subr.mxu0 0.0
    %1161 = vmatpush1.msra.mxu0 %v415
    %1162 = vmatprep.subr.mxu0 0.0
    %1163 = vmatpush1.msra.mxu0 %v416
    %1164 = vmatprep.subr.mxu0 0.0
    %1165 = vmatpush1.msra.mxu0 %v417
    %1166 = vmatprep.subr.mxu0 0.0
    %1167 = vmatpush1.msra.mxu0 %v418
    %1168 = vmatprep.subr.mxu0 0.0
    %1169 = vmatpush1.msra.mxu0 %v419
    %1170 = vmatprep.subr.mxu0 0.0
    %1171 = vmatpush1.msra.mxu0 %v420
    %1172 = vmatprep.subr.mxu0 0.0
    %1173 = vmatpush1.msra.mxu0 %v421
    %1174 = vmatprep.subr.mxu0 0.0
    %1175 = vmatpush1.msra.mxu0 %v422
    %1176 = vmatprep.subr.mxu0 0.0
    %1177 = vmatpush1.msra.mxu0 %v423
    %1178 = vmatprep.subr.mxu0 0.0
    %1179 = vmatpush1.msra.mxu0 %v424
    %1180 = vmatprep.subr.mxu0 0.0
    %1181 = vmatpush1.msra.mxu0 %v425
    %1182 = vmatprep.subr.mxu0 0.0
    %1183 = vmatpush1.msra.mxu0 %v426
    %1184 = vmatprep.subr.mxu0 0.0
    %1185 = vmatpush1.msra.mxu0 %v427
    %1186 = vmatprep.subr.mxu0 0.0
    %1187 = vmatpush1.msra.mxu0 %v428
    %1188 = vmatprep.subr.mxu0 0.0
    %1189 = vmatpush1.msra.mxu0 %v429
    %1190 = vmatprep.subr.mxu0 0.0
    %1191 = vmatpush1.msra.mxu0 %v430
    %1192 = vmatprep.subr.mxu0 0.0
    %1193 = vmatpush1.msra.mxu0 %v431
    %1194 = vmatprep.subr.mxu0 0.0
    %1195 = vmatpush1.msra.mxu0 %v432
    %1196 = vmatprep.subr.mxu0 0.0
    %1197 = vmatpush1.msra.mxu0 %v433
    %1198 = vmatprep.mubr.f32.mxu0 %v1108
    %1199 = vmatmul.mubr.f32.gmra.mrb[0].mxu0 %v1100
    %v1200 = vpop.f32.mrb[0].mxu0
    %v1201 = vadd.f32 %v1088, %v1200
    %v1202 = vpop.f32.mrb[0].mxu0
    %1203 = vdwg.mxu0
    %1204 = vmatprep.subr.mxu0 0.0
    %1205 = vmatpush1.msra.mxu0 %v434
    %1206 = vmatprep.subr.mxu0 0.0
    %1207 = vmatpush1.msra.mxu0 %v435
    %1208 = vmatprep.subr.mxu0 0.0
    %1209 = vmatpush1.msra.mxu0 %v436
    %1210 = vmatprep.subr.mxu0 0.0
    %1211 = vmatpush1.msra.mxu0 %v437
    %1212 = vmatprep.subr.mxu0 0.0
    %1213 = vmatpush1.msra.mxu0 %v438
    %1214 = vmatprep.subr.mxu0 0.0
    %1215 = vmatpush1.msra.mxu0 %v439
    %1216 = vmatprep.subr.mxu0 0.0
    %1217 = vmatpush1.msra.mxu0 %v440
    %1218 = vmatprep.subr.mxu0 0.0
    %1219 = vmatpush1.msra.mxu0 %v441
    %1220 = vmatprep.subr.mxu0 0.0
    %1221 = vmatpush1.msra.mxu0 %v442
    %1222 = vmatprep.subr.mxu0 0.0
    %1223 = vmatpush1.msra.mxu0 %v443
    %1224 = vmatprep.subr.mxu0 0.0
    %1225 = vmatpush1.msra.mxu0 %v444
    %1226 = vmatprep.subr.mxu0 0.0
    %1227 = vmatpush1.msra.mxu0 %v445
    %1228 = vmatprep.subr.mxu0 0.0
    %1229 = vmatpush1.msra.mxu0 %v446
    %1230 = vmatprep.subr.mxu0 0.0
    %1231 = vmatpush1.msra.mxu0 %v447
    %1232 = vmatprep.subr.mxu0 0.0
    %1233 = vmatpush1.msra.mxu0 %v448
    %1234 = vmatprep.subr.mxu0 0.0
    %1235 = vmatpush1.msra.mxu0 %v449
    %1236 = vmatprep.subr.mxu0 0.0
    %1237 = vmatpush1.msra.mxu0 %v450
    %1238 = vmatprep.subr.mxu0 0.0
    %1239 = vmatpush1.msra.mxu0 %v451
    %1240 = vmatprep.subr.mxu0 0.0
    %1241 = vmatpush1.msra.mxu0 %v452
    %1242 = vmatprep.subr.mxu0 0.0
    %1243 = vmatpush1.msra.mxu0 %v453
    %1244 = vmatprep.subr.mxu0 0.0
    %1245 = vmatpush1.msra.mxu0 %v454
    %1246 = vmatprep.subr.mxu0 0.0
    %1247 = vmatpush1.msra.mxu0 %v455
    %1248 = vmatprep.subr.mxu0 0.0
    %1249 = vmatpush1.msra.mxu0 %v456
    %1250 = vmatprep.subr.mxu0 0.0
    %1251 = vmatpush1.msra.mxu0 %v457
    %1252 = vmatprep.subr.mxu0 0.0
    %1253 = vmatpush1.msra.mxu0 %v458
    %1254 = vmatprep.subr.mxu0 0.0
    %1255 = vmatpush1.msra.mxu0 %v459
    %1256 = vmatprep.subr.mxu0 0.0
    %1257 = vmatpush1.msra.mxu0 %v460
    %1258 = vmatprep.subr.mxu0 0.0
    %1259 = vmatpush1.msra.mxu0 %v461
    %1260 = vmatprep.subr.mxu0 0.0
    %1261 = vmatpush1.msra.mxu0 %v462
    %1262 = vmatprep.subr.mxu0 0.0
    %1263 = vmatpush1.msra.mxu0 %v463
    %1264 = vmatprep.subr.mxu0 0.0
    %1265 = vmatpush1.msra.mxu0 %v464
    %1266 = vmatprep.subr.mxu0 0.0
    %1267 = vmatpush1.msra.mxu0 %v465
    %1268 = vmatprep.mubr.f32.mxu0 %v1109
    %1269 = vmatmul.mubr.f32.gmra.mrb[0].mxu0 %v1107
    %v1270 = vpop.f32.mrb[0].mxu0
    %v1271 = vadd.f32 %v1201, %v1270
    %v1272 = vpop.f32.mrb[0].mxu0
    %1273 = vdwg.mxu0
    %1274 = vmatprep.subr.mxu0 0.0
    %1275 = vmatpush1.msra.mxu0 %v466
    %1276 = vmatprep.subr.mxu0 0.0
    %1277 = vmatpush1.msra.mxu0 %v467
    %1278 = vmatprep.subr.mxu0 0.0
    %1279 = vmatpush1.msra.mxu0 %v468
    %1280 = vmatprep.subr.mxu0 0.0
    %1281 = vmatpush1.msra.mxu0 %v469
    %1282 = vmatprep.subr.mxu0 0.0
    %1283 = vmatpush1.msra.mxu0 %v470
    %1284 = vmatprep.subr.mxu0 0.0
    %1285 = vmatpush1.msra.mxu0 %v471
    %1286 = vmatprep.subr.mxu0 0.0
    %1287 = vmatpush1.msra.mxu0 %v472
    %1288 = vmatprep.subr.mxu0 0.0
    %1289 = vmatpush1.msra.mxu0 %v473
    %1290 = vmatprep.subr.mxu0 0.0
    %1291 = vmatpush1.msra.mxu0 %v474
    %1292 = vmatprep.subr.mxu0 0.0
    %1293 = vmatpush1.msra.mxu0 %v475
    %1294 = vmatprep.subr.mxu0 0.0
    %1295 = vmatpush1.msra.mxu0 %v476
    %1296 = vmatprep.subr.mxu0 0.0
    %1297 = vmatpush1.msra.mxu0 %v477
    %1298 = vmatprep.subr.mxu0 0.0
    %1299 = vmatpush1.msra.mxu0 %v478
    %1300 = vmatprep.subr.mxu0 0.0
    %1301 = vmatpush1.msra.mxu0 %v479
    %1302 = vmatprep.subr.mxu0 0.0
    %1303 = vmatpush1.msra.mxu0 %v480
    %1304 = vmatprep.subr.mxu0 0.0
    %1305 = vmatpush1.msra.mxu0 %v481
    %1306 = vmatprep.subr.mxu0 0.0
    %1307 = vmatpush1.msra.mxu0 %v482
    %1308 = vmatprep.subr.mxu0 0.0
    %1309 = vmatpush1.msra.mxu0 %v483
    %1310 = vmatprep.subr.mxu0 0.0
    %1311 = vmatpush1.msra.mxu0 %v484
    %1312 = vmatprep.subr.mxu0 0.0
    %1313 = vmatpush1.msra.mxu0 %v485
    %1314 = vmatprep.subr.mxu0 0.0
    %1315 = vmatpush1.msra.mxu0 %v486
    %1316 = vmatprep.subr.mxu0 0.0
    %1317 = vmatpush1.msra.mxu0 %v487
    %1318 = vmatprep.subr.mxu0 0.0
    %1319 = vmatpush1.msra.mxu0 %v488
    %1320 = vmatprep.subr.mxu0 0.0
    %1321 = vmatpush1.msra.mxu0 %v489
    %1322 = vmatprep.subr.mxu0 0.0
    %1323 = vmatpush1.msra.mxu0 %v490
    %1324 = vmatprep.subr.mxu0 0.0
    %1325 = vmatpush1.msra.mxu0 %v491
    %1326 = vmatprep.subr.mxu0 0.0
    %1327 = vmatpush1.msra.mxu0 %v492
    %1328 = vmatprep.subr.mxu0 0.0
    %1329 = vmatpush1.msra.mxu0 %v493
    %1330 = vmatprep.subr.mxu0 0.0
    %1331 = vmatpush1.msra.mxu0 %v494
    %1332 = vmatprep.subr.mxu0 0.0
    %1333 = vmatpush1.msra.mxu0 %v495
    %1334 = vmatprep.subr.mxu0 0.0
    %1335 = vmatpush1.msra.mxu0 %v496
    %1336 = vmatprep.subr.mxu0 0.0
    %1337 = vmatpush1.msra.mxu0 %v497
    %1338 = vmatprep.mubr.f32.mxu0 %v1125
    %1339 = vmatmul.mubr.f32.gmra.mrb[0].mxu0 %v1117
    %v1340 = vpop.f32.mrb[0].mxu0
    %v1341 = vadd.f32 %v1271, %v1340
    %v1342 = vpop.f32.mrb[0].mxu0
    %1343 = vdwg.mxu0
    %1344 = vmatprep.subr.mxu0 0.0
    %1345 = vmatpush1.msra.mxu0 %v498
    %1346 = vmatprep.subr.mxu0 0.0
    %1347 = vmatpush1.msra.mxu0 %v499
    %1348 = vmatprep.subr.mxu0 0.0
    %1349 = vmatpush1.msra.mxu0 0.0
    %1350 = vmatprep.subr.mxu0 0.0
    %1351 = vmatpush1.msra.mxu0 0.0
    %1352 = vmatprep.subr.mxu0 0.0
    %1353 = vmatpush1.msra.mxu0 0.0
    %1354 = vmatprep.subr.mxu0 0.0
    %1355 = vmatpush1.msra.mxu0 0.0
    %1356 = vmatprep.subr.mxu0 0.0
    %1357 = vmatpush1.msra.mxu0 0.0
    %1358 = vmatprep.subr.mxu0 0.0
    %1359 = vmatpush1.msra.mxu0 0.0
    %1360 = vmatprep.subr.mxu0 0.0
    %1361 = vmatpush1.msra.mxu0 0.0
    %1362 = vmatprep.subr.mxu0 0.0
    %1363 = vmatpush1.msra.mxu0 0.0
    %1364 = vmatprep.subr.mxu0 0.0
    %1365 = vmatpush1.msra.mxu0 0.0
    %1366 = vmatprep.subr.mxu0 0.0
    %1367 = vmatpush1.msra.mxu0 0.0
    %1368 = vmatprep.subr.mxu0 0.0
    %1369 = vmatpush1.msra.mxu0 0.0
    %1370 = vmatprep.subr.mxu0 0.0
    %1371 = vmatpush1.msra.mxu0 0.0
    %1372 = vmatprep.subr.mxu0 0.0
    %1373 = vmatpush1.msra.mxu0 0.0
    %1374 = vmatprep.subr.mxu0 0.0
    %1375 = vmatpush1.msra.mxu0 0.0
    %1376 = vmatprep.subr.mxu0 0.0
    %1377 = vmatpush1.msra.mxu0 0.0
    %1378 = vmatprep.subr.mxu0 0.0
    %1379 = vmatpush1.msra.mxu0 0.0
    %1380 = vmatprep.subr.mxu0 0.0
    %1381 = vmatpush1.msra.mxu0 0.0
    %1382 = vmatprep.subr.mxu0 0.0
    %1383 = vmatpush1.msra.mxu0 0.0
    %1384 = vmatprep.subr.mxu0 0.0
    %1385 = vmatpush1.msra.mxu0 0.0
    %1386 = vmatprep.subr.mxu0 0.0
    %1387 = vmatpush1.msra.mxu0 0.0
    %1388 = vmatprep.subr.mxu0 0.0
    %1389 = vmatpush1.msra.mxu0 0.0
    %1390 = vmatprep.subr.mxu0 0.0
    %1391 = vmatpush1.msra.mxu0 0.0
    %1392 = vmatprep.subr.mxu0 0.0
    %1393 = vmatpush1.msra.mxu0 0.0
    %1394 = vmatprep.subr.mxu0 0.0
    %1395 = vmatpush1.msra.mxu0 0.0
    %1396 = vmatprep.subr.mxu0 0.0
    %1397 = vmatpush1.msra.mxu0 0.0
    %1398 = vmatprep.subr.mxu0 0.0
    %1399 = vmatpush1.msra.mxu0 0.0
    %1400 = vmatprep.subr.mxu0 0.0
    %1401 = vmatpush1.msra.mxu0 0.0
    %1402 = vmatprep.subr.mxu0 0.0
    %1403 = vmatpush1.msra.mxu0 0.0
    %1404 = vmatprep.subr.mxu0 0.0
    %1405 = vmatpush1.msra.mxu0 0.0
    %1406 = vmatprep.subr.mxu0 0.0
    %1407 = vmatpush1.msra.mxu0 0.0
    %1408 = vmatprep.mubr.f32.mxu0 0.0
    %1409 = vmatmul.mubr.f32.gmra.mrb[0].mxu0 %v1132
    %v1410 = vpop.f32.mrb[0].mxu0
    %v1411 = vadd.f32 %v1341, %v1410
    %v1412 = vpop.f32.mrb[0].mxu0
    %1413 = vdwg.mxu0
    %s1414 = sld [smem:[#allocation2 + $0x100]]
    %v1415 = vstv %s1414
    %v1416 = vmul.f32 %v57, %v1415
    %v1417 = vmul.f32 %v58, %v1415
    %s1418 = sld [smem:[#allocation2 + $0x101]]
    %v1419 = vstv %s1418
    %v1420 = vmul.f32 %v161, %v1419
    %v1421 = vmul.f32 %v162, %v1419
    %v1422 = vmul.f32 %v163, %v1419
    %v1423 = vmul.f32 %v164, %v1419
    %v1424 = vmul.f32 %v165, %v1419
    %v1425 = vmul.f32 %v166, %v1419
    %v1426 = vmul.f32 %v167, %v1419
    %v1434 = vcombine.low %v1420, %v1421
    %v1435 = vcombine.low %v1422, %v1423
    %v1437 = vunpack.c.l.s4 1983009808
    %v1438 = vunpack.c.0.s8 %v1437
    %v1439 = vlaneseq
    %v1440 = vshrl.u32 %v1439, 7
    %v1441 = vsub.s32 %v1438, %v1440
    %v1442 = vrot.slane %v1434, %v1441
    %v1444 = vunpack.c.l.s4 1983009808
    %v1445 = vunpack.c.0.s8 %v1444
    %v1446 = vlaneseq
    %v1447 = vshrl.u32 %v1446, 7
    %v1448 = vsub.s32 %v1445, %v1447
    %v1449 = vrot.slane %v1435, %v1448
    %v1450 = vcombine.low %v1442, %v1449
    %v1451 = vcombine.low %v1424, %v1425
    %v1453 = vunpack.c.l.s4 1983009808
    %v1454 = vunpack.c.0.s8 %v1453
    %v1455 = vlaneseq
    %v1456 = vshrl.u32 %v1455, 7
    %v1457 = vsub.s32 %v1454, %v1456
    %v1458 = vrot.slane %v1451, %v1457
    %v1460 = vunpack.c.l.s4 1983009808
    %v1461 = vunpack.c.0.s8 %v1460
    %v1462 = vlaneseq
    %v1463 = vshrl.u32 %v1462, 7
    %v1464 = vsub.s32 %v1461, %v1463
    %v1465 = vrot.slane %v1426, %v1464
    %v1466 = vcombine.low %v1458, %v1465
    %v1469 = vadd.f32 %v1416, %v1450
    %v1470 = vadd.f32 %v1417, %v1466
    %s1471 = sld [smem:[#allocation2 + $0x102]]
    %v1472 = vstv %s1471
    %v1473 = vmul.f32 %v183, %v1472
    %v1474 = vmul.f32 %v184, %v1472
    %v1475 = vmul.f32 %v185, %v1472
    %v1476 = vmul.f32 %v186, %v1472
    %v1477 = vmul.f32 %v187, %v1472
    %v1478 = vmul.f32 %v196, %v1472
    %v1479 = vmul.f32 %v1472, 0.0
    %v1487 = vcombine.low %v1473, %v1474
    %v1488 = vcombine.low %v1475, %v1476
    %v1490 = vunpack.c.l.s4 1983009808
    %v1491 = vunpack.c.0.s8 %v1490
    %v1492 = vlaneseq
    %v1493 = vshrl.u32 %v1492, 7
    %v1494 = vsub.s32 %v1491, %v1493
    %v1495 = vrot.slane %v1487, %v1494
    %v1497 = vunpack.c.l.s4 1983009808
    %v1498 = vunpack.c.0.s8 %v1497
    %v1499 = vlaneseq
    %v1500 = vshrl.u32 %v1499, 7
    %v1501 = vsub.s32 %v1498, %v1500
    %v1502 = vrot.slane %v1488, %v1501
    %v1503 = vcombine.low %v1495, %v1502
    %v1504 = vcombine.low %v1477, %v1478
    %v1506 = vunpack.c.l.s4 1983009808
    %v1507 = vunpack.c.0.s8 %v1506
    %v1508 = vlaneseq
    %v1509 = vshrl.u32 %v1508, 7
    %v1510 = vsub.s32 %v1507, %v1509
    %v1511 = vrot.slane %v1504, %v1510
    %v1513 = vunpack.c.l.s4 1983009808
    %v1514 = vunpack.c.0.s8 %v1513
    %v1515 = vlaneseq
    %v1516 = vshrl.u32 %v1515, 7
    %v1517 = vsub.s32 %v1514, %v1516
    %v1518 = vrot.slane %v1479, %v1517
    %v1519 = vcombine.low %v1511, %v1518
    %v1522 = vadd.f32 %v1469, %v1503
    %v1523 = vadd.f32 %v1470, %v1519
    %s1524 = sld [smem:[#allocation2 + $0x103]]
    %v1525 = vstv %s1524
    %v1526 = vmul.f32 %v226, %v1525
    %v1527 = vmul.f32 %v227, %v1525
    %v1528 = vmul.f32 %v228, %v1525
    %v1529 = vmul.f32 %v229, %v1525
    %v1530 = vmul.f32 %v230, %v1525
    %v1531 = vmul.f32 %v231, %v1525
    %v1532 = vmul.f32 %v232, %v1525
    %v1540 = vcombine.low %v1526, %v1527
    %v1541 = vcombine.low %v1528, %v1529
    %v1543 = vunpack.c.l.s4 1983009808
    %v1544 = vunpack.c.0.s8 %v1543
    %v1545 = vlaneseq
    %v1546 = vshrl.u32 %v1545, 7
    %v1547 = vsub.s32 %v1544, %v1546
    %v1548 = vrot.slane %v1540, %v1547
    %v1550 = vunpack.c.l.s4 1983009808
    %v1551 = vunpack.c.0.s8 %v1550
    %v1552 = vlaneseq
    %v1553 = vshrl.u32 %v1552, 7
    %v1554 = vsub.s32 %v1551, %v1553
    %v1555 = vrot.slane %v1541, %v1554
    %v1556 = vcombine.low %v1548, %v1555
    %v1557 = vcombine.low %v1530, %v1531
    %v1559 = vunpack.c.l.s4 1983009808
    %v1560 = vunpack.c.0.s8 %v1559
    %v1561 = vlaneseq
    %v1562 = vshrl.u32 %v1561, 7
    %v1563 = vsub.s32 %v1560, %v1562
    %v1564 = vrot.slane %v1557, %v1563
    %v1566 = vunpack.c.l.s4 1983009808
    %v1567 = vunpack.c.0.s8 %v1566
    %v1568 = vlaneseq
    %v1569 = vshrl.u32 %v1568, 7
    %v1570 = vsub.s32 %v1567, %v1569
    %v1571 = vrot.slane %v1532, %v1570
    %v1572 = vcombine.low %v1564, %v1571
    %v1575 = vadd.f32 %v1522, %v1556
    %v1576 = vadd.f32 %v1523, %v1572
    %s1577 = sld [smem:[#allocation5 + $0x2]]
    %v1578 = vstv %s1577
    %v1579 = vadd.f32 %v1575, %v1578
    %v1580 = vadd.f32 %v1576, %v1578
    %v1581 = vmax.f32 %v1579, 0.0
    %v1582 = vmax.f32 %v1580, 0.0
    %v1583 = vld [vmem:[%s4 + $0x620] sm:$0xff]
    %v1584 = vld [vmem:[%s4 + $0x628] sm:$0xff]
    %v1585 = vld [vmem:[%s4 + $0x630] sm:$0xff]
    %v1586 = vld [vmem:[%s4 + $0x638] sm:$0xff]
    %v1587 = vld [vmem:[%s4 + $0x640] sm:$0xff]
    %v1588 = vld [vmem:[%s4 + $0x648] sm:$0xff]
    %v1589 = vld [vmem:[%s4 + $0x650] sm:$0xff]
    %v1590 = vld [vmem:[%s4 + $0x658] sm:$0xff]
    %v1591 = vld [vmem:[%s4 + $0x660] sm:$0xff]
    %v1592 = vld [vmem:[%s4 + $0x668] sm:$0xff]
    %v1593 = vld [vmem:[%s4 + $0x670] sm:$0xff]
    %v1594 = vld [vmem:[%s4 + $0x678] sm:$0xff]
    %v1595 = vld [vmem:[%s4 + $0x680] sm:$0xff]
    %v1596 = vld [vmem:[%s4 + $0x688] sm:$0xff]
    %v1597 = vld [vmem:[%s4 + $0x690] sm:$0xff]
    %v1598 = vld [vmem:[%s4 + $0x698] sm:$0xff]
    %v1599 = vld [vmem:[%s4 + $0x6a0] sm:$0xff]
    %v1600 = vld [vmem:[%s4 + $0x6a8] sm:$0xff]
    %v1601 = vld [vmem:[%s4 + $0x6b0] sm:$0xff]
    %v1602 = vld [vmem:[%s4 + $0x6b8] sm:$0xff]
    %v1603 = vld [vmem:[%s4 + $0x6c0] sm:$0xff]
    %v1604 = vld [vmem:[%s4 + $0x6c8] sm:$0xff]
    %v1605 = vld [vmem:[%s4 + $0x6d0] sm:$0xff]
    %v1606 = vld [vmem:[%s4 + $0x6d8] sm:$0xff]
    %v1607 = vld [vmem:[%s4 + $0x6e0] sm:$0xff]
    %v1608 = vld [vmem:[%s4 + $0x6e8] sm:$0xff]
    %v1609 = vld [vmem:[%s4 + $0x6f0] sm:$0xff]
    %v1610 = vld [vmem:[%s4 + $0x6f8] sm:$0xff]
    %v1611 = vld [vmem:[%s4 + $0x700] sm:$0xff]
    %v1612 = vld [vmem:[%s4 + $0x708] sm:$0xff]
    %v1613 = vld [vmem:[%s4 + $0x710] sm:$0xff]
    %v1614 = vld [vmem:[%s4 + $0x718] sm:$0xff]
    %v1615 = vld [vmem:[%s4 + $0x720] sm:$0xff]
    %v1616 = vld [vmem:[%s4 + $0x728] sm:$0xff]
    %v1617 = vld [vmem:[%s4 + $0x730] sm:$0xff]
    %v1618 = vld [vmem:[%s4 + $0x738] sm:$0xff]
    %v1619 = vld [vmem:[%s4 + $0x740] sm:$0xff]
    %v1620 = vld [vmem:[%s4 + $0x748] sm:$0xff]
    %v1621 = vld [vmem:[%s4 + $0x750] sm:$0xff]
    %v1622 = vld [vmem:[%s4 + $0x758] sm:$0xff]
    %v1623 = vld [vmem:[%s4 + $0x760] sm:$0xff]
    %v1624 = vld [vmem:[%s4 + $0x768] sm:$0xff]
    %v1625 = vld [vmem:[%s4 + $0x770] sm:$0xff]
    %v1626 = vld [vmem:[%s4 + $0x778] sm:$0xff]
    %v1627 = vld [vmem:[%s4 + $0x780] sm:$0xff]
    %v1628 = vld [vmem:[%s4 + $0x788] sm:$0xff]
    %v1629 = vld [vmem:[%s4 + $0x790] sm:$0xff]
    %v1630 = vld [vmem:[%s4 + $0x798] sm:$0xff]
    %v1631 = vld [vmem:[%s4 + $0x7a0] sm:$0xff]
    %v1632 = vld [vmem:[%s4 + $0x7a8] sm:$0xff]
    %v1633 = vld [vmem:[%s4 + $0x7b0] sm:$0xff]
    %v1634 = vld [vmem:[%s4 + $0x7b8] sm:$0xff]
    %v1635 = vld [vmem:[%s4 + $0x7c0] sm:$0xff]
    %v1636 = vld [vmem:[%s4 + $0x7c8] sm:$0xff]
    %v1637 = vld [vmem:[%s4 + $0x7d0] sm:$0xff]
    %v1638 = vld [vmem:[%s4 + $0x7d8] sm:$0xff]
    %v1639 = vld [vmem:[%s4 + $0x7e0] sm:$0xff]
    %v1640 = vld [vmem:[%s4 + $0x7e8] sm:$0xff]
    %v1641 = vld [vmem:[%s4 + $0x7f0] sm:$0xff]
    %v1642 = vld [vmem:[%s4 + $0x7f8] sm:$0xff]
    %v1643 = vld [vmem:[%s4 + $0x800] sm:$0xff]
    %v1644 = vld [vmem:[%s4 + $0x808] sm:$0xff]
    %v1645 = vld [vmem:[%s4 + $0x810] sm:$0xff]
    %v1646 = vld [vmem:[%s4 + $0x818] sm:$0xff]
    %v1647 = vld [vmem:[%s4 + $0x820] sm:$0xff]
    %v1648 = vld [vmem:[%s4 + $0x828] sm:$0xff]
    %v1649 = vld [vmem:[%s4 + $0x830] sm:$0xff]
    %v1650 = vld [vmem:[%s4 + $0x838] sm:$0xff]
    %v1651 = vld [vmem:[%s4 + $0x840] sm:$0xff]
    %v1652 = vld [vmem:[%s4 + $0x848] sm:$0xff]
    %v1653 = vld [vmem:[%s4 + $0x850] sm:$0xff]
    %v1654 = vld [vmem:[%s4 + $0x858] sm:$0xff]
    %v1655 = vld [vmem:[%s4 + $0x860] sm:$0xff]
    %v1656 = vld [vmem:[%s4 + $0x868] sm:$0xff]
    %v1657 = vld [vmem:[%s4 + $0x870] sm:$0xff]
    %v1658 = vld [vmem:[%s4 + $0x878] sm:$0xff]
    %v1659 = vld [vmem:[%s4 + $0x880] sm:$0xff]
    %v1660 = vld [vmem:[%s4 + $0x888] sm:$0xff]
    %v1661 = vld [vmem:[%s4 + $0x890] sm:$0xff]
    %v1662 = vld [vmem:[%s4 + $0x898] sm:$0xff]
    %v1663 = vld [vmem:[%s4 + $0x8a0] sm:$0xff]
    %v1664 = vld [vmem:[%s4 + $0x8a8] sm:$0xff]
    %v1665 = vld [vmem:[%s4 + $0x8b0] sm:$0xff]
    %v1666 = vld [vmem:[%s4 + $0x8b8] sm:$0xff]
    %v1667 = vld [vmem:[%s4 + $0x8c0] sm:$0xff]
    %v1668 = vld [vmem:[%s4 + $0x8c8] sm:$0xff]
    %v1669 = vld [vmem:[%s4 + $0x8d0] sm:$0xff]
    %v1670 = vld [vmem:[%s4 + $0x8d8] sm:$0xff]
    %v1671 = vld [vmem:[%s4 + $0x8e0] sm:$0xff]
    %v1672 = vld [vmem:[%s4 + $0x8e8] sm:$0xff]
    %v1673 = vld [vmem:[%s4 + $0x8f0] sm:$0xff]
    %v1674 = vld [vmem:[%s4 + $0x8f8] sm:$0xff]
    %v1675 = vld [vmem:[%s4 + $0x900] sm:$0xff]
    %v1676 = vld [vmem:[%s4 + $0x908] sm:$0xff]
    %v1677 = vld [vmem:[%s4 + $0x910] sm:$0xff]
    %v1678 = vld [vmem:[%s4 + $0x918] sm:$0xff]
    %v1679 = vld [vmem:[%s4 + $0x920] sm:$0xff]
    %v1680 = vld [vmem:[%s4 + $0x928] sm:$0xff]
    %v1683 = vcombine.high %v1581, %v1581
    %v1685 = vunpack.c.l.s4 1983009808
    %v1686 = vunpack.c.0.s8 %v1685
    %v1687 = vlaneseq
    %v1688 = vshrl.u32 %v1687, 7
    %v1689 = vsub.s32 %v1686, %v1688
    %v1690 = vrot.slane %v1581, %v1689
    %v1692 = vunpack.c.l.s4 1983009808
    %v1693 = vunpack.c.0.s8 %v1692
    %v1694 = vlaneseq
    %v1695 = vshrl.u32 %v1694, 7
    %v1696 = vsub.s32 %v1693, %v1695
    %v1697 = vrot.slane %v1683, %v1696
    %v1698 = vcombine.high %v1690, %v1690
    %v1699 = vcombine.high %v1697, %v1697
    %v1700 = vcombine.high %v1582, %v1582
    %v1702 = vunpack.c.l.s4 1983009808
    %v1703 = vunpack.c.0.s8 %v1702
    %v1704 = vlaneseq
    %v1705 = vshrl.u32 %v1704, 7
    %v1706 = vsub.s32 %v1703, %v1705
    %v1707 = vrot.slane %v1582, %v1706
    %v1709 = vunpack.c.l.s4 1983009808
    %v1710 = vunpack.c.0.s8 %v1709
    %v1711 = vlaneseq
    %v1712 = vshrl.u32 %v1711, 7
    %v1713 = vsub.s32 %v1710, %v1712
    %v1714 = vrot.slane %v1700, %v1713
    %v1715 = vcombine.high %v1707, %v1707
    %v1722 = vsel %vm808, %v1714, 0
    %1724 = vmatprep.subr.mxu0 0.0
    %1725 = vmatpush1.msra.mxu0 %v1583
    %1726 = vmatprep.subr.mxu0 0.0
    %1727 = vmatpush1.msra.mxu0 %v1584
    %1728 = vmatprep.subr.mxu0 0.0
    %1729 = vmatpush1.msra.mxu0 %v1585
    %1730 = vmatprep.subr.mxu0 0.0
    %1731 = vmatpush1.msra.mxu0 %v1586
    %1732 = vmatprep.subr.mxu0 0.0
    %1733 = vmatpush1.msra.mxu0 %v1587
    %1734 = vmatprep.subr.mxu0 0.0
    %1735 = vmatpush1.msra.mxu0 %v1588
    %1736 = vmatprep.subr.mxu0 0.0
    %1737 = vmatpush1.msra.mxu0 %v1589
    %1738 = vmatprep.subr.mxu0 0.0
    %1739 = vmatpush1.msra.mxu0 %v1590
    %1740 = vmatprep.subr.mxu0 0.0
    %1741 = vmatpush1.msra.mxu0 %v1591
    %1742 = vmatprep.subr.mxu0 0.0
    %1743 = vmatpush1.msra.mxu0 %v1592
    %1744 = vmatprep.subr.mxu0 0.0
    %1745 = vmatpush1.msra.mxu0 %v1593
    %1746 = vmatprep.subr.mxu0 0.0
    %1747 = vmatpush1.msra.mxu0 %v1594
    %1748 = vmatprep.subr.mxu0 0.0
    %1749 = vmatpush1.msra.mxu0 %v1595
    %1750 = vmatprep.subr.mxu0 0.0
    %1751 = vmatpush1.msra.mxu0 %v1596
    %1752 = vmatprep.subr.mxu0 0.0
    %1753 = vmatpush1.msra.mxu0 %v1597
    %1754 = vmatprep.subr.mxu0 0.0
    %1755 = vmatpush1.msra.mxu0 %v1598
    %1756 = vmatprep.subr.mxu0 0.0
    %1757 = vmatpush1.msra.mxu0 %v1599
    %1758 = vmatprep.subr.mxu0 0.0
    %1759 = vmatpush1.msra.mxu0 %v1600
    %1760 = vmatprep.subr.mxu0 0.0
    %1761 = vmatpush1.msra.mxu0 %v1601
    %1762 = vmatprep.subr.mxu0 0.0
    %1763 = vmatpush1.msra.mxu0 %v1602
    %1764 = vmatprep.subr.mxu0 0.0
    %1765 = vmatpush1.msra.mxu0 %v1603
    %1766 = vmatprep.subr.mxu0 0.0
    %1767 = vmatpush1.msra.mxu0 %v1604
    %1768 = vmatprep.subr.mxu0 0.0
    %1769 = vmatpush1.msra.mxu0 %v1605
    %1770 = vmatprep.subr.mxu0 0.0
    %1771 = vmatpush1.msra.mxu0 %v1606
    %1772 = vmatprep.subr.mxu0 0.0
    %1773 = vmatpush1.msra.mxu0 %v1607
    %1774 = vmatprep.subr.mxu0 0.0
    %1775 = vmatpush1.msra.mxu0 %v1608
    %1776 = vmatprep.subr.mxu0 0.0
    %1777 = vmatpush1.msra.mxu0 %v1609
    %1778 = vmatprep.subr.mxu0 0.0
    %1779 = vmatpush1.msra.mxu0 %v1610
    %1780 = vmatprep.subr.mxu0 0.0
    %1781 = vmatpush1.msra.mxu0 %v1611
    %1782 = vmatprep.subr.mxu0 0.0
    %1783 = vmatpush1.msra.mxu0 %v1612
    %1784 = vmatprep.subr.mxu0 0.0
    %1785 = vmatpush1.msra.mxu0 %v1613
    %1786 = vmatprep.subr.mxu0 0.0
    %1787 = vmatpush1.msra.mxu0 %v1614
    %1788 = vmatprep.mubr.f32.mxu0 %v1698
    %1789 = vmatmul.mubr.f32.gmra.mrb[0].mxu0 %v1690
    %v1790 = vpop.f32.mrb[0].mxu0
    %v1791 = vadd.f32 0.0, %v1790
    %v1792 = vpop.f32.mrb[0].mxu0
    %1793 = vdwg.mxu0
    %1794 = vmatprep.subr.mxu0 0.0
    %1795 = vmatpush1.msra.mxu0 %v1615
    %1796 = vmatprep.subr.mxu0 0.0
    %1797 = vmatpush1.msra.mxu0 %v1616
    %1798 = vmatprep.subr.mxu0 0.0
    %1799 = vmatpush1.msra.mxu0 %v1617
    %1800 = vmatprep.subr.mxu0 0.0
    %1801 = vmatpush1.msra.mxu0 %v1618
    %1802 = vmatprep.subr.mxu0 0.0
    %1803 = vmatpush1.msra.mxu0 %v1619
    %1804 = vmatprep.subr.mxu0 0.0
    %1805 = vmatpush1.msra.mxu0 %v1620
    %1806 = vmatprep.subr.mxu0 0.0
    %1807 = vmatpush1.msra.mxu0 %v1621
    %1808 = vmatprep.subr.mxu0 0.0
    %1809 = vmatpush1.msra.mxu0 %v1622
    %1810 = vmatprep.subr.mxu0 0.0
    %1811 = vmatpush1.msra.mxu0 %v1623
    %1812 = vmatprep.subr.mxu0 0.0
    %1813 = vmatpush1.msra.mxu0 %v1624
    %1814 = vmatprep.subr.mxu0 0.0
    %1815 = vmatpush1.msra.mxu0 %v1625
    %1816 = vmatprep.subr.mxu0 0.0
    %1817 = vmatpush1.msra.mxu0 %v1626
    %1818 = vmatprep.subr.mxu0 0.0
    %1819 = vmatpush1.msra.mxu0 %v1627
    %1820 = vmatprep.subr.mxu0 0.0
    %1821 = vmatpush1.msra.mxu0 %v1628
    %1822 = vmatprep.subr.mxu0 0.0
    %1823 = vmatpush1.msra.mxu0 %v1629
    %1824 = vmatprep.subr.mxu0 0.0
    %1825 = vmatpush1.msra.mxu0 %v1630
    %1826 = vmatprep.subr.mxu0 0.0
    %1827 = vmatpush1.msra.mxu0 %v1631
    %1828 = vmatprep.subr.mxu0 0.0
    %1829 = vmatpush1.msra.mxu0 %v1632
    %1830 = vmatprep.subr.mxu0 0.0
    %1831 = vmatpush1.msra.mxu0 %v1633
    %1832 = vmatprep.subr.mxu0 0.0
    %1833 = vmatpush1.msra.mxu0 %v1634
    %1834 = vmatprep.subr.mxu0 0.0
    %1835 = vmatpush1.msra.mxu0 %v1635
    %1836 = vmatprep.subr.mxu0 0.0
    %1837 = vmatpush1.msra.mxu0 %v1636
    %1838 = vmatprep.subr.mxu0 0.0
    %1839 = vmatpush1.msra.mxu0 %v1637
    %1840 = vmatprep.subr.mxu0 0.0
    %1841 = vmatpush1.msra.mxu0 %v1638
    %1842 = vmatprep.subr.mxu0 0.0
    %1843 = vmatpush1.msra.mxu0 %v1639
    %1844 = vmatprep.subr.mxu0 0.0
    %1845 = vmatpush1.msra.mxu0 %v1640
    %1846 = vmatprep.subr.mxu0 0.0
    %1847 = vmatpush1.msra.mxu0 %v1641
    %1848 = vmatprep.subr.mxu0 0.0
    %1849 = vmatpush1.msra.mxu0 %v1642
    %1850 = vmatprep.subr.mxu0 0.0
    %1851 = vmatpush1.msra.mxu0 %v1643
    %1852 = vmatprep.subr.mxu0 0.0
    %1853 = vmatpush1.msra.mxu0 %v1644
    %1854 = vmatprep.subr.mxu0 0.0
    %1855 = vmatpush1.msra.mxu0 %v1645
    %1856 = vmatprep.subr.mxu0 0.0
    %1857 = vmatpush1.msra.mxu0 %v1646
    %1858 = vmatprep.mubr.f32.mxu0 %v1699
    %1859 = vmatmul.mubr.f32.gmra.mrb[0].mxu0 %v1697
    %v1860 = vpop.f32.mrb[0].mxu0
    %v1861 = vadd.f32 %v1791, %v1860
    %v1862 = vpop.f32.mrb[0].mxu0
    %1863 = vdwg.mxu0
    %1864 = vmatprep.subr.mxu0 0.0
    %1865 = vmatpush1.msra.mxu0 %v1647
    %1866 = vmatprep.subr.mxu0 0.0
    %1867 = vmatpush1.msra.mxu0 %v1648
    %1868 = vmatprep.subr.mxu0 0.0
    %1869 = vmatpush1.msra.mxu0 %v1649
    %1870 = vmatprep.subr.mxu0 0.0
    %1871 = vmatpush1.msra.mxu0 %v1650
    %1872 = vmatprep.subr.mxu0 0.0
    %1873 = vmatpush1.msra.mxu0 %v1651
    %1874 = vmatprep.subr.mxu0 0.0
    %1875 = vmatpush1.msra.mxu0 %v1652
    %1876 = vmatprep.subr.mxu0 0.0
    %1877 = vmatpush1.msra.mxu0 %v1653
    %1878 = vmatprep.subr.mxu0 0.0
    %1879 = vmatpush1.msra.mxu0 %v1654
    %1880 = vmatprep.subr.mxu0 0.0
    %1881 = vmatpush1.msra.mxu0 %v1655
    %1882 = vmatprep.subr.mxu0 0.0
    %1883 = vmatpush1.msra.mxu0 %v1656
    %1884 = vmatprep.subr.mxu0 0.0
    %1885 = vmatpush1.msra.mxu0 %v1657
    %1886 = vmatprep.subr.mxu0 0.0
    %1887 = vmatpush1.msra.mxu0 %v1658
    %1888 = vmatprep.subr.mxu0 0.0
    %1889 = vmatpush1.msra.mxu0 %v1659
    %1890 = vmatprep.subr.mxu0 0.0
    %1891 = vmatpush1.msra.mxu0 %v1660
    %1892 = vmatprep.subr.mxu0 0.0
    %1893 = vmatpush1.msra.mxu0 %v1661
    %1894 = vmatprep.subr.mxu0 0.0
    %1895 = vmatpush1.msra.mxu0 %v1662
    %1896 = vmatprep.subr.mxu0 0.0
    %1897 = vmatpush1.msra.mxu0 %v1663
    %1898 = vmatprep.subr.mxu0 0.0
    %1899 = vmatpush1.msra.mxu0 %v1664
    %1900 = vmatprep.subr.mxu0 0.0
    %1901 = vmatpush1.msra.mxu0 %v1665
    %1902 = vmatprep.subr.mxu0 0.0
    %1903 = vmatpush1.msra.mxu0 %v1666
    %1904 = vmatprep.subr.mxu0 0.0
    %1905 = vmatpush1.msra.mxu0 %v1667
    %1906 = vmatprep.subr.mxu0 0.0
    %1907 = vmatpush1.msra.mxu0 %v1668
    %1908 = vmatprep.subr.mxu0 0.0
    %1909 = vmatpush1.msra.mxu0 %v1669
    %1910 = vmatprep.subr.mxu0 0.0
    %1911 = vmatpush1.msra.mxu0 %v1670
    %1912 = vmatprep.subr.mxu0 0.0
    %1913 = vmatpush1.msra.mxu0 %v1671
    %1914 = vmatprep.subr.mxu0 0.0
    %1915 = vmatpush1.msra.mxu0 %v1672
    %1916 = vmatprep.subr.mxu0 0.0
    %1917 = vmatpush1.msra.mxu0 %v1673
    %1918 = vmatprep.subr.mxu0 0.0
    %1919 = vmatpush1.msra.mxu0 %v1674
    %1920 = vmatprep.subr.mxu0 0.0
    %1921 = vmatpush1.msra.mxu0 %v1675
    %1922 = vmatprep.subr.mxu0 0.0
    %1923 = vmatpush1.msra.mxu0 %v1676
    %1924 = vmatprep.subr.mxu0 0.0
    %1925 = vmatpush1.msra.mxu0 %v1677
    %1926 = vmatprep.subr.mxu0 0.0
    %1927 = vmatpush1.msra.mxu0 %v1678
    %1928 = vmatprep.mubr.f32.mxu0 %v1715
    %1929 = vmatmul.mubr.f32.gmra.mrb[0].mxu0 %v1707
    %v1930 = vpop.f32.mrb[0].mxu0
    %v1931 = vadd.f32 %v1861, %v1930
    %v1932 = vpop.f32.mrb[0].mxu0
    %1933 = vdwg.mxu0
    %1934 = vmatprep.subr.mxu0 0.0
    %1935 = vmatpush1.msra.mxu0 %v1679
    %1936 = vmatprep.subr.mxu0 0.0
    %1937 = vmatpush1.msra.mxu0 %v1680
    %1938 = vmatprep.subr.mxu0 0.0
    %1939 = vmatpush1.msra.mxu0 0.0
    %1940 = vmatprep.subr.mxu0 0.0
    %1941 = vmatpush1.msra.mxu0 0.0
    %1942 = vmatprep.subr.mxu0 0.0
    %1943 = vmatpush1.msra.mxu0 0.0
    %1944 = vmatprep.subr.mxu0 0.0
    %1945 = vmatpush1.msra.mxu0 0.0
    %1946 = vmatprep.subr.mxu0 0.0
    %1947 = vmatpush1.msra.mxu0 0.0
    %1948 = vmatprep.subr.mxu0 0.0
    %1949 = vmatpush1.msra.mxu0 0.0
    %1950 = vmatprep.subr.mxu0 0.0
    %1951 = vmatpush1.msra.mxu0 0.0
    %1952 = vmatprep.subr.mxu0 0.0
    %1953 = vmatpush1.msra.mxu0 0.0
    %1954 = vmatprep.subr.mxu0 0.0
    %1955 = vmatpush1.msra.mxu0 0.0
    %1956 = vmatprep.subr.mxu0 0.0
    %1957 = vmatpush1.msra.mxu0 0.0
    %1958 = vmatprep.subr.mxu0 0.0
    %1959 = vmatpush1.msra.mxu0 0.0
    %1960 = vmatprep.subr.mxu0 0.0
    %1961 = vmatpush1.msra.mxu0 0.0
    %1962 = vmatprep.subr.mxu0 0.0
    %1963 = vmatpush1.msra.mxu0 0.0
    %1964 = vmatprep.subr.mxu0 0.0
    %1965 = vmatpush1.msra.mxu0 0.0
    %1966 = vmatprep.subr.mxu0 0.0
    %1967 = vmatpush1.msra.mxu0 0.0
    %1968 = vmatprep.subr.mxu0 0.0
    %1969 = vmatpush1.msra.mxu0 0.0
    %1970 = vmatprep.subr.mxu0 0.0
    %1971 = vmatpush1.msra.mxu0 0.0
    %1972 = vmatprep.subr.mxu0 0.0
    %1973 = vmatpush1.msra.mxu0 0.0
    %1974 = vmatprep.subr.mxu0 0.0
    %1975 = vmatpush1.msra.mxu0 0.0
    %1976 = vmatprep.subr.mxu0 0.0
    %1977 = vmatpush1.msra.mxu0 0.0
    %1978 = vmatprep.subr.mxu0 0.0
    %1979 = vmatpush1.msra.mxu0 0.0
    %1980 = vmatprep.subr.mxu0 0.0
    %1981 = vmatpush1.msra.mxu0 0.0
    %1982 = vmatprep.subr.mxu0 0.0
    %1983 = vmatpush1.msra.mxu0 0.0
    %1984 = vmatprep.subr.mxu0 0.0
    %1985 = vmatpush1.msra.mxu0 0.0
    %1986 = vmatprep.subr.mxu0 0.0
    %1987 = vmatpush1.msra.mxu0 0.0
    %1988 = vmatprep.subr.mxu0 0.0
    %1989 = vmatpush1.msra.mxu0 0.0
    %1990 = vmatprep.subr.mxu0 0.0
    %1991 = vmatpush1.msra.mxu0 0.0
    %1992 = vmatprep.subr.mxu0 0.0
    %1993 = vmatpush1.msra.mxu0 0.0
    %1994 = vmatprep.subr.mxu0 0.0
    %1995 = vmatpush1.msra.mxu0 0.0
    %1996 = vmatprep.subr.mxu0 0.0
    %1997 = vmatpush1.msra.mxu0 0.0
    %1998 = vmatprep.mubr.f32.mxu0 0.0
    %1999 = vmatmul.mubr.f32.gmra.mrb[0].mxu0 %v1722
    %v2000 = vpop.f32.mrb[0].mxu0
    %v2001 = vadd.f32 %v1931, %v2000
    %v2002 = vpop.f32.mrb[0].mxu0
    %2003 = vdwg.mxu0
    %v2004 = vadd.f32 %v1411, %v2001
    %s2005 = sld [smem:[#allocation2 + $0x180]]
    %v2006 = vstv %s2005
    %v2007 = vmul.f32 %v57, %v2006
    %v2008 = vmul.f32 %v58, %v2006
    %s2009 = sld [smem:[#allocation2 + $0x181]]
    %v2010 = vstv %s2009
    %v2011 = vmul.f32 %v161, %v2010
    %v2012 = vmul.f32 %v162, %v2010
    %v2013 = vmul.f32 %v163, %v2010
    %v2014 = vmul.f32 %v164, %v2010
    %v2015 = vmul.f32 %v165, %v2010
    %v2016 = vmul.f32 %v166, %v2010
    %v2017 = vmul.f32 %v167, %v2010
    %v2025 = vcombine.low %v2011, %v2012
    %v2026 = vcombine.low %v2013, %v2014
    %v2028 = vunpack.c.l.s4 1983009808
    %v2029 = vunpack.c.0.s8 %v2028
    %v2030 = vlaneseq
    %v2031 = vshrl.u32 %v2030, 7
    %v2032 = vsub.s32 %v2029, %v2031
    %v2033 = vrot.slane %v2025, %v2032
    %v2035 = vunpack.c.l.s4 1983009808
    %v2036 = vunpack.c.0.s8 %v2035
    %v2037 = vlaneseq
    %v2038 = vshrl.u32 %v2037, 7
    %v2039 = vsub.s32 %v2036, %v2038
    %v2040 = vrot.slane %v2026, %v2039
    %v2041 = vcombine.low %v2033, %v2040
    %v2042 = vcombine.low %v2015, %v2016
    %v2044 = vunpack.c.l.s4 1983009808
    %v2045 = vunpack.c.0.s8 %v2044
    %v2046 = vlaneseq
    %v2047 = vshrl.u32 %v2046, 7
    %v2048 = vsub.s32 %v2045, %v2047
    %v2049 = vrot.slane %v2042, %v2048
    %v2051 = vunpack.c.l.s4 1983009808
    %v2052 = vunpack.c.0.s8 %v2051
    %v2053 = vlaneseq
    %v2054 = vshrl.u32 %v2053, 7
    %v2055 = vsub.s32 %v2052, %v2054
    %v2056 = vrot.slane %v2017, %v2055
    %v2057 = vcombine.low %v2049, %v2056
    %v2060 = vadd.f32 %v2007, %v2041
    %v2061 = vadd.f32 %v2008, %v2057
    %s2062 = sld [smem:[#allocation2 + $0x182]]
    %v2063 = vstv %s2062
    %v2064 = vmul.f32 %v183, %v2063
    %v2065 = vmul.f32 %v184, %v2063
    %v2066 = vmul.f32 %v185, %v2063
    %v2067 = vmul.f32 %v186, %v2063
    %v2068 = vmul.f32 %v187, %v2063
    %v2069 = vmul.f32 %v196, %v2063
    %v2070 = vmul.f32 %v2063, 0.0
    %v2078 = vcombine.low %v2064, %v2065
    %v2079 = vcombine.low %v2066, %v2067
    %v2081 = vunpack.c.l.s4 1983009808
    %v2082 = vunpack.c.0.s8 %v2081
    %v2083 = vlaneseq
    %v2084 = vshrl.u32 %v2083, 7
    %v2085 = vsub.s32 %v2082, %v2084
    %v2086 = vrot.slane %v2078, %v2085
    %v2088 = vunpack.c.l.s4 1983009808
    %v2089 = vunpack.c.0.s8 %v2088
    %v2090 = vlaneseq
    %v2091 = vshrl.u32 %v2090, 7
    %v2092 = vsub.s32 %v2089, %v2091
    %v2093 = vrot.slane %v2079, %v2092
    %v2094 = vcombine.low %v2086, %v2093
    %v2095 = vcombine.low %v2068, %v2069
    %v2097 = vunpack.c.l.s4 1983009808
    %v2098 = vunpack.c.0.s8 %v2097
    %v2099 = vlaneseq
    %v2100 = vshrl.u32 %v2099, 7
    %v2101 = vsub.s32 %v2098, %v2100
    %v2102 = vrot.slane %v2095, %v2101
    %v2104 = vunpack.c.l.s4 1983009808
    %v2105 = vunpack.c.0.s8 %v2104
    %v2106 = vlaneseq
    %v2107 = vshrl.u32 %v2106, 7
    %v2108 = vsub.s32 %v2105, %v2107
    %v2109 = vrot.slane %v2070, %v2108
    %v2110 = vcombine.low %v2102, %v2109
    %v2113 = vadd.f32 %v2060, %v2094
    %v2114 = vadd.f32 %v2061, %v2110
    %s2115 = sld [smem:[#allocation2 + $0x183]]
    %v2116 = vstv %s2115
    %v2117 = vmul.f32 %v226, %v2116
    %v2118 = vmul.f32 %v227, %v2116
    %v2119 = vmul.f32 %v228, %v2116
    %v2120 = vmul.f32 %v229, %v2116
    %v2121 = vmul.f32 %v230, %v2116
    %v2122 = vmul.f32 %v231, %v2116
    %v2123 = vmul.f32 %v232, %v2116
    %v2131 = vcombine.low %v2117, %v2118
    %v2132 = vcombine.low %v2119, %v2120
    %v2134 = vunpack.c.l.s4 1983009808
    %v2135 = vunpack.c.0.s8 %v2134
    %v2136 = vlaneseq
    %v2137 = vshrl.u32 %v2136, 7
    %v2138 = vsub.s32 %v2135, %v2137
    %v2139 = vrot.slane %v2131, %v2138
    %v2141 = vunpack.c.l.s4 1983009808
    %v2142 = vunpack.c.0.s8 %v2141
    %v2143 = vlaneseq
    %v2144 = vshrl.u32 %v2143, 7
    %v2145 = vsub.s32 %v2142, %v2144
    %v2146 = vrot.slane %v2132, %v2145
    %v2147 = vcombine.low %v2139, %v2146
    %v2148 = vcombine.low %v2121, %v2122
    %v2150 = vunpack.c.l.s4 1983009808
    %v2151 = vunpack.c.0.s8 %v2150
    %v2152 = vlaneseq
    %v2153 = vshrl.u32 %v2152, 7
    %v2154 = vsub.s32 %v2151, %v2153
    %v2155 = vrot.slane %v2148, %v2154
    %v2157 = vunpack.c.l.s4 1983009808
    %v2158 = vunpack.c.0.s8 %v2157
    %v2159 = vlaneseq
    %v2160 = vshrl.u32 %v2159, 7
    %v2161 = vsub.s32 %v2158, %v2160
    %v2162 = vrot.slane %v2123, %v2161
    %v2163 = vcombine.low %v2155, %v2162
    %v2166 = vadd.f32 %v2113, %v2147
    %v2167 = vadd.f32 %v2114, %v2163
    %s2168 = sld [smem:[#allocation5 + $0x3]]
    %v2169 = vstv %s2168
    %v2170 = vadd.f32 %v2166, %v2169
    %v2171 = vadd.f32 %v2167, %v2169
    %v2172 = vmax.f32 %v2170, 0.0
    %v2173 = vmax.f32 %v2171, 0.0
    %v2174 = vld [vmem:[%s4 + $0x930] sm:$0xff]
    %v2175 = vld [vmem:[%s4 + $0x938] sm:$0xff]
    %v2176 = vld [vmem:[%s4 + $0x940] sm:$0xff]
    %v2177 = vld [vmem:[%s4 + $0x948] sm:$0xff]
    %v2178 = vld [vmem:[%s4 + $0x950] sm:$0xff]
    %v2179 = vld [vmem:[%s4 + $0x958] sm:$0xff]
    %v2180 = vld [vmem:[%s4 + $0x960] sm:$0xff]
    %v2181 = vld [vmem:[%s4 + $0x968] sm:$0xff]
    %v2182 = vld [vmem:[%s4 + $0x970] sm:$0xff]
    %v2183 = vld [vmem:[%s4 + $0x978] sm:$0xff]
    %v2184 = vld [vmem:[%s4 + $0x980] sm:$0xff]
    %v2185 = vld [vmem:[%s4 + $0x988] sm:$0xff]
    %v2186 = vld [vmem:[%s4 + $0x990] sm:$0xff]
    %v2187 = vld [vmem:[%s4 + $0x998] sm:$0xff]
    %v2188 = vld [vmem:[%s4 + $0x9a0] sm:$0xff]
    %v2189 = vld [vmem:[%s4 + $0x9a8] sm:$0xff]
    %v2190 = vld [vmem:[%s4 + $0x9b0] sm:$0xff]
    %v2191 = vld [vmem:[%s4 + $0x9b8] sm:$0xff]
    %v2192 = vld [vmem:[%s4 + $0x9c0] sm:$0xff]
    %v2193 = vld [vmem:[%s4 + $0x9c8] sm:$0xff]
    %v2194 = vld [vmem:[%s4 + $0x9d0] sm:$0xff]
    %v2195 = vld [vmem:[%s4 + $0x9d8] sm:$0xff]
    %v2196 = vld [vmem:[%s4 + $0x9e0] sm:$0xff]
    %v2197 = vld [vmem:[%s4 + $0x9e8] sm:$0xff]
    %v2198 = vld [vmem:[%s4 + $0x9f0] sm:$0xff]
    %v2199 = vld [vmem:[%s4 + $0x9f8] sm:$0xff]
    %v2200 = vld [vmem:[%s4 + $0xa00] sm:$0xff]
    %v2201 = vld [vmem:[%s4 + $0xa08] sm:$0xff]
    %v2202 = vld [vmem:[%s4 + $0xa10] sm:$0xff]
    %v2203 = vld [vmem:[%s4 + $0xa18] sm:$0xff]
    %v2204 = vld [vmem:[%s4 + $0xa20] sm:$0xff]
    %v2205 = vld [vmem:[%s4 + $0xa28] sm:$0xff]
    %v2206 = vld [vmem:[%s4 + $0xa30] sm:$0xff]
    %v2207 = vld [vmem:[%s4 + $0xa38] sm:$0xff]
    %v2208 = vld [vmem:[%s4 + $0xa40] sm:$0xff]
    %v2209 = vld [vmem:[%s4 + $0xa48] sm:$0xff]
    %v2210 = vld [vmem:[%s4 + $0xa50] sm:$0xff]
    %v2211 = vld [vmem:[%s4 + $0xa58] sm:$0xff]
    %v2212 = vld [vmem:[%s4 + $0xa60] sm:$0xff]
    %v2213 = vld [vmem:[%s4 + $0xa68] sm:$0xff]
    %v2214 = vld [vmem:[%s4 + $0xa70] sm:$0xff]
    %v2215 = vld [vmem:[%s4 + $0xa78] sm:$0xff]
    %v2216 = vld [vmem:[%s4 + $0xa80] sm:$0xff]
    %v2217 = vld [vmem:[%s4 + $0xa88] sm:$0xff]
    %v2218 = vld [vmem:[%s4 + $0xa90] sm:$0xff]
    %v2219 = vld [vmem:[%s4 + $0xa98] sm:$0xff]
    %v2220 = vld [vmem:[%s4 + $0xaa0] sm:$0xff]
    %v2221 = vld [vmem:[%s4 + $0xaa8] sm:$0xff]
    %v2222 = vld [vmem:[%s4 + $0xab0] sm:$0xff]
    %v2223 = vld [vmem:[%s4 + $0xab8] sm:$0xff]
    %v2224 = vld [vmem:[%s4 + $0xac0] sm:$0xff]
    %v2225 = vld [vmem:[%s4 + $0xac8] sm:$0xff]
    %v2226 = vld [vmem:[%s4 + $0xad0] sm:$0xff]
    %v2227 = vld [vmem:[%s4 + $0xad8] sm:$0xff]
    %v2228 = vld [vmem:[%s4 + $0xae0] sm:$0xff]
    %v2229 = vld [vmem:[%s4 + $0xae8] sm:$0xff]
    %v2230 = vld [vmem:[%s4 + $0xaf0] sm:$0xff]
    %v2231 = vld [vmem:[%s4 + $0xaf8] sm:$0xff]
    %v2232 = vld [vmem:[%s4 + $0xb00] sm:$0xff]
    %v2233 = vld [vmem:[%s4 + $0xb08] sm:$0xff]
    %v2234 = vld [vmem:[%s4 + $0xb10] sm:$0xff]
    %v2235 = vld [vmem:[%s4 + $0xb18] sm:$0xff]
    %v2236 = vld [vmem:[%s4 + $0xb20] sm:$0xff]
    %v2237 = vld [vmem:[%s4 + $0xb28] sm:$0xff]
    %v2238 = vld [vmem:[%s4 + $0xb30] sm:$0xff]
    %v2239 = vld [vmem:[%s4 + $0xb38] sm:$0xff]
    %v2240 = vld [vmem:[%s4 + $0xb40] sm:$0xff]
    %v2241 = vld [vmem:[%s4 + $0xb48] sm:$0xff]
    %v2242 = vld [vmem:[%s4 + $0xb50] sm:$0xff]
    %v2243 = vld [vmem:[%s4 + $0xb58] sm:$0xff]
    %v2244 = vld [vmem:[%s4 + $0xb60] sm:$0xff]
    %v2245 = vld [vmem:[%s4 + $0xb68] sm:$0xff]
    %v2246 = vld [vmem:[%s4 + $0xb70] sm:$0xff]
    %v2247 = vld [vmem:[%s4 + $0xb78] sm:$0xff]
    %v2248 = vld [vmem:[%s4 + $0xb80] sm:$0xff]
    %v2249 = vld [vmem:[%s4 + $0xb88] sm:$0xff]
    %v2250 = vld [vmem:[%s4 + $0xb90] sm:$0xff]
    %v2251 = vld [vmem:[%s4 + $0xb98] sm:$0xff]
    %v2252 = vld [vmem:[%s4 + $0xba0] sm:$0xff]
    %v2253 = vld [vmem:[%s4 + $0xba8] sm:$0xff]
    %v2254 = vld [vmem:[%s4 + $0xbb0] sm:$0xff]
    %v2255 = vld [vmem:[%s4 + $0xbb8] sm:$0xff]
    %v2256 = vld [vmem:[%s4 + $0xbc0] sm:$0xff]
    %v2257 = vld [vmem:[%s4 + $0xbc8] sm:$0xff]
    %v2258 = vld [vmem:[%s4 + $0xbd0] sm:$0xff]
    %v2259 = vld [vmem:[%s4 + $0xbd8] sm:$0xff]
    %v2260 = vld [vmem:[%s4 + $0xbe0] sm:$0xff]
    %v2261 = vld [vmem:[%s4 + $0xbe8] sm:$0xff]
    %v2262 = vld [vmem:[%s4 + $0xbf0] sm:$0xff]
    %v2263 = vld [vmem:[%s4 + $0xbf8] sm:$0xff]
    %v2264 = vld [vmem:[%s4 + $0xc00] sm:$0xff]
    %v2265 = vld [vmem:[%s4 + $0xc08] sm:$0xff]
    %v2266 = vld [vmem:[%s4 + $0xc10] sm:$0xff]
    %v2267 = vld [vmem:[%s4 + $0xc18] sm:$0xff]
    %v2268 = vld [vmem:[%s4 + $0xc20] sm:$0xff]
    %v2269 = vld [vmem:[%s4 + $0xc28] sm:$0xff]
    %v2270 = vld [vmem:[%s4 + $0xc30] sm:$0xff]
    %v2271 = vld [vmem:[%s4 + $0xc38] sm:$0xff]
    %v2274 = vcombine.high %v2172, %v2172
    %v2276 = vunpack.c.l.s4 1983009808
    %v2277 = vunpack.c.0.s8 %v2276
    %v2278 = vlaneseq
    %v2279 = vshrl.u32 %v2278, 7
    %v2280 = vsub.s32 %v2277, %v2279
    %v2281 = vrot.slane %v2172, %v2280
    %v2283 = vunpack.c.l.s4 1983009808
    %v2284 = vunpack.c.0.s8 %v2283
    %v2285 = vlaneseq
    %v2286 = vshrl.u32 %v2285, 7
    %v2287 = vsub.s32 %v2284, %v2286
    %v2288 = vrot.slane %v2274, %v2287
    %v2289 = vcombine.high %v2281, %v2281
    %v2290 = vcombine.high %v2288, %v2288
    %v2291 = vcombine.high %v2173, %v2173
    %v2293 = vunpack.c.l.s4 1983009808
    %v2294 = vunpack.c.0.s8 %v2293
    %v2295 = vlaneseq
    %v2296 = vshrl.u32 %v2295, 7
    %v2297 = vsub.s32 %v2294, %v2296
    %v2298 = vrot.slane %v2173, %v2297
    %v2300 = vunpack.c.l.s4 1983009808
    %v2301 = vunpack.c.0.s8 %v2300
    %v2302 = vlaneseq
    %v2303 = vshrl.u32 %v2302, 7
    %v2304 = vsub.s32 %v2301, %v2303
    %v2305 = vrot.slane %v2291, %v2304
    %v2306 = vcombine.high %v2298, %v2298
    %v2313 = vsel %vm808, %v2305, 0
    %2315 = vmatprep.subr.mxu0 0.0
    %2316 = vmatpush1.msra.mxu0 %v2174
    %2317 = vmatprep.subr.mxu0 0.0
    %2318 = vmatpush1.msra.mxu0 %v2175
    %2319 = vmatprep.subr.mxu0 0.0
    %2320 = vmatpush1.msra.mxu0 %v2176
    %2321 = vmatprep.subr.mxu0 0.0
    %2322 = vmatpush1.msra.mxu0 %v2177
    %2323 = vmatprep.subr.mxu0 0.0
    %2324 = vmatpush1.msra.mxu0 %v2178
    %2325 = vmatprep.subr.mxu0 0.0
    %2326 = vmatpush1.msra.mxu0 %v2179
    %2327 = vmatprep.subr.mxu0 0.0
    %2328 = vmatpush1.msra.mxu0 %v2180
    %2329 = vmatprep.subr.mxu0 0.0
    %2330 = vmatpush1.msra.mxu0 %v2181
    %2331 = vmatprep.subr.mxu0 0.0
    %2332 = vmatpush1.msra.mxu0 %v2182
    %2333 = vmatprep.subr.mxu0 0.0
    %2334 = vmatpush1.msra.mxu0 %v2183
    %2335 = vmatprep.subr.mxu0 0.0
    %2336 = vmatpush1.msra.mxu0 %v2184
    %2337 = vmatprep.subr.mxu0 0.0
    %2338 = vmatpush1.msra.mxu0 %v2185
    %2339 = vmatprep.subr.mxu0 0.0
    %2340 = vmatpush1.msra.mxu0 %v2186
    %2341 = vmatprep.subr.mxu0 0.0
    %2342 = vmatpush1.msra.mxu0 %v2187
    %2343 = vmatprep.subr.mxu0 0.0
    %2344 = vmatpush1.msra.mxu0 %v2188
    %2345 = vmatprep.subr.mxu0 0.0
    %2346 = vmatpush1.msra.mxu0 %v2189
    %2347 = vmatprep.subr.mxu0 0.0
    %2348 = vmatpush1.msra.mxu0 %v2190
    %2349 = vmatprep.subr.mxu0 0.0
    %2350 = vmatpush1.msra.mxu0 %v2191
    %2351 = vmatprep.subr.mxu0 0.0
    %2352 = vmatpush1.msra.mxu0 %v2192
    %2353 = vmatprep.subr.mxu0 0.0
    %2354 = vmatpush1.msra.mxu0 %v2193
    %2355 = vmatprep.subr.mxu0 0.0
    %2356 = vmatpush1.msra.mxu0 %v2194
    %2357 = vmatprep.subr.mxu0 0.0
    %2358 = vmatpush1.msra.mxu0 %v2195
    %2359 = vmatprep.subr.mxu0 0.0
    %2360 = vmatpush1.msra.mxu0 %v2196
    %2361 = vmatprep.subr.mxu0 0.0
    %2362 = vmatpush1.msra.mxu0 %v2197
    %2363 = vmatprep.subr.mxu0 0.0
    %2364 = vmatpush1.msra.mxu0 %v2198
    %2365 = vmatprep.subr.mxu0 0.0
    %2366 = vmatpush1.msra.mxu0 %v2199
    %2367 = vmatprep.subr.mxu0 0.0
    %2368 = vmatpush1.msra.mxu0 %v2200
    %2369 = vmatprep.subr.mxu0 0.0
    %2370 = vmatpush1.msra.mxu0 %v2201
    %2371 = vmatprep.subr.mxu0 0.0
    %2372 = vmatpush1.msra.mxu0 %v2202
    %2373 = vmatprep.subr.mxu0 0.0
    %2374 = vmatpush1.msra.mxu0 %v2203
    %2375 = vmatprep.subr.mxu0 0.0
    %2376 = vmatpush1.msra.mxu0 %v2204
    %2377 = vmatprep.subr.mxu0 0.0
    %2378 = vmatpush1.msra.mxu0 %v2205
    %2379 = vmatprep.mubr.f32.mxu0 %v2289
    %2380 = vmatmul.mubr.f32.gmra.mrb[0].mxu0 %v2281
    %v2381 = vpop.f32.mrb[0].mxu0
    %v2382 = vadd.f32 0.0, %v2381
    %v2383 = vpop.f32.mrb[0].mxu0
    %2384 = vdwg.mxu0
    %2385 = vmatprep.subr.mxu0 0.0
    %2386 = vmatpush1.msra.mxu0 %v2206
    %2387 = vmatprep.subr.mxu0 0.0
    %2388 = vmatpush1.msra.mxu0 %v2207
    %2389 = vmatprep.subr.mxu0 0.0
    %2390 = vmatpush1.msra.mxu0 %v2208
    %2391 = vmatprep.subr.mxu0 0.0
    %2392 = vmatpush1.msra.mxu0 %v2209
    %2393 = vmatprep.subr.mxu0 0.0
    %2394 = vmatpush1.msra.mxu0 %v2210
    %2395 = vmatprep.subr.mxu0 0.0
    %2396 = vmatpush1.msra.mxu0 %v2211
    %2397 = vmatprep.subr.mxu0 0.0
    %2398 = vmatpush1.msra.mxu0 %v2212
    %2399 = vmatprep.subr.mxu0 0.0
    %2400 = vmatpush1.msra.mxu0 %v2213
    %2401 = vmatprep.subr.mxu0 0.0
    %2402 = vmatpush1.msra.mxu0 %v2214
    %2403 = vmatprep.subr.mxu0 0.0
    %2404 = vmatpush1.msra.mxu0 %v2215
    %2405 = vmatprep.subr.mxu0 0.0
    %2406 = vmatpush1.msra.mxu0 %v2216
    %2407 = vmatprep.subr.mxu0 0.0
    %2408 = vmatpush1.msra.mxu0 %v2217
    %2409 = vmatprep.subr.mxu0 0.0
    %2410 = vmatpush1.msra.mxu0 %v2218
    %2411 = vmatprep.subr.mxu0 0.0
    %2412 = vmatpush1.msra.mxu0 %v2219
    %2413 = vmatprep.subr.mxu0 0.0
    %2414 = vmatpush1.msra.mxu0 %v2220
    %2415 = vmatprep.subr.mxu0 0.0
    %2416 = vmatpush1.msra.mxu0 %v2221
    %2417 = vmatprep.subr.mxu0 0.0
    %2418 = vmatpush1.msra.mxu0 %v2222
    %2419 = vmatprep.subr.mxu0 0.0
    %2420 = vmatpush1.msra.mxu0 %v2223
    %2421 = vmatprep.subr.mxu0 0.0
    %2422 = vmatpush1.msra.mxu0 %v2224
    %2423 = vmatprep.subr.mxu0 0.0
    %2424 = vmatpush1.msra.mxu0 %v2225
    %2425 = vmatprep.subr.mxu0 0.0
    %2426 = vmatpush1.msra.mxu0 %v2226
    %2427 = vmatprep.subr.mxu0 0.0
    %2428 = vmatpush1.msra.mxu0 %v2227
    %2429 = vmatprep.subr.mxu0 0.0
    %2430 = vmatpush1.msra.mxu0 %v2228
    %2431 = vmatprep.subr.mxu0 0.0
    %2432 = vmatpush1.msra.mxu0 %v2229
    %2433 = vmatprep.subr.mxu0 0.0
    %2434 = vmatpush1.msra.mxu0 %v2230
    %2435 = vmatprep.subr.mxu0 0.0
    %2436 = vmatpush1.msra.mxu0 %v2231
    %2437 = vmatprep.subr.mxu0 0.0
    %2438 = vmatpush1.msra.mxu0 %v2232
    %2439 = vmatprep.subr.mxu0 0.0
    %2440 = vmatpush1.msra.mxu0 %v2233
    %2441 = vmatprep.subr.mxu0 0.0
    %2442 = vmatpush1.msra.mxu0 %v2234
    %2443 = vmatprep.subr.mxu0 0.0
    %2444 = vmatpush1.msra.mxu0 %v2235
    %2445 = vmatprep.subr.mxu0 0.0
    %2446 = vmatpush1.msra.mxu0 %v2236
    %2447 = vmatprep.subr.mxu0 0.0
    %2448 = vmatpush1.msra.mxu0 %v2237
    %2449 = vmatprep.mubr.f32.mxu0 %v2290
    %2450 = vmatmul.mubr.f32.gmra.mrb[0].mxu0 %v2288
    %v2451 = vpop.f32.mrb[0].mxu0
    %v2452 = vadd.f32 %v2382, %v2451
    %v2453 = vpop.f32.mrb[0].mxu0
    %2454 = vdwg.mxu0
    %2455 = vmatprep.subr.mxu0 0.0
    %2456 = vmatpush1.msra.mxu0 %v2238
    %2457 = vmatprep.subr.mxu0 0.0
    %2458 = vmatpush1.msra.mxu0 %v2239
    %2459 = vmatprep.subr.mxu0 0.0
    %2460 = vmatpush1.msra.mxu0 %v2240
    %2461 = vmatprep.subr.mxu0 0.0
    %2462 = vmatpush1.msra.mxu0 %v2241
    %2463 = vmatprep.subr.mxu0 0.0
    %2464 = vmatpush1.msra.mxu0 %v2242
    %2465 = vmatprep.subr.mxu0 0.0
    %2466 = vmatpush1.msra.mxu0 %v2243
    %2467 = vmatprep.subr.mxu0 0.0
    %2468 = vmatpush1.msra.mxu0 %v2244
    %2469 = vmatprep.subr.mxu0 0.0
    %2470 = vmatpush1.msra.mxu0 %v2245
    %2471 = vmatprep.subr.mxu0 0.0
    %2472 = vmatpush1.msra.mxu0 %v2246
    %2473 = vmatprep.subr.mxu0 0.0
    %2474 = vmatpush1.msra.mxu0 %v2247
    %2475 = vmatprep.subr.mxu0 0.0
    %2476 = vmatpush1.msra.mxu0 %v2248
    %2477 = vmatprep.subr.mxu0 0.0
    %2478 = vmatpush1.msra.mxu0 %v2249
    %2479 = vmatprep.subr.mxu0 0.0
    %2480 = vmatpush1.msra.mxu0 %v2250
    %2481 = vmatprep.subr.mxu0 0.0
    %2482 = vmatpush1.msra.mxu0 %v2251
    %2483 = vmatprep.subr.mxu0 0.0
    %2484 = vmatpush1.msra.mxu0 %v2252
    %2485 = vmatprep.subr.mxu0 0.0
    %2486 = vmatpush1.msra.mxu0 %v2253
    %2487 = vmatprep.subr.mxu0 0.0
    %2488 = vmatpush1.msra.mxu0 %v2254
    %2489 = vmatprep.subr.mxu0 0.0
    %2490 = vmatpush1.msra.mxu0 %v2255
    %2491 = vmatprep.subr.mxu0 0.0
    %2492 = vmatpush1.msra.mxu0 %v2256
    %2493 = vmatprep.subr.mxu0 0.0
    %2494 = vmatpush1.msra.mxu0 %v2257
    %2495 = vmatprep.subr.mxu0 0.0
    %2496 = vmatpush1.msra.mxu0 %v2258
    %2497 = vmatprep.subr.mxu0 0.0
    %2498 = vmatpush1.msra.mxu0 %v2259
    %2499 = vmatprep.subr.mxu0 0.0
    %2500 = vmatpush1.msra.mxu0 %v2260
    %2501 = vmatprep.subr.mxu0 0.0
    %2502 = vmatpush1.msra.mxu0 %v2261
    %2503 = vmatprep.subr.mxu0 0.0
    %2504 = vmatpush1.msra.mxu0 %v2262
    %2505 = vmatprep.subr.mxu0 0.0
    %2506 = vmatpush1.msra.mxu0 %v2263
    %2507 = vmatprep.subr.mxu0 0.0
    %2508 = vmatpush1.msra.mxu0 %v2264
    %2509 = vmatprep.subr.mxu0 0.0
    %2510 = vmatpush1.msra.mxu0 %v2265
    %2511 = vmatprep.subr.mxu0 0.0
    %2512 = vmatpush1.msra.mxu0 %v2266
    %2513 = vmatprep.subr.mxu0 0.0
    %2514 = vmatpush1.msra.mxu0 %v2267
    %2515 = vmatprep.subr.mxu0 0.0
    %2516 = vmatpush1.msra.mxu0 %v2268
    %2517 = vmatprep.subr.mxu0 0.0
    %2518 = vmatpush1.msra.mxu0 %v2269
    %2519 = vmatprep.mubr.f32.mxu0 %v2306
    %2520 = vmatmul.mubr.f32.gmra.mrb[0].mxu0 %v2298
    %v2521 = vpop.f32.mrb[0].mxu0
    %v2522 = vadd.f32 %v2452, %v2521
    %v2523 = vpop.f32.mrb[0].mxu0
    %2524 = vdwg.mxu0
    %2525 = vmatprep.subr.mxu0 0.0
    %2526 = vmatpush1.msra.mxu0 %v2270
    %2527 = vmatprep.subr.mxu0 0.0
    %2528 = vmatpush1.msra.mxu0 %v2271
    %2529 = vmatprep.subr.mxu0 0.0
    %2530 = vmatpush1.msra.mxu0 0.0
    %2531 = vmatprep.subr.mxu0 0.0
    %2532 = vmatpush1.msra.mxu0 0.0
    %2533 = vmatprep.subr.mxu0 0.0
    %2534 = vmatpush1.msra.mxu0 0.0
    %2535 = vmatprep.subr.mxu0 0.0
    %2536 = vmatpush1.msra.mxu0 0.0
    %2537 = vmatprep.subr.mxu0 0.0
    %2538 = vmatpush1.msra.mxu0 0.0
    %2539 = vmatprep.subr.mxu0 0.0
    %2540 = vmatpush1.msra.mxu0 0.0
    %2541 = vmatprep.subr.mxu0 0.0
    %2542 = vmatpush1.msra.mxu0 0.0
    %2543 = vmatprep.subr.mxu0 0.0
    %2544 = vmatpush1.msra.mxu0 0.0
    %2545 = vmatprep.subr.mxu0 0.0
    %2546 = vmatpush1.msra.mxu0 0.0
    %2547 = vmatprep.subr.mxu0 0.0
    %2548 = vmatpush1.msra.mxu0 0.0
    %2549 = vmatprep.subr.mxu0 0.0
    %2550 = vmatpush1.msra.mxu0 0.0
    %2551 = vmatprep.subr.mxu0 0.0
    %2552 = vmatpush1.msra.mxu0 0.0
    %2553 = vmatprep.subr.mxu0 0.0
    %2554 = vmatpush1.msra.mxu0 0.0
    %2555 = vmatprep.subr.mxu0 0.0
    %2556 = vmatpush1.msra.mxu0 0.0
    %2557 = vmatprep.subr.mxu0 0.0
    %2558 = vmatpush1.msra.mxu0 0.0
    %2559 = vmatprep.subr.mxu0 0.0
    %2560 = vmatpush1.msra.mxu0 0.0
    %2561 = vmatprep.subr.mxu0 0.0
    %2562 = vmatpush1.msra.mxu0 0.0
    %2563 = vmatprep.subr.mxu0 0.0
    %2564 = vmatpush1.msra.mxu0 0.0
    %2565 = vmatprep.subr.mxu0 0.0
    %2566 = vmatpush1.msra.mxu0 0.0
    %2567 = vmatprep.subr.mxu0 0.0
    %2568 = vmatpush1.msra.mxu0 0.0
    %2569 = vmatprep.subr.mxu0 0.0
    %2570 = vmatpush1.msra.mxu0 0.0
    %2571 = vmatprep.subr.mxu0 0.0
    %2572 = vmatpush1.msra.mxu0 0.0
    %2573 = vmatprep.subr.mxu0 0.0
    %2574 = vmatpush1.msra.mxu0 0.0
    %2575 = vmatprep.subr.mxu0 0.0
    %2576 = vmatpush1.msra.mxu0 0.0
    %2577 = vmatprep.subr.mxu0 0.0
    %2578 = vmatpush1.msra.mxu0 0.0
    %2579 = vmatprep.subr.mxu0 0.0
    %2580 = vmatpush1.msra.mxu0 0.0
    %2581 = vmatprep.subr.mxu0 0.0
    %2582 = vmatpush1.msra.mxu0 0.0
    %2583 = vmatprep.subr.mxu0 0.0
    %2584 = vmatpush1.msra.mxu0 0.0
    %2585 = vmatprep.subr.mxu0 0.0
    %2586 = vmatpush1.msra.mxu0 0.0
    %2587 = vmatprep.subr.mxu0 0.0
    %2588 = vmatpush1.msra.mxu0 0.0
    %2589 = vmatprep.mubr.f32.mxu0 0.0
    %2590 = vmatmul.mubr.f32.gmra.mrb[0].mxu0 %v2313
    %v2591 = vpop.f32.mrb[0].mxu0
    %v2592 = vadd.f32 %v2522, %v2591
    %v2593 = vpop.f32.mrb[0].mxu0
    %2594 = vdwg.mxu0
    %v2595 = vadd.f32 %v2004, %v2592
    %s2596 = sld [smem:[#allocation2 + $0x200]]
    %v2597 = vstv %s2596
    %v2598 = vmul.f32 %v57, %v2597
    %v2599 = vmul.f32 %v58, %v2597
    %s2600 = sld [smem:[#allocation2 + $0x201]]
    %v2601 = vstv %s2600
    %v2602 = vmul.f32 %v161, %v2601
    %v2603 = vmul.f32 %v162, %v2601
    %v2604 = vmul.f32 %v163, %v2601
    %v2605 = vmul.f32 %v164, %v2601
    %v2606 = vmul.f32 %v165, %v2601
    %v2607 = vmul.f32 %v166, %v2601
    %v2608 = vmul.f32 %v167, %v2601
    %v2616 = vcombine.low %v2602, %v2603
    %v2617 = vcombine.low %v2604, %v2605
    %v2619 = vunpack.c.l.s4 1983009808
    %v2620 = vunpack.c.0.s8 %v2619
    %v2621 = vlaneseq
    %v2622 = vshrl.u32 %v2621, 7
    %v2623 = vsub.s32 %v2620, %v2622
    %v2624 = vrot.slane %v2616, %v2623
    %v2626 = vunpack.c.l.s4 1983009808
    %v2627 = vunpack.c.0.s8 %v2626
    %v2628 = vlaneseq
    %v2629 = vshrl.u32 %v2628, 7
    %v2630 = vsub.s32 %v2627, %v2629
    %v2631 = vrot.slane %v2617, %v2630
    %v2632 = vcombine.low %v2624, %v2631
    %v2633 = vcombine.low %v2606, %v2607
    %v2635 = vunpack.c.l.s4 1983009808
    %v2636 = vunpack.c.0.s8 %v2635
    %v2637 = vlaneseq
    %v2638 = vshrl.u32 %v2637, 7
    %v2639 = vsub.s32 %v2636, %v2638
    %v2640 = vrot.slane %v2633, %v2639
    %v2642 = vunpack.c.l.s4 1983009808
    %v2643 = vunpack.c.0.s8 %v2642
    %v2644 = vlaneseq
    %v2645 = vshrl.u32 %v2644, 7
    %v2646 = vsub.s32 %v2643, %v2645
    %v2647 = vrot.slane %v2608, %v2646
    %v2648 = vcombine.low %v2640, %v2647
    %v2651 = vadd.f32 %v2598, %v2632
    %v2652 = vadd.f32 %v2599, %v2648
    %s2653 = sld [smem:[#allocation2 + $0x202]]
    %v2654 = vstv %s2653
    %v2655 = vmul.f32 %v183, %v2654
    %v2656 = vmul.f32 %v184, %v2654
    %v2657 = vmul.f32 %v185, %v2654
    %v2658 = vmul.f32 %v186, %v2654
    %v2659 = vmul.f32 %v187, %v2654
    %v2660 = vmul.f32 %v196, %v2654
    %v2661 = vmul.f32 %v2654, 0.0
    %v2669 = vcombine.low %v2655, %v2656
    %v2670 = vcombine.low %v2657, %v2658
    %v2672 = vunpack.c.l.s4 1983009808
    %v2673 = vunpack.c.0.s8 %v2672
    %v2674 = vlaneseq
    %v2675 = vshrl.u32 %v2674, 7
    %v2676 = vsub.s32 %v2673, %v2675
    %v2677 = vrot.slane %v2669, %v2676
    %v2679 = vunpack.c.l.s4 1983009808
    %v2680 = vunpack.c.0.s8 %v2679
    %v2681 = vlaneseq
    %v2682 = vshrl.u32 %v2681, 7
    %v2683 = vsub.s32 %v2680, %v2682
    %v2684 = vrot.slane %v2670, %v2683
    %v2685 = vcombine.low %v2677, %v2684
    %v2686 = vcombine.low %v2659, %v2660
    %v2688 = vunpack.c.l.s4 1983009808
    %v2689 = vunpack.c.0.s8 %v2688
    %v2690 = vlaneseq
    %v2691 = vshrl.u32 %v2690, 7
    %v2692 = vsub.s32 %v2689, %v2691
    %v2693 = vrot.slane %v2686, %v2692
    %v2695 = vunpack.c.l.s4 1983009808
    %v2696 = vunpack.c.0.s8 %v2695
    %v2697 = vlaneseq
    %v2698 = vshrl.u32 %v2697, 7
    %v2699 = vsub.s32 %v2696, %v2698
    %v2700 = vrot.slane %v2661, %v2699
    %v2701 = vcombine.low %v2693, %v2700
    %v2704 = vadd.f32 %v2651, %v2685
    %v2705 = vadd.f32 %v2652, %v2701
    %s2706 = sld [smem:[#allocation2 + $0x203]]
    %v2707 = vstv %s2706
    %v2708 = vmul.f32 %v226, %v2707
    %v2709 = vmul.f32 %v227, %v2707
    %v2710 = vmul.f32 %v228, %v2707
    %v2711 = vmul.f32 %v229, %v2707
    %v2712 = vmul.f32 %v230, %v2707
    %v2713 = vmul.f32 %v231, %v2707
    %v2714 = vmul.f32 %v232, %v2707
    %v2722 = vcombine.low %v2708, %v2709
    %v2723 = vcombine.low %v2710, %v2711
    %v2725 = vunpack.c.l.s4 1983009808
    %v2726 = vunpack.c.0.s8 %v2725
    %v2727 = vlaneseq
    %v2728 = vshrl.u32 %v2727, 7
    %v2729 = vsub.s32 %v2726, %v2728
    %v2730 = vrot.slane %v2722, %v2729
    %v2732 = vunpack.c.l.s4 1983009808
    %v2733 = vunpack.c.0.s8 %v2732
    %v2734 = vlaneseq
    %v2735 = vshrl.u32 %v2734, 7
    %v2736 = vsub.s32 %v2733, %v2735
    %v2737 = vrot.slane %v2723, %v2736
    %v2738 = vcombine.low %v2730, %v2737
    %v2739 = vcombine.low %v2712, %v2713
    %v2741 = vunpack.c.l.s4 1983009808
    %v2742 = vunpack.c.0.s8 %v2741
    %v2743 = vlaneseq
    %v2744 = vshrl.u32 %v2743, 7
    %v2745 = vsub.s32 %v2742, %v2744
    %v2746 = vrot.slane %v2739, %v2745
    %v2748 = vunpack.c.l.s4 1983009808
    %v2749 = vunpack.c.0.s8 %v2748
    %v2750 = vlaneseq
    %v2751 = vshrl.u32 %v2750, 7
    %v2752 = vsub.s32 %v2749, %v2751
    %v2753 = vrot.slane %v2714, %v2752
    %v2754 = vcombine.low %v2746, %v2753
    %v2757 = vadd.f32 %v2704, %v2738
    %v2758 = vadd.f32 %v2705, %v2754
    %s2759 = sld [smem:[#allocation5 + $0x4]]
    %v2760 = vstv %s2759
    %v2761 = vadd.f32 %v2757, %v2760
    %v2762 = vadd.f32 %v2758, %v2760
    %v2763 = vmax.f32 %v2761, 0.0
    %v2764 = vmax.f32 %v2762, 0.0
    %v2765 = vld [vmem:[%s4 + $0xc40] sm:$0xff]
    %v2766 = vld [vmem:[%s4 + $0xc48] sm:$0xff]
    %v2767 = vld [vmem:[%s4 + $0xc50] sm:$0xff]
    %v2768 = vld [vmem:[%s4 + $0xc58] sm:$0xff]
    %v2769 = vld [vmem:[%s4 + $0xc60] sm:$0xff]
    %v2770 = vld [vmem:[%s4 + $0xc68] sm:$0xff]
    %v2771 = vld [vmem:[%s4 + $0xc70] sm:$0xff]
    %v2772 = vld [vmem:[%s4 + $0xc78] sm:$0xff]
    %v2773 = vld [vmem:[%s4 + $0xc80] sm:$0xff]
    %v2774 = vld [vmem:[%s4 + $0xc88] sm:$0xff]
    %v2775 = vld [vmem:[%s4 + $0xc90] sm:$0xff]
    %v2776 = vld [vmem:[%s4 + $0xc98] sm:$0xff]
    %v2777 = vld [vmem:[%s4 + $0xca0] sm:$0xff]
    %v2778 = vld [vmem:[%s4 + $0xca8] sm:$0xff]
    %v2779 = vld [vmem:[%s4 + $0xcb0] sm:$0xff]
    %v2780 = vld [vmem:[%s4 + $0xcb8] sm:$0xff]
    %v2781 = vld [vmem:[%s4 + $0xcc0] sm:$0xff]
    %v2782 = vld [vmem:[%s4 + $0xcc8] sm:$0xff]
    %v2783 = vld [vmem:[%s4 + $0xcd0] sm:$0xff]
    %v2784 = vld [vmem:[%s4 + $0xcd8] sm:$0xff]
    %v2785 = vld [vmem:[%s4 + $0xce0] sm:$0xff]
    %v2786 = vld [vmem:[%s4 + $0xce8] sm:$0xff]
    %v2787 = vld [vmem:[%s4 + $0xcf0] sm:$0xff]
    %v2788 = vld [vmem:[%s4 + $0xcf8] sm:$0xff]
    %v2789 = vld [vmem:[%s4 + $0xd00] sm:$0xff]
    %v2790 = vld [vmem:[%s4 + $0xd08] sm:$0xff]
    %v2791 = vld [vmem:[%s4 + $0xd10] sm:$0xff]
    %v2792 = vld [vmem:[%s4 + $0xd18] sm:$0xff]
    %v2793 = vld [vmem:[%s4 + $0xd20] sm:$0xff]
    %v2794 = vld [vmem:[%s4 + $0xd28] sm:$0xff]
    %v2795 = vld [vmem:[%s4 + $0xd30] sm:$0xff]
    %v2796 = vld [vmem:[%s4 + $0xd38] sm:$0xff]
    %v2797 = vld [vmem:[%s4 + $0xd40] sm:$0xff]
    %v2798 = vld [vmem:[%s4 + $0xd48] sm:$0xff]
    %v2799 = vld [vmem:[%s4 + $0xd50] sm:$0xff]
    %v2800 = vld [vmem:[%s4 + $0xd58] sm:$0xff]
    %v2801 = vld [vmem:[%s4 + $0xd60] sm:$0xff]
    %v2802 = vld [vmem:[%s4 + $0xd68] sm:$0xff]
    %v2803 = vld [vmem:[%s4 + $0xd70] sm:$0xff]
    %v2804 = vld [vmem:[%s4 + $0xd78] sm:$0xff]
    %v2805 = vld [vmem:[%s4 + $0xd80] sm:$0xff]
    %v2806 = vld [vmem:[%s4 + $0xd88] sm:$0xff]
    %v2807 = vld [vmem:[%s4 + $0xd90] sm:$0xff]
    %v2808 = vld [vmem:[%s4 + $0xd98] sm:$0xff]
    %v2809 = vld [vmem:[%s4 + $0xda0] sm:$0xff]
    %v2810 = vld [vmem:[%s4 + $0xda8] sm:$0xff]
    %v2811 = vld [vmem:[%s4 + $0xdb0] sm:$0xff]
    %v2812 = vld [vmem:[%s4 + $0xdb8] sm:$0xff]
    %v2813 = vld [vmem:[%s4 + $0xdc0] sm:$0xff]
    %v2814 = vld [vmem:[%s4 + $0xdc8] sm:$0xff]
    %v2815 = vld [vmem:[%s4 + $0xdd0] sm:$0xff]
    %v2816 = vld [vmem:[%s4 + $0xdd8] sm:$0xff]
    %v2817 = vld [vmem:[%s4 + $0xde0] sm:$0xff]
    %v2818 = vld [vmem:[%s4 + $0xde8] sm:$0xff]
    %v2819 = vld [vmem:[%s4 + $0xdf0] sm:$0xff]
    %v2820 = vld [vmem:[%s4 + $0xdf8] sm:$0xff]
    %v2821 = vld [vmem:[%s4 + $0xe00] sm:$0xff]
    %v2822 = vld [vmem:[%s4 + $0xe08] sm:$0xff]
    %v2823 = vld [vmem:[%s4 + $0xe10] sm:$0xff]
    %v2824 = vld [vmem:[%s4 + $0xe18] sm:$0xff]
    %v2825 = vld [vmem:[%s4 + $0xe20] sm:$0xff]
    %v2826 = vld [vmem:[%s4 + $0xe28] sm:$0xff]
    %v2827 = vld [vmem:[%s4 + $0xe30] sm:$0xff]
    %v2828 = vld [vmem:[%s4 + $0xe38] sm:$0xff]
    %v2829 = vld [vmem:[%s4 + $0xe40] sm:$0xff]
    %v2830 = vld [vmem:[%s4 + $0xe48] sm:$0xff]
    %v2831 = vld [vmem:[%s4 + $0xe50] sm:$0xff]
    %v2832 = vld [vmem:[%s4 + $0xe58] sm:$0xff]
    %v2833 = vld [vmem:[%s4 + $0xe60] sm:$0xff]
    %v2834 = vld [vmem:[%s4 + $0xe68] sm:$0xff]
    %v2835 = vld [vmem:[%s4 + $0xe70] sm:$0xff]
    %v2836 = vld [vmem:[%s4 + $0xe78] sm:$0xff]
    %v2837 = vld [vmem:[%s4 + $0xe80] sm:$0xff]
    %v2838 = vld [vmem:[%s4 + $0xe88] sm:$0xff]
    %v2839 = vld [vmem:[%s4 + $0xe90] sm:$0xff]
    %v2840 = vld [vmem:[%s4 + $0xe98] sm:$0xff]
    %v2841 = vld [vmem:[%s4 + $0xea0] sm:$0xff]
    %v2842 = vld [vmem:[%s4 + $0xea8] sm:$0xff]
    %v2843 = vld [vmem:[%s4 + $0xeb0] sm:$0xff]
    %v2844 = vld [vmem:[%s4 + $0xeb8] sm:$0xff]
    %v2845 = vld [vmem:[%s4 + $0xec0] sm:$0xff]
    %v2846 = vld [vmem:[%s4 + $0xec8] sm:$0xff]
    %v2847 = vld [vmem:[%s4 + $0xed0] sm:$0xff]
    %v2848 = vld [vmem:[%s4 + $0xed8] sm:$0xff]
    %v2849 = vld [vmem:[%s4 + $0xee0] sm:$0xff]
    %v2850 = vld [vmem:[%s4 + $0xee8] sm:$0xff]
    %v2851 = vld [vmem:[%s4 + $0xef0] sm:$0xff]
    %v2852 = vld [vmem:[%s4 + $0xef8] sm:$0xff]
    %v2853 = vld [vmem:[%s4 + $0xf00] sm:$0xff]
    %v2854 = vld [vmem:[%s4 + $0xf08] sm:$0xff]
    %v2855 = vld [vmem:[%s4 + $0xf10] sm:$0xff]
    %v2856 = vld [vmem:[%s4 + $0xf18] sm:$0xff]
    %v2857 = vld [vmem:[%s4 + $0xf20] sm:$0xff]
    %v2858 = vld [vmem:[%s4 + $0xf28] sm:$0xff]
    %v2859 = vld [vmem:[%s4 + $0xf30] sm:$0xff]
    %v2860 = vld [vmem:[%s4 + $0xf38] sm:$0xff]
    %v2861 = vld [vmem:[%s4 + $0xf40] sm:$0xff]
    %v2862 = vld [vmem:[%s4 + $0xf48] sm:$0xff]
    %v2865 = vcombine.high %v2763, %v2763
    %v2867 = vunpack.c.l.s4 1983009808
    %v2868 = vunpack.c.0.s8 %v2867
    %v2869 = vlaneseq
    %v2870 = vshrl.u32 %v2869, 7
    %v2871 = vsub.s32 %v2868, %v2870
    %v2872 = vrot.slane %v2763, %v2871
    %v2874 = vunpack.c.l.s4 1983009808
    %v2875 = vunpack.c.0.s8 %v2874
    %v2876 = vlaneseq
    %v2877 = vshrl.u32 %v2876, 7
    %v2878 = vsub.s32 %v2875, %v2877
    %v2879 = vrot.slane %v2865, %v2878
    %v2880 = vcombine.high %v2872, %v2872
    %v2881 = vcombine.high %v2879, %v2879
    %v2882 = vcombine.high %v2764, %v2764
    %v2884 = vunpack.c.l.s4 1983009808
    %v2885 = vunpack.c.0.s8 %v2884
    %v2886 = vlaneseq
    %v2887 = vshrl.u32 %v2886, 7
    %v2888 = vsub.s32 %v2885, %v2887
    %v2889 = vrot.slane %v2764, %v2888
    %v2891 = vunpack.c.l.s4 1983009808
    %v2892 = vunpack.c.0.s8 %v2891
    %v2893 = vlaneseq
    %v2894 = vshrl.u32 %v2893, 7
    %v2895 = vsub.s32 %v2892, %v2894
    %v2896 = vrot.slane %v2882, %v2895
    %v2897 = vcombine.high %v2889, %v2889
    %v2904 = vsel %vm808, %v2896, 0
    %2906 = vmatprep.subr.mxu0 0.0
    %2907 = vmatpush1.msra.mxu0 %v2765
    %2908 = vmatprep.subr.mxu0 0.0
    %2909 = vmatpush1.msra.mxu0 %v2766
    %2910 = vmatprep.subr.mxu0 0.0
    %2911 = vmatpush1.msra.mxu0 %v2767
    %2912 = vmatprep.subr.mxu0 0.0
    %2913 = vmatpush1.msra.mxu0 %v2768
    %2914 = vmatprep.subr.mxu0 0.0
    %2915 = vmatpush1.msra.mxu0 %v2769
    %2916 = vmatprep.subr.mxu0 0.0
    %2917 = vmatpush1.msra.mxu0 %v2770
    %2918 = vmatprep.subr.mxu0 0.0
    %2919 = vmatpush1.msra.mxu0 %v2771
    %2920 = vmatprep.subr.mxu0 0.0
    %2921 = vmatpush1.msra.mxu0 %v2772
    %2922 = vmatprep.subr.mxu0 0.0
    %2923 = vmatpush1.msra.mxu0 %v2773
    %2924 = vmatprep.subr.mxu0 0.0
    %2925 = vmatpush1.msra.mxu0 %v2774
    %2926 = vmatprep.subr.mxu0 0.0
    %2927 = vmatpush1.msra.mxu0 %v2775
    %2928 = vmatprep.subr.mxu0 0.0
    %2929 = vmatpush1.msra.mxu0 %v2776
    %2930 = vmatprep.subr.mxu0 0.0
    %2931 = vmatpush1.msra.mxu0 %v2777
    %2932 = vmatprep.subr.mxu0 0.0
    %2933 = vmatpush1.msra.mxu0 %v2778
    %2934 = vmatprep.subr.mxu0 0.0
    %2935 = vmatpush1.msra.mxu0 %v2779
    %2936 = vmatprep.subr.mxu0 0.0
    %2937 = vmatpush1.msra.mxu0 %v2780
    %2938 = vmatprep.subr.mxu0 0.0
    %2939 = vmatpush1.msra.mxu0 %v2781
    %2940 = vmatprep.subr.mxu0 0.0
    %2941 = vmatpush1.msra.mxu0 %v2782
    %2942 = vmatprep.subr.mxu0 0.0
    %2943 = vmatpush1.msra.mxu0 %v2783
    %2944 = vmatprep.subr.mxu0 0.0
    %2945 = vmatpush1.msra.mxu0 %v2784
    %2946 = vmatprep.subr.mxu0 0.0
    %2947 = vmatpush1.msra.mxu0 %v2785
    %2948 = vmatprep.subr.mxu0 0.0
    %2949 = vmatpush1.msra.mxu0 %v2786
    %2950 = vmatprep.subr.mxu0 0.0
    %2951 = vmatpush1.msra.mxu0 %v2787
    %2952 = vmatprep.subr.mxu0 0.0
    %2953 = vmatpush1.msra.mxu0 %v2788
    %2954 = vmatprep.subr.mxu0 0.0
    %2955 = vmatpush1.msra.mxu0 %v2789
    %2956 = vmatprep.subr.mxu0 0.0
    %2957 = vmatpush1.msra.mxu0 %v2790
    %2958 = vmatprep.subr.mxu0 0.0
    %2959 = vmatpush1.msra.mxu0 %v2791
    %2960 = vmatprep.subr.mxu0 0.0
    %2961 = vmatpush1.msra.mxu0 %v2792
    %2962 = vmatprep.subr.mxu0 0.0
    %2963 = vmatpush1.msra.mxu0 %v2793
    %2964 = vmatprep.subr.mxu0 0.0
    %2965 = vmatpush1.msra.mxu0 %v2794
    %2966 = vmatprep.subr.mxu0 0.0
    %2967 = vmatpush1.msra.mxu0 %v2795
    %2968 = vmatprep.subr.mxu0 0.0
    %2969 = vmatpush1.msra.mxu0 %v2796
    %2970 = vmatprep.mubr.f32.mxu0 %v2880
    %2971 = vmatmul.mubr.f32.gmra.mrb[0].mxu0 %v2872
    %v2972 = vpop.f32.mrb[0].mxu0
    %v2973 = vadd.f32 0.0, %v2972
    %v2974 = vpop.f32.mrb[0].mxu0
    %2975 = vdwg.mxu0
    %2976 = vmatprep.subr.mxu0 0.0
    %2977 = vmatpush1.msra.mxu0 %v2797
    %2978 = vmatprep.subr.mxu0 0.0
    %2979 = vmatpush1.msra.mxu0 %v2798
    %2980 = vmatprep.subr.mxu0 0.0
    %2981 = vmatpush1.msra.mxu0 %v2799
    %2982 = vmatprep.subr.mxu0 0.0
    %2983 = vmatpush1.msra.mxu0 %v2800
    %2984 = vmatprep.subr.mxu0 0.0
    %2985 = vmatpush1.msra.mxu0 %v2801
    %2986 = vmatprep.subr.mxu0 0.0
    %2987 = vmatpush1.msra.mxu0 %v2802
    %2988 = vmatprep.subr.mxu0 0.0
    %2989 = vmatpush1.msra.mxu0 %v2803
    %2990 = vmatprep.subr.mxu0 0.0
    %2991 = vmatpush1.msra.mxu0 %v2804
    %2992 = vmatprep.subr.mxu0 0.0
    %2993 = vmatpush1.msra.mxu0 %v2805
    %2994 = vmatprep.subr.mxu0 0.0
    %2995 = vmatpush1.msra.mxu0 %v2806
    %2996 = vmatprep.subr.mxu0 0.0
    %2997 = vmatpush1.msra.mxu0 %v2807
    %2998 = vmatprep.subr.mxu0 0.0
    %2999 = vmatpush1.msra.mxu0 %v2808
    %3000 = vmatprep.subr.mxu0 0.0
    %3001 = vmatpush1.msra.mxu0 %v2809
    %3002 = vmatprep.subr.mxu0 0.0
    %3003 = vmatpush1.msra.mxu0 %v2810
    %3004 = vmatprep.subr.mxu0 0.0
    %3005 = vmatpush1.msra.mxu0 %v2811
    %3006 = vmatprep.subr.mxu0 0.0
    %3007 = vmatpush1.msra.mxu0 %v2812
    %3008 = vmatprep.subr.mxu0 0.0
    %3009 = vmatpush1.msra.mxu0 %v2813
    %3010 = vmatprep.subr.mxu0 0.0
    %3011 = vmatpush1.msra.mxu0 %v2814
    %3012 = vmatprep.subr.mxu0 0.0
    %3013 = vmatpush1.msra.mxu0 %v2815
    %3014 = vmatprep.subr.mxu0 0.0
    %3015 = vmatpush1.msra.mxu0 %v2816
    %3016 = vmatprep.subr.mxu0 0.0
    %3017 = vmatpush1.msra.mxu0 %v2817
    %3018 = vmatprep.subr.mxu0 0.0
    %3019 = vmatpush1.msra.mxu0 %v2818
    %3020 = vmatprep.subr.mxu0 0.0
    %3021 = vmatpush1.msra.mxu0 %v2819
    %3022 = vmatprep.subr.mxu0 0.0
    %3023 = vmatpush1.msra.mxu0 %v2820
    %3024 = vmatprep.subr.mxu0 0.0
    %3025 = vmatpush1.msra.mxu0 %v2821
    %3026 = vmatprep.subr.mxu0 0.0
    %3027 = vmatpush1.msra.mxu0 %v2822
    %3028 = vmatprep.subr.mxu0 0.0
    %3029 = vmatpush1.msra.mxu0 %v2823
    %3030 = vmatprep.subr.mxu0 0.0
    %3031 = vmatpush1.msra.mxu0 %v2824
    %3032 = vmatprep.subr.mxu0 0.0
    %3033 = vmatpush1.msra.mxu0 %v2825
    %3034 = vmatprep.subr.mxu0 0.0
    %3035 = vmatpush1.msra.mxu0 %v2826
    %3036 = vmatprep.subr.mxu0 0.0
    %3037 = vmatpush1.msra.mxu0 %v2827
    %3038 = vmatprep.subr.mxu0 0.0
    %3039 = vmatpush1.msra.mxu0 %v2828
    %3040 = vmatprep.mubr.f32.mxu0 %v2881
    %3041 = vmatmul.mubr.f32.gmra.mrb[0].mxu0 %v2879
    %v3042 = vpop.f32.mrb[0].mxu0
    %v3043 = vadd.f32 %v2973, %v3042
    %v3044 = vpop.f32.mrb[0].mxu0
    %3045 = vdwg.mxu0
    %3046 = vmatprep.subr.mxu0 0.0
    %3047 = vmatpush1.msra.mxu0 %v2829
    %3048 = vmatprep.subr.mxu0 0.0
    %3049 = vmatpush1.msra.mxu0 %v2830
    %3050 = vmatprep.subr.mxu0 0.0
    %3051 = vmatpush1.msra.mxu0 %v2831
    %3052 = vmatprep.subr.mxu0 0.0
    %3053 = vmatpush1.msra.mxu0 %v2832
    %3054 = vmatprep.subr.mxu0 0.0
    %3055 = vmatpush1.msra.mxu0 %v2833
    %3056 = vmatprep.subr.mxu0 0.0
    %3057 = vmatpush1.msra.mxu0 %v2834
    %3058 = vmatprep.subr.mxu0 0.0
    %3059 = vmatpush1.msra.mxu0 %v2835
    %3060 = vmatprep.subr.mxu0 0.0
    %3061 = vmatpush1.msra.mxu0 %v2836
    %3062 = vmatprep.subr.mxu0 0.0
    %3063 = vmatpush1.msra.mxu0 %v2837
    %3064 = vmatprep.subr.mxu0 0.0
    %3065 = vmatpush1.msra.mxu0 %v2838
    %3066 = vmatprep.subr.mxu0 0.0
    %3067 = vmatpush1.msra.mxu0 %v2839
    %3068 = vmatprep.subr.mxu0 0.0
    %3069 = vmatpush1.msra.mxu0 %v2840
    %3070 = vmatprep.subr.mxu0 0.0
    %3071 = vmatpush1.msra.mxu0 %v2841
    %3072 = vmatprep.subr.mxu0 0.0
    %3073 = vmatpush1.msra.mxu0 %v2842
    %3074 = vmatprep.subr.mxu0 0.0
    %3075 = vmatpush1.msra.mxu0 %v2843
    %3076 = vmatprep.subr.mxu0 0.0
    %3077 = vmatpush1.msra.mxu0 %v2844
    %3078 = vmatprep.subr.mxu0 0.0
    %3079 = vmatpush1.msra.mxu0 %v2845
    %3080 = vmatprep.subr.mxu0 0.0
    %3081 = vmatpush1.msra.mxu0 %v2846
    %3082 = vmatprep.subr.mxu0 0.0
    %3083 = vmatpush1.msra.mxu0 %v2847
    %3084 = vmatprep.subr.mxu0 0.0
    %3085 = vmatpush1.msra.mxu0 %v2848
    %3086 = vmatprep.subr.mxu0 0.0
    %3087 = vmatpush1.msra.mxu0 %v2849
    %3088 = vmatprep.subr.mxu0 0.0
    %3089 = vmatpush1.msra.mxu0 %v2850
    %3090 = vmatprep.subr.mxu0 0.0
    %3091 = vmatpush1.msra.mxu0 %v2851
    %3092 = vmatprep.subr.mxu0 0.0
    %3093 = vmatpush1.msra.mxu0 %v2852
    %3094 = vmatprep.subr.mxu0 0.0
    %3095 = vmatpush1.msra.mxu0 %v2853
    %3096 = vmatprep.subr.mxu0 0.0
    %3097 = vmatpush1.msra.mxu0 %v2854
    %3098 = vmatprep.subr.mxu0 0.0
    %3099 = vmatpush1.msra.mxu0 %v2855
    %3100 = vmatprep.subr.mxu0 0.0
    %3101 = vmatpush1.msra.mxu0 %v2856
    %3102 = vmatprep.subr.mxu0 0.0
    %3103 = vmatpush1.msra.mxu0 %v2857
    %3104 = vmatprep.subr.mxu0 0.0
    %3105 = vmatpush1.msra.mxu0 %v2858
    %3106 = vmatprep.subr.mxu0 0.0
    %3107 = vmatpush1.msra.mxu0 %v2859
    %3108 = vmatprep.subr.mxu0 0.0
    %3109 = vmatpush1.msra.mxu0 %v2860
    %3110 = vmatprep.mubr.f32.mxu0 %v2897
    %3111 = vmatmul.mubr.f32.gmra.mrb[0].mxu0 %v2889
    %v3112 = vpop.f32.mrb[0].mxu0
    %v3113 = vadd.f32 %v3043, %v3112
    %v3114 = vpop.f32.mrb[0].mxu0
    %3115 = vdwg.mxu0
    %3116 = vmatprep.subr.mxu0 0.0
    %3117 = vmatpush1.msra.mxu0 %v2861
    %3118 = vmatprep.subr.mxu0 0.0
    %3119 = vmatpush1.msra.mxu0 %v2862
    %3120 = vmatprep.subr.mxu0 0.0
    %3121 = vmatpush1.msra.mxu0 0.0
    %3122 = vmatprep.subr.mxu0 0.0
    %3123 = vmatpush1.msra.mxu0 0.0
    %3124 = vmatprep.subr.mxu0 0.0
    %3125 = vmatpush1.msra.mxu0 0.0
    %3126 = vmatprep.subr.mxu0 0.0
    %3127 = vmatpush1.msra.mxu0 0.0
    %3128 = vmatprep.subr.mxu0 0.0
    %3129 = vmatpush1.msra.mxu0 0.0
    %3130 = vmatprep.subr.mxu0 0.0
    %3131 = vmatpush1.msra.mxu0 0.0
    %3132 = vmatprep.subr.mxu0 0.0
    %3133 = vmatpush1.msra.mxu0 0.0
    %3134 = vmatprep.subr.mxu0 0.0
    %3135 = vmatpush1.msra.mxu0 0.0
    %3136 = vmatprep.subr.mxu0 0.0
    %3137 = vmatpush1.msra.mxu0 0.0
    %3138 = vmatprep.subr.mxu0 0.0
    %3139 = vmatpush1.msra.mxu0 0.0
    %3140 = vmatprep.subr.mxu0 0.0
    %3141 = vmatpush1.msra.mxu0 0.0
    %3142 = vmatprep.subr.mxu0 0.0
    %3143 = vmatpush1.msra.mxu0 0.0
    %3144 = vmatprep.subr.mxu0 0.0
    %3145 = vmatpush1.msra.mxu0 0.0
    %3146 = vmatprep.subr.mxu0 0.0
    %3147 = vmatpush1.msra.mxu0 0.0
    %3148 = vmatprep.subr.mxu0 0.0
    %3149 = vmatpush1.msra.mxu0 0.0
    %3150 = vmatprep.subr.mxu0 0.0
    %3151 = vmatpush1.msra.mxu0 0.0
    %3152 = vmatprep.subr.mxu0 0.0
    %3153 = vmatpush1.msra.mxu0 0.0
    %3154 = vmatprep.subr.mxu0 0.0
    %3155 = vmatpush1.msra.mxu0 0.0
    %3156 = vmatprep.subr.mxu0 0.0
    %3157 = vmatpush1.msra.mxu0 0.0
    %3158 = vmatprep.subr.mxu0 0.0
    %3159 = vmatpush1.msra.mxu0 0.0
    %3160 = vmatprep.subr.mxu0 0.0
    %3161 = vmatpush1.msra.mxu0 0.0
    %3162 = vmatprep.subr.mxu0 0.0
    %3163 = vmatpush1.msra.mxu0 0.0
    %3164 = vmatprep.subr.mxu0 0.0
    %3165 = vmatpush1.msra.mxu0 0.0
    %3166 = vmatprep.subr.mxu0 0.0
    %3167 = vmatpush1.msra.mxu0 0.0
    %3168 = vmatprep.subr.mxu0 0.0
    %3169 = vmatpush1.msra.mxu0 0.0
    %3170 = vmatprep.subr.mxu0 0.0
    %3171 = vmatpush1.msra.mxu0 0.0
    %3172 = vmatprep.subr.mxu0 0.0
    %3173 = vmatpush1.msra.mxu0 0.0
    %3174 = vmatprep.subr.mxu0 0.0
    %3175 = vmatpush1.msra.mxu0 0.0
    %3176 = vmatprep.subr.mxu0 0.0
    %3177 = vmatpush1.msra.mxu0 0.0
    %3178 = vmatprep.subr.mxu0 0.0
    %3179 = vmatpush1.msra.mxu0 0.0
    %3180 = vmatprep.mubr.f32.mxu0 0.0
    %3181 = vmatmul.mubr.f32.gmra.mrb[0].mxu0 %v2904
    %v3182 = vpop.f32.mrb[0].mxu0
    %v3183 = vadd.f32 %v3113, %v3182
    %v3184 = vpop.f32.mrb[0].mxu0
    %3185 = vdwg.mxu0
    %v3186 = vadd.f32 %v2595, %v3183
    %s3187 = sld [smem:[#allocation2 + $0x280]]
    %v3188 = vstv %s3187
    %v3189 = vmul.f32 %v57, %v3188
    %v3190 = vmul.f32 %v58, %v3188
    %s3191 = sld [smem:[#allocation2 + $0x281]]
    %v3192 = vstv %s3191
    %v3193 = vmul.f32 %v161, %v3192
    %v3194 = vmul.f32 %v162, %v3192
    %v3195 = vmul.f32 %v163, %v3192
    %v3196 = vmul.f32 %v164, %v3192
    %v3197 = vmul.f32 %v165, %v3192
    %v3198 = vmul.f32 %v166, %v3192
    %v3199 = vmul.f32 %v167, %v3192
    %v3207 = vcombine.low %v3193, %v3194
    %v3208 = vcombine.low %v3195, %v3196
    %v3210 = vunpack.c.l.s4 1983009808
    %v3211 = vunpack.c.0.s8 %v3210
    %v3212 = vlaneseq
    %v3213 = vshrl.u32 %v3212, 7
    %v3214 = vsub.s32 %v3211, %v3213
    %v3215 = vrot.slane %v3207, %v3214
    %v3217 = vunpack.c.l.s4 1983009808
    %v3218 = vunpack.c.0.s8 %v3217
    %v3219 = vlaneseq
    %v3220 = vshrl.u32 %v3219, 7
    %v3221 = vsub.s32 %v3218, %v3220
    %v3222 = vrot.slane %v3208, %v3221
    %v3223 = vcombine.low %v3215, %v3222
    %v3224 = vcombine.low %v3197, %v3198
    %v3226 = vunpack.c.l.s4 1983009808
    %v3227 = vunpack.c.0.s8 %v3226
    %v3228 = vlaneseq
    %v3229 = vshrl.u32 %v3228, 7
    %v3230 = vsub.s32 %v3227, %v3229
    %v3231 = vrot.slane %v3224, %v3230
    %v3233 = vunpack.c.l.s4 1983009808
    %v3234 = vunpack.c.0.s8 %v3233
    %v3235 = vlaneseq
    %v3236 = vshrl.u32 %v3235, 7
    %v3237 = vsub.s32 %v3234, %v3236
    %v3238 = vrot.slane %v3199, %v3237
    %v3239 = vcombine.low %v3231, %v3238
    %v3242 = vadd.f32 %v3189, %v3223
    %v3243 = vadd.f32 %v3190, %v3239
    %s3244 = sld [smem:[#allocation2 + $0x282]]
    %v3245 = vstv %s3244
    %v3246 = vmul.f32 %v183, %v3245
    %v3247 = vmul.f32 %v184, %v3245
    %v3248 = vmul.f32 %v185, %v3245
    %v3249 = vmul.f32 %v186, %v3245
    %v3250 = vmul.f32 %v187, %v3245
    %v3251 = vmul.f32 %v196, %v3245
    %v3252 = vmul.f32 %v3245, 0.0
    %v3260 = vcombine.low %v3246, %v3247
    %v3261 = vcombine.low %v3248, %v3249
    %v3263 = vunpack.c.l.s4 1983009808
    %v3264 = vunpack.c.0.s8 %v3263
    %v3265 = vlaneseq
    %v3266 = vshrl.u32 %v3265, 7
    %v3267 = vsub.s32 %v3264, %v3266
    %v3268 = vrot.slane %v3260, %v3267
    %v3270 = vunpack.c.l.s4 1983009808
    %v3271 = vunpack.c.0.s8 %v3270
    %v3272 = vlaneseq
    %v3273 = vshrl.u32 %v3272, 7
    %v3274 = vsub.s32 %v3271, %v3273
    %v3275 = vrot.slane %v3261, %v3274
    %v3276 = vcombine.low %v3268, %v3275
    %v3277 = vcombine.low %v3250, %v3251
    %v3279 = vunpack.c.l.s4 1983009808
    %v3280 = vunpack.c.0.s8 %v3279
    %v3281 = vlaneseq
    %v3282 = vshrl.u32 %v3281, 7
    %v3283 = vsub.s32 %v3280, %v3282
    %v3284 = vrot.slane %v3277, %v3283
    %v3286 = vunpack.c.l.s4 1983009808
    %v3287 = vunpack.c.0.s8 %v3286
    %v3288 = vlaneseq
    %v3289 = vshrl.u32 %v3288, 7
    %v3290 = vsub.s32 %v3287, %v3289
    %v3291 = vrot.slane %v3252, %v3290
    %v3292 = vcombine.low %v3284, %v3291
    %v3295 = vadd.f32 %v3242, %v3276
    %v3296 = vadd.f32 %v3243, %v3292
    %s3297 = sld [smem:[#allocation2 + $0x283]]
    %v3298 = vstv %s3297
    %v3299 = vmul.f32 %v226, %v3298
    %v3300 = vmul.f32 %v227, %v3298
    %v3301 = vmul.f32 %v228, %v3298
    %v3302 = vmul.f32 %v229, %v3298
    %v3303 = vmul.f32 %v230, %v3298
    %v3304 = vmul.f32 %v231, %v3298
    %v3305 = vmul.f32 %v232, %v3298
    %v3313 = vcombine.low %v3299, %v3300
    %v3314 = vcombine.low %v3301, %v3302
    %v3316 = vunpack.c.l.s4 1983009808
    %v3317 = vunpack.c.0.s8 %v3316
    %v3318 = vlaneseq
    %v3319 = vshrl.u32 %v3318, 7
    %v3320 = vsub.s32 %v3317, %v3319
    %v3321 = vrot.slane %v3313, %v3320
    %v3323 = vunpack.c.l.s4 1983009808
    %v3324 = vunpack.c.0.s8 %v3323
    %v3325 = vlaneseq
    %v3326 = vshrl.u32 %v3325, 7
    %v3327 = vsub.s32 %v3324, %v3326
    %v3328 = vrot.slane %v3314, %v3327
    %v3329 = vcombine.low %v3321, %v3328
    %v3330 = vcombine.low %v3303, %v3304
    %v3332 = vunpack.c.l.s4 1983009808
    %v3333 = vunpack.c.0.s8 %v3332
    %v3334 = vlaneseq
    %v3335 = vshrl.u32 %v3334, 7
    %v3336 = vsub.s32 %v3333, %v3335
    %v3337 = vrot.slane %v3330, %v3336
    %v3339 = vunpack.c.l.s4 1983009808
    %v3340 = vunpack.c.0.s8 %v3339
    %v3341 = vlaneseq
    %v3342 = vshrl.u32 %v3341, 7
    %v3343 = vsub.s32 %v3340, %v3342
    %v3344 = vrot.slane %v3305, %v3343
    %v3345 = vcombine.low %v3337, %v3344
    %v3348 = vadd.f32 %v3295, %v3329
    %v3349 = vadd.f32 %v3296, %v3345
    %s3350 = sld [smem:[#allocation5 + $0x5]]
    %v3351 = vstv %s3350
    %v3352 = vadd.f32 %v3348, %v3351
    %v3353 = vadd.f32 %v3349, %v3351
    %v3354 = vmax.f32 %v3352, 0.0
    %v3355 = vmax.f32 %v3353, 0.0
    %v3356 = vld [vmem:[%s4 + $0xf50] sm:$0xff]
    %v3357 = vld [vmem:[%s4 + $0xf58] sm:$0xff]
    %v3358 = vld [vmem:[%s4 + $0xf60] sm:$0xff]
    %v3359 = vld [vmem:[%s4 + $0xf68] sm:$0xff]
    %v3360 = vld [vmem:[%s4 + $0xf70] sm:$0xff]
    %v3361 = vld [vmem:[%s4 + $0xf78] sm:$0xff]
    %v3362 = vld [vmem:[%s4 + $0xf80] sm:$0xff]
    %v3363 = vld [vmem:[%s4 + $0xf88] sm:$0xff]
    %v3364 = vld [vmem:[%s4 + $0xf90] sm:$0xff]
    %v3365 = vld [vmem:[%s4 + $0xf98] sm:$0xff]
    %v3366 = vld [vmem:[%s4 + $0xfa0] sm:$0xff]
    %v3367 = vld [vmem:[%s4 + $0xfa8] sm:$0xff]
    %v3368 = vld [vmem:[%s4 + $0xfb0] sm:$0xff]
    %v3369 = vld [vmem:[%s4 + $0xfb8] sm:$0xff]
    %v3370 = vld [vmem:[%s4 + $0xfc0] sm:$0xff]
    %v3371 = vld [vmem:[%s4 + $0xfc8] sm:$0xff]
    %v3372 = vld [vmem:[%s4 + $0xfd0] sm:$0xff]
    %v3373 = vld [vmem:[%s4 + $0xfd8] sm:$0xff]
    %v3374 = vld [vmem:[%s4 + $0xfe0] sm:$0xff]
    %v3375 = vld [vmem:[%s4 + $0xfe8] sm:$0xff]
    %v3376 = vld [vmem:[%s4 + $0xff0] sm:$0xff]
    %v3377 = vld [vmem:[%s4 + $0xff8] sm:$0xff]
    %v3378 = vld [vmem:[%s4 + $0x1000] sm:$0xff]
    %v3379 = vld [vmem:[%s4 + $0x1008] sm:$0xff]
    %v3380 = vld [vmem:[%s4 + $0x1010] sm:$0xff]
    %v3381 = vld [vmem:[%s4 + $0x1018] sm:$0xff]
    %v3382 = vld [vmem:[%s4 + $0x1020] sm:$0xff]
    %v3383 = vld [vmem:[%s4 + $0x1028] sm:$0xff]
    %v3384 = vld [vmem:[%s4 + $0x1030] sm:$0xff]
    %v3385 = vld [vmem:[%s4 + $0x1038] sm:$0xff]
    %v3386 = vld [vmem:[%s4 + $0x1040] sm:$0xff]
    %v3387 = vld [vmem:[%s4 + $0x1048] sm:$0xff]
    %v3388 = vld [vmem:[%s4 + $0x1050] sm:$0xff]
    %v3389 = vld [vmem:[%s4 + $0x1058] sm:$0xff]
    %v3390 = vld [vmem:[%s4 + $0x1060] sm:$0xff]
    %v3391 = vld [vmem:[%s4 + $0x1068] sm:$0xff]
    %v3392 = vld [vmem:[%s4 + $0x1070] sm:$0xff]
    %v3393 = vld [vmem:[%s4 + $0x1078] sm:$0xff]
    %v3394 = vld [vmem:[%s4 + $0x1080] sm:$0xff]
    %v3395 = vld [vmem:[%s4 + $0x1088] sm:$0xff]
    %v3396 = vld [vmem:[%s4 + $0x1090] sm:$0xff]
    %v3397 = vld [vmem:[%s4 + $0x1098] sm:$0xff]
    %v3398 = vld [vmem:[%s4 + $0x10a0] sm:$0xff]
    %v3399 = vld [vmem:[%s4 + $0x10a8] sm:$0xff]
    %v3400 = vld [vmem:[%s4 + $0x10b0] sm:$0xff]
    %v3401 = vld [vmem:[%s4 + $0x10b8] sm:$0xff]
    %v3402 = vld [vmem:[%s4 + $0x10c0] sm:$0xff]
    %v3403 = vld [vmem:[%s4 + $0x10c8] sm:$0xff]
    %v3404 = vld [vmem:[%s4 + $0x10d0] sm:$0xff]
    %v3405 = vld [vmem:[%s4 + $0x10d8] sm:$0xff]
    %v3406 = vld [vmem:[%s4 + $0x10e0] sm:$0xff]
    %v3407 = vld [vmem:[%s4 + $0x10e8] sm:$0xff]
    %v3408 = vld [vmem:[%s4 + $0x10f0] sm:$0xff]
    %v3409 = vld [vmem:[%s4 + $0x10f8] sm:$0xff]
    %v3410 = vld [vmem:[%s4 + $0x1100] sm:$0xff]
    %v3411 = vld [vmem:[%s4 + $0x1108] sm:$0xff]
    %v3412 = vld [vmem:[%s4 + $0x1110] sm:$0xff]
    %v3413 = vld [vmem:[%s4 + $0x1118] sm:$0xff]
    %v3414 = vld [vmem:[%s4 + $0x1120] sm:$0xff]
    %v3415 = vld [vmem:[%s4 + $0x1128] sm:$0xff]
    %v3416 = vld [vmem:[%s4 + $0x1130] sm:$0xff]
    %v3417 = vld [vmem:[%s4 + $0x1138] sm:$0xff]
    %v3418 = vld [vmem:[%s4 + $0x1140] sm:$0xff]
    %v3419 = vld [vmem:[%s4 + $0x1148] sm:$0xff]
    %v3420 = vld [vmem:[%s4 + $0x1150] sm:$0xff]
    %v3421 = vld [vmem:[%s4 + $0x1158] sm:$0xff]
    %v3422 = vld [vmem:[%s4 + $0x1160] sm:$0xff]
    %v3423 = vld [vmem:[%s4 + $0x1168] sm:$0xff]
    %v3424 = vld [vmem:[%s4 + $0x1170] sm:$0xff]
    %v3425 = vld [vmem:[%s4 + $0x1178] sm:$0xff]
    %v3426 = vld [vmem:[%s4 + $0x1180] sm:$0xff]
    %v3427 = vld [vmem:[%s4 + $0x1188] sm:$0xff]
    %v3428 = vld [vmem:[%s4 + $0x1190] sm:$0xff]
    %v3429 = vld [vmem:[%s4 + $0x1198] sm:$0xff]
    %v3430 = vld [vmem:[%s4 + $0x11a0] sm:$0xff]
    %v3431 = vld [vmem:[%s4 + $0x11a8] sm:$0xff]
    %v3432 = vld [vmem:[%s4 + $0x11b0] sm:$0xff]
    %v3433 = vld [vmem:[%s4 + $0x11b8] sm:$0xff]
    %v3434 = vld [vmem:[%s4 + $0x11c0] sm:$0xff]
    %v3435 = vld [vmem:[%s4 + $0x11c8] sm:$0xff]
    %v3436 = vld [vmem:[%s4 + $0x11d0] sm:$0xff]
    %v3437 = vld [vmem:[%s4 + $0x11d8] sm:$0xff]
    %v3438 = vld [vmem:[%s4 + $0x11e0] sm:$0xff]
    %v3439 = vld [vmem:[%s4 + $0x11e8] sm:$0xff]
    %v3440 = vld [vmem:[%s4 + $0x11f0] sm:$0xff]
    %v3441 = vld [vmem:[%s4 + $0x11f8] sm:$0xff]
    %v3442 = vld [vmem:[%s4 + $0x1200] sm:$0xff]
    %v3443 = vld [vmem:[%s4 + $0x1208] sm:$0xff]
    %v3444 = vld [vmem:[%s4 + $0x1210] sm:$0xff]
    %v3445 = vld [vmem:[%s4 + $0x1218] sm:$0xff]
    %v3446 = vld [vmem:[%s4 + $0x1220] sm:$0xff]
    %v3447 = vld [vmem:[%s4 + $0x1228] sm:$0xff]
    %v3448 = vld [vmem:[%s4 + $0x1230] sm:$0xff]
    %v3449 = vld [vmem:[%s4 + $0x1238] sm:$0xff]
    %v3450 = vld [vmem:[%s4 + $0x1240] sm:$0xff]
    %v3451 = vld [vmem:[%s4 + $0x1248] sm:$0xff]
    %v3452 = vld [vmem:[%s4 + $0x1250] sm:$0xff]
    %v3453 = vld [vmem:[%s4 + $0x1258] sm:$0xff]
    %v3456 = vcombine.high %v3354, %v3354
    %v3458 = vunpack.c.l.s4 1983009808
    %v3459 = vunpack.c.0.s8 %v3458
    %v3460 = vlaneseq
    %v3461 = vshrl.u32 %v3460, 7
    %v3462 = vsub.s32 %v3459, %v3461
    %v3463 = vrot.slane %v3354, %v3462
    %v3465 = vunpack.c.l.s4 1983009808
    %v3466 = vunpack.c.0.s8 %v3465
    %v3467 = vlaneseq
    %v3468 = vshrl.u32 %v3467, 7
    %v3469 = vsub.s32 %v3466, %v3468
    %v3470 = vrot.slane %v3456, %v3469
    %v3471 = vcombine.high %v3463, %v3463
    %v3472 = vcombine.high %v3470, %v3470
    %v3473 = vcombine.high %v3355, %v3355
    %v3475 = vunpack.c.l.s4 1983009808
    %v3476 = vunpack.c.0.s8 %v3475
    %v3477 = vlaneseq
    %v3478 = vshrl.u32 %v3477, 7
    %v3479 = vsub.s32 %v3476, %v3478
    %v3480 = vrot.slane %v3355, %v3479
    %v3482 = vunpack.c.l.s4 1983009808
    %v3483 = vunpack.c.0.s8 %v3482
    %v3484 = vlaneseq
    %v3485 = vshrl.u32 %v3484, 7
    %v3486 = vsub.s32 %v3483, %v3485
    %v3487 = vrot.slane %v3473, %v3486
    %v3488 = vcombine.high %v3480, %v3480
    %v3495 = vsel %vm808, %v3487, 0
    %3497 = vmatprep.subr.mxu0 0.0
    %3498 = vmatpush1.msra.mxu0 %v3356
    %3499 = vmatprep.subr.mxu0 0.0
    %3500 = vmatpush1.msra.mxu0 %v3357
    %3501 = vmatprep.subr.mxu0 0.0
    %3502 = vmatpush1.msra.mxu0 %v3358
    %3503 = vmatprep.subr.mxu0 0.0
    %3504 = vmatpush1.msra.mxu0 %v3359
    %3505 = vmatprep.subr.mxu0 0.0
    %3506 = vmatpush1.msra.mxu0 %v3360
    %3507 = vmatprep.subr.mxu0 0.0
    %3508 = vmatpush1.msra.mxu0 %v3361
    %3509 = vmatprep.subr.mxu0 0.0
    %3510 = vmatpush1.msra.mxu0 %v3362
    %3511 = vmatprep.subr.mxu0 0.0
    %3512 = vmatpush1.msra.mxu0 %v3363
    %3513 = vmatprep.subr.mxu0 0.0
    %3514 = vmatpush1.msra.mxu0 %v3364
    %3515 = vmatprep.subr.mxu0 0.0
    %3516 = vmatpush1.msra.mxu0 %v3365
    %3517 = vmatprep.subr.mxu0 0.0
    %3518 = vmatpush1.msra.mxu0 %v3366
    %3519 = vmatprep.subr.mxu0 0.0
    %3520 = vmatpush1.msra.mxu0 %v3367
    %3521 = vmatprep.subr.mxu0 0.0
    %3522 = vmatpush1.msra.mxu0 %v3368
    %3523 = vmatprep.subr.mxu0 0.0
    %3524 = vmatpush1.msra.mxu0 %v3369
    %3525 = vmatprep.subr.mxu0 0.0
    %3526 = vmatpush1.msra.mxu0 %v3370
    %3527 = vmatprep.subr.mxu0 0.0
    %3528 = vmatpush1.msra.mxu0 %v3371
    %3529 = vmatprep.subr.mxu0 0.0
    %3530 = vmatpush1.msra.mxu0 %v3372
    %3531 = vmatprep.subr.mxu0 0.0
    %3532 = vmatpush1.msra.mxu0 %v3373
    %3533 = vmatprep.subr.mxu0 0.0
    %3534 = vmatpush1.msra.mxu0 %v3374
    %3535 = vmatprep.subr.mxu0 0.0
    %3536 = vmatpush1.msra.mxu0 %v3375
    %3537 = vmatprep.subr.mxu0 0.0
    %3538 = vmatpush1.msra.mxu0 %v3376
    %3539 = vmatprep.subr.mxu0 0.0
    %3540 = vmatpush1.msra.mxu0 %v3377
    %3541 = vmatprep.subr.mxu0 0.0
    %3542 = vmatpush1.msra.mxu0 %v3378
    %3543 = vmatprep.subr.mxu0 0.0
    %3544 = vmatpush1.msra.mxu0 %v3379
    %3545 = vmatprep.subr.mxu0 0.0
    %3546 = vmatpush1.msra.mxu0 %v3380
    %3547 = vmatprep.subr.mxu0 0.0
    %3548 = vmatpush1.msra.mxu0 %v3381
    %3549 = vmatprep.subr.mxu0 0.0
    %3550 = vmatpush1.msra.mxu0 %v3382
    %3551 = vmatprep.subr.mxu0 0.0
    %3552 = vmatpush1.msra.mxu0 %v3383
    %3553 = vmatprep.subr.mxu0 0.0
    %3554 = vmatpush1.msra.mxu0 %v3384
    %3555 = vmatprep.subr.mxu0 0.0
    %3556 = vmatpush1.msra.mxu0 %v3385
    %3557 = vmatprep.subr.mxu0 0.0
    %3558 = vmatpush1.msra.mxu0 %v3386
    %3559 = vmatprep.subr.mxu0 0.0
    %3560 = vmatpush1.msra.mxu0 %v3387
    %3561 = vmatprep.mubr.f32.mxu0 %v3471
    %3562 = vmatmul.mubr.f32.gmra.mrb[0].mxu0 %v3463
    %v3563 = vpop.f32.mrb[0].mxu0
    %v3564 = vadd.f32 0.0, %v3563
    %v3565 = vpop.f32.mrb[0].mxu0
    %3566 = vdwg.mxu0
    %3567 = vmatprep.subr.mxu0 0.0
    %3568 = vmatpush1.msra.mxu0 %v3388
    %3569 = vmatprep.subr.mxu0 0.0
    %3570 = vmatpush1.msra.mxu0 %v3389
    %3571 = vmatprep.subr.mxu0 0.0
    %3572 = vmatpush1.msra.mxu0 %v3390
    %3573 = vmatprep.subr.mxu0 0.0
    %3574 = vmatpush1.msra.mxu0 %v3391
    %3575 = vmatprep.subr.mxu0 0.0
    %3576 = vmatpush1.msra.mxu0 %v3392
    %3577 = vmatprep.subr.mxu0 0.0
    %3578 = vmatpush1.msra.mxu0 %v3393
    %3579 = vmatprep.subr.mxu0 0.0
    %3580 = vmatpush1.msra.mxu0 %v3394
    %3581 = vmatprep.subr.mxu0 0.0
    %3582 = vmatpush1.msra.mxu0 %v3395
    %3583 = vmatprep.subr.mxu0 0.0
    %3584 = vmatpush1.msra.mxu0 %v3396
    %3585 = vmatprep.subr.mxu0 0.0
    %3586 = vmatpush1.msra.mxu0 %v3397
    %3587 = vmatprep.subr.mxu0 0.0
    %3588 = vmatpush1.msra.mxu0 %v3398
    %3589 = vmatprep.subr.mxu0 0.0
    %3590 = vmatpush1.msra.mxu0 %v3399
    %3591 = vmatprep.subr.mxu0 0.0
    %3592 = vmatpush1.msra.mxu0 %v3400
    %3593 = vmatprep.subr.mxu0 0.0
    %3594 = vmatpush1.msra.mxu0 %v3401
    %3595 = vmatprep.subr.mxu0 0.0
    %3596 = vmatpush1.msra.mxu0 %v3402
    %3597 = vmatprep.subr.mxu0 0.0
    %3598 = vmatpush1.msra.mxu0 %v3403
    %3599 = vmatprep.subr.mxu0 0.0
    %3600 = vmatpush1.msra.mxu0 %v3404
    %3601 = vmatprep.subr.mxu0 0.0
    %3602 = vmatpush1.msra.mxu0 %v3405
    %3603 = vmatprep.subr.mxu0 0.0
    %3604 = vmatpush1.msra.mxu0 %v3406
    %3605 = vmatprep.subr.mxu0 0.0
    %3606 = vmatpush1.msra.mxu0 %v3407
    %3607 = vmatprep.subr.mxu0 0.0
    %3608 = vmatpush1.msra.mxu0 %v3408
    %3609 = vmatprep.subr.mxu0 0.0
    %3610 = vmatpush1.msra.mxu0 %v3409
    %3611 = vmatprep.subr.mxu0 0.0
    %3612 = vmatpush1.msra.mxu0 %v3410
    %3613 = vmatprep.subr.mxu0 0.0
    %3614 = vmatpush1.msra.mxu0 %v3411
    %3615 = vmatprep.subr.mxu0 0.0
    %3616 = vmatpush1.msra.mxu0 %v3412
    %3617 = vmatprep.subr.mxu0 0.0
    %3618 = vmatpush1.msra.mxu0 %v3413
    %3619 = vmatprep.subr.mxu0 0.0
    %3620 = vmatpush1.msra.mxu0 %v3414
    %3621 = vmatprep.subr.mxu0 0.0
    %3622 = vmatpush1.msra.mxu0 %v3415
    %3623 = vmatprep.subr.mxu0 0.0
    %3624 = vmatpush1.msra.mxu0 %v3416
    %3625 = vmatprep.subr.mxu0 0.0
    %3626 = vmatpush1.msra.mxu0 %v3417
    %3627 = vmatprep.subr.mxu0 0.0
    %3628 = vmatpush1.msra.mxu0 %v3418
    %3629 = vmatprep.subr.mxu0 0.0
    %3630 = vmatpush1.msra.mxu0 %v3419
    %3631 = vmatprep.mubr.f32.mxu0 %v3472
    %3632 = vmatmul.mubr.f32.gmra.mrb[0].mxu0 %v3470
    %v3633 = vpop.f32.mrb[0].mxu0
    %v3634 = vadd.f32 %v3564, %v3633
    %v3635 = vpop.f32.mrb[0].mxu0
    %3636 = vdwg.mxu0
    %3637 = vmatprep.subr.mxu0 0.0
    %3638 = vmatpush1.msra.mxu0 %v3420
    %3639 = vmatprep.subr.mxu0 0.0
    %3640 = vmatpush1.msra.mxu0 %v3421
    %3641 = vmatprep.subr.mxu0 0.0
    %3642 = vmatpush1.msra.mxu0 %v3422
    %3643 = vmatprep.subr.mxu0 0.0
    %3644 = vmatpush1.msra.mxu0 %v3423
    %3645 = vmatprep.subr.mxu0 0.0
    %3646 = vmatpush1.msra.mxu0 %v3424
    %3647 = vmatprep.subr.mxu0 0.0
    %3648 = vmatpush1.msra.mxu0 %v3425
    %3649 = vmatprep.subr.mxu0 0.0
    %3650 = vmatpush1.msra.mxu0 %v3426
    %3651 = vmatprep.subr.mxu0 0.0
    %3652 = vmatpush1.msra.mxu0 %v3427
    %3653 = vmatprep.subr.mxu0 0.0
    %3654 = vmatpush1.msra.mxu0 %v3428
    %3655 = vmatprep.subr.mxu0 0.0
    %3656 = vmatpush1.msra.mxu0 %v3429
    %3657 = vmatprep.subr.mxu0 0.0
    %3658 = vmatpush1.msra.mxu0 %v3430
    %3659 = vmatprep.subr.mxu0 0.0
    %3660 = vmatpush1.msra.mxu0 %v3431
    %3661 = vmatprep.subr.mxu0 0.0
    %3662 = vmatpush1.msra.mxu0 %v3432
    %3663 = vmatprep.subr.mxu0 0.0
    %3664 = vmatpush1.msra.mxu0 %v3433
    %3665 = vmatprep.subr.mxu0 0.0
    %3666 = vmatpush1.msra.mxu0 %v3434
    %3667 = vmatprep.subr.mxu0 0.0
    %3668 = vmatpush1.msra.mxu0 %v3435
    %3669 = vmatprep.subr.mxu0 0.0
    %3670 = vmatpush1.msra.mxu0 %v3436
    %3671 = vmatprep.subr.mxu0 0.0
    %3672 = vmatpush1.msra.mxu0 %v3437
    %3673 = vmatprep.subr.mxu0 0.0
    %3674 = vmatpush1.msra.mxu0 %v3438
    %3675 = vmatprep.subr.mxu0 0.0
    %3676 = vmatpush1.msra.mxu0 %v3439
    %3677 = vmatprep.subr.mxu0 0.0
    %3678 = vmatpush1.msra.mxu0 %v3440
    %3679 = vmatprep.subr.mxu0 0.0
    %3680 = vmatpush1.msra.mxu0 %v3441
    %3681 = vmatprep.subr.mxu0 0.0
    %3682 = vmatpush1.msra.mxu0 %v3442
    %3683 = vmatprep.subr.mxu0 0.0
    %3684 = vmatpush1.msra.mxu0 %v3443
    %3685 = vmatprep.subr.mxu0 0.0
    %3686 = vmatpush1.msra.mxu0 %v3444
    %3687 = vmatprep.subr.mxu0 0.0
    %3688 = vmatpush1.msra.mxu0 %v3445
    %3689 = vmatprep.subr.mxu0 0.0
    %3690 = vmatpush1.msra.mxu0 %v3446
    %3691 = vmatprep.subr.mxu0 0.0
    %3692 = vmatpush1.msra.mxu0 %v3447
    %3693 = vmatprep.subr.mxu0 0.0
    %3694 = vmatpush1.msra.mxu0 %v3448
    %3695 = vmatprep.subr.mxu0 0.0
    %3696 = vmatpush1.msra.mxu0 %v3449
    %3697 = vmatprep.subr.mxu0 0.0
    %3698 = vmatpush1.msra.mxu0 %v3450
    %3699 = vmatprep.subr.mxu0 0.0
    %3700 = vmatpush1.msra.mxu0 %v3451
    %3701 = vmatprep.mubr.f32.mxu0 %v3488
    %3702 = vmatmul.mubr.f32.gmra.mrb[0].mxu0 %v3480
    %v3703 = vpop.f32.mrb[0].mxu0
    %v3704 = vadd.f32 %v3634, %v3703
    %v3705 = vpop.f32.mrb[0].mxu0
    %3706 = vdwg.mxu0
    %3707 = vmatprep.subr.mxu0 0.0
    %3708 = vmatpush1.msra.mxu0 %v3452
    %3709 = vmatprep.subr.mxu0 0.0
    %3710 = vmatpush1.msra.mxu0 %v3453
    %3711 = vmatprep.subr.mxu0 0.0
    %3712 = vmatpush1.msra.mxu0 0.0
    %3713 = vmatprep.subr.mxu0 0.0
    %3714 = vmatpush1.msra.mxu0 0.0
    %3715 = vmatprep.subr.mxu0 0.0
    %3716 = vmatpush1.msra.mxu0 0.0
    %3717 = vmatprep.subr.mxu0 0.0
    %3718 = vmatpush1.msra.mxu0 0.0
    %3719 = vmatprep.subr.mxu0 0.0
    %3720 = vmatpush1.msra.mxu0 0.0
    %3721 = vmatprep.subr.mxu0 0.0
    %3722 = vmatpush1.msra.mxu0 0.0
    %3723 = vmatprep.subr.mxu0 0.0
    %3724 = vmatpush1.msra.mxu0 0.0
    %3725 = vmatprep.subr.mxu0 0.0
    %3726 = vmatpush1.msra.mxu0 0.0
    %3727 = vmatprep.subr.mxu0 0.0
    %3728 = vmatpush1.msra.mxu0 0.0
    %3729 = vmatprep.subr.mxu0 0.0
    %3730 = vmatpush1.msra.mxu0 0.0
    %3731 = vmatprep.subr.mxu0 0.0
    %3732 = vmatpush1.msra.mxu0 0.0
    %3733 = vmatprep.subr.mxu0 0.0
    %3734 = vmatpush1.msra.mxu0 0.0
    %3735 = vmatprep.subr.mxu0 0.0
    %3736 = vmatpush1.msra.mxu0 0.0
    %3737 = vmatprep.subr.mxu0 0.0
    %3738 = vmatpush1.msra.mxu0 0.0
    %3739 = vmatprep.subr.mxu0 0.0
    %3740 = vmatpush1.msra.mxu0 0.0
    %3741 = vmatprep.subr.mxu0 0.0
    %3742 = vmatpush1.msra.mxu0 0.0
    %3743 = vmatprep.subr.mxu0 0.0
    %3744 = vmatpush1.msra.mxu0 0.0
    %3745 = vmatprep.subr.mxu0 0.0
    %3746 = vmatpush1.msra.mxu0 0.0
    %3747 = vmatprep.subr.mxu0 0.0
    %3748 = vmatpush1.msra.mxu0 0.0
    %3749 = vmatprep.subr.mxu0 0.0
    %3750 = vmatpush1.msra.mxu0 0.0
    %3751 = vmatprep.subr.mxu0 0.0
    %3752 = vmatpush1.msra.mxu0 0.0
    %3753 = vmatprep.subr.mxu0 0.0
    %3754 = vmatpush1.msra.mxu0 0.0
    %3755 = vmatprep.subr.mxu0 0.0
    %3756 = vmatpush1.msra.mxu0 0.0
    %3757 = vmatprep.subr.mxu0 0.0
    %3758 = vmatpush1.msra.mxu0 0.0
    %3759 = vmatprep.subr.mxu0 0.0
    %3760 = vmatpush1.msra.mxu0 0.0
    %3761 = vmatprep.subr.mxu0 0.0
    %3762 = vmatpush1.msra.mxu0 0.0
    %3763 = vmatprep.subr.mxu0 0.0
    %3764 = vmatpush1.msra.mxu0 0.0
    %3765 = vmatprep.subr.mxu0 0.0
    %3766 = vmatpush1.msra.mxu0 0.0
    %3767 = vmatprep.subr.mxu0 0.0
    %3768 = vmatpush1.msra.mxu0 0.0
    %3769 = vmatprep.subr.mxu0 0.0
    %3770 = vmatpush1.msra.mxu0 0.0
    %3771 = vmatprep.mubr.f32.mxu0 0.0
    %3772 = vmatmul.mubr.f32.gmra.mrb[0].mxu0 %v3495
    %v3773 = vpop.f32.mrb[0].mxu0
    %v3774 = vadd.f32 %v3704, %v3773
    %v3775 = vpop.f32.mrb[0].mxu0
    %3776 = vdwg.mxu0
    %v3777 = vadd.f32 %v3186, %v3774
    %s3778 = sld [smem:[#allocation2 + $0x300]]
    %v3779 = vstv %s3778
    %v3780 = vmul.f32 %v57, %v3779
    %v3781 = vmul.f32 %v58, %v3779
    %s3782 = sld [smem:[#allocation2 + $0x301]]
    %v3783 = vstv %s3782
    %v3784 = vmul.f32 %v161, %v3783
    %v3785 = vmul.f32 %v162, %v3783
    %v3786 = vmul.f32 %v163, %v3783
    %v3787 = vmul.f32 %v164, %v3783
    %v3788 = vmul.f32 %v165, %v3783
    %v3789 = vmul.f32 %v166, %v3783
    %v3790 = vmul.f32 %v167, %v3783
    %v3798 = vcombine.low %v3784, %v3785
    %v3799 = vcombine.low %v3786, %v3787
    %v3801 = vunpack.c.l.s4 1983009808
    %v3802 = vunpack.c.0.s8 %v3801
    %v3803 = vlaneseq
    %v3804 = vshrl.u32 %v3803, 7
    %v3805 = vsub.s32 %v3802, %v3804
    %v3806 = vrot.slane %v3798, %v3805
    %v3808 = vunpack.c.l.s4 1983009808
    %v3809 = vunpack.c.0.s8 %v3808
    %v3810 = vlaneseq
    %v3811 = vshrl.u32 %v3810, 7
    %v3812 = vsub.s32 %v3809, %v3811
    %v3813 = vrot.slane %v3799, %v3812
    %v3814 = vcombine.low %v3806, %v3813
    %v3815 = vcombine.low %v3788, %v3789
    %v3817 = vunpack.c.l.s4 1983009808
    %v3818 = vunpack.c.0.s8 %v3817
    %v3819 = vlaneseq
    %v3820 = vshrl.u32 %v3819, 7
    %v3821 = vsub.s32 %v3818, %v3820
    %v3822 = vrot.slane %v3815, %v3821
    %v3824 = vunpack.c.l.s4 1983009808
    %v3825 = vunpack.c.0.s8 %v3824
    %v3826 = vlaneseq
    %v3827 = vshrl.u32 %v3826, 7
    %v3828 = vsub.s32 %v3825, %v3827
    %v3829 = vrot.slane %v3790, %v3828
    %v3830 = vcombine.low %v3822, %v3829
    %v3833 = vadd.f32 %v3780, %v3814
    %v3834 = vadd.f32 %v3781, %v3830
    %s3835 = sld [smem:[#allocation2 + $0x302]]
    %v3836 = vstv %s3835
    %v3837 = vmul.f32 %v183, %v3836
    %v3838 = vmul.f32 %v184, %v3836
    %v3839 = vmul.f32 %v185, %v3836
    %v3840 = vmul.f32 %v186, %v3836
    %v3841 = vmul.f32 %v187, %v3836
    %v3842 = vmul.f32 %v196, %v3836
    %v3843 = vmul.f32 %v3836, 0.0
    %v3851 = vcombine.low %v3837, %v3838
    %v3852 = vcombine.low %v3839, %v3840
    %v3854 = vunpack.c.l.s4 1983009808
    %v3855 = vunpack.c.0.s8 %v3854
    %v3856 = vlaneseq
    %v3857 = vshrl.u32 %v3856, 7
    %v3858 = vsub.s32 %v3855, %v3857
    %v3859 = vrot.slane %v3851, %v3858
    %v3861 = vunpack.c.l.s4 1983009808
    %v3862 = vunpack.c.0.s8 %v3861
    %v3863 = vlaneseq
    %v3864 = vshrl.u32 %v3863, 7
    %v3865 = vsub.s32 %v3862, %v3864
    %v3866 = vrot.slane %v3852, %v3865
    %v3867 = vcombine.low %v3859, %v3866
    %v3868 = vcombine.low %v3841, %v3842
    %v3870 = vunpack.c.l.s4 1983009808
    %v3871 = vunpack.c.0.s8 %v3870
    %v3872 = vlaneseq
    %v3873 = vshrl.u32 %v3872, 7
    %v3874 = vsub.s32 %v3871, %v3873
    %v3875 = vrot.slane %v3868, %v3874
    %v3877 = vunpack.c.l.s4 1983009808
    %v3878 = vunpack.c.0.s8 %v3877
    %v3879 = vlaneseq
    %v3880 = vshrl.u32 %v3879, 7
    %v3881 = vsub.s32 %v3878, %v3880
    %v3882 = vrot.slane %v3843, %v3881
    %v3883 = vcombine.low %v3875, %v3882
    %v3886 = vadd.f32 %v3833, %v3867
    %v3887 = vadd.f32 %v3834, %v3883
    %s3888 = sld [smem:[#allocation2 + $0x303]]
    %v3889 = vstv %s3888
    %v3890 = vmul.f32 %v226, %v3889
    %v3891 = vmul.f32 %v227, %v3889
    %v3892 = vmul.f32 %v228, %v3889
    %v3893 = vmul.f32 %v229, %v3889
    %v3894 = vmul.f32 %v230, %v3889
    %v3895 = vmul.f32 %v231, %v3889
    %v3896 = vmul.f32 %v232, %v3889
    %v3904 = vcombine.low %v3890, %v3891
    %v3905 = vcombine.low %v3892, %v3893
    %v3907 = vunpack.c.l.s4 1983009808
    %v3908 = vunpack.c.0.s8 %v3907
    %v3909 = vlaneseq
    %v3910 = vshrl.u32 %v3909, 7
    %v3911 = vsub.s32 %v3908, %v3910
    %v3912 = vrot.slane %v3904, %v3911
    %v3914 = vunpack.c.l.s4 1983009808
    %v3915 = vunpack.c.0.s8 %v3914
    %v3916 = vlaneseq
    %v3917 = vshrl.u32 %v3916, 7
    %v3918 = vsub.s32 %v3915, %v3917
    %v3919 = vrot.slane %v3905, %v3918
    %v3920 = vcombine.low %v3912, %v3919
    %v3921 = vcombine.low %v3894, %v3895
    %v3923 = vunpack.c.l.s4 1983009808
    %v3924 = vunpack.c.0.s8 %v3923
    %v3925 = vlaneseq
    %v3926 = vshrl.u32 %v3925, 7
    %v3927 = vsub.s32 %v3924, %v3926
    %v3928 = vrot.slane %v3921, %v3927
    %v3930 = vunpack.c.l.s4 1983009808
    %v3931 = vunpack.c.0.s8 %v3930
    %v3932 = vlaneseq
    %v3933 = vshrl.u32 %v3932, 7
    %v3934 = vsub.s32 %v3931, %v3933
    %v3935 = vrot.slane %v3896, %v3934
    %v3936 = vcombine.low %v3928, %v3935
    %v3939 = vadd.f32 %v3886, %v3920
    %v3940 = vadd.f32 %v3887, %v3936
    %s3941 = sld [smem:[#allocation5 + $0x6]]
    %v3942 = vstv %s3941
    %v3943 = vadd.f32 %v3939, %v3942
    %v3944 = vadd.f32 %v3940, %v3942
    %v3945 = vmax.f32 %v3943, 0.0
    %v3946 = vmax.f32 %v3944, 0.0
    %v3947 = vld [vmem:[%s4 + $0x1260] sm:$0xff]
    %v3948 = vld [vmem:[%s4 + $0x1268] sm:$0xff]
    %v3949 = vld [vmem:[%s4 + $0x1270] sm:$0xff]
    %v3950 = vld [vmem:[%s4 + $0x1278] sm:$0xff]
    %v3951 = vld [vmem:[%s4 + $0x1280] sm:$0xff]
    %v3952 = vld [vmem:[%s4 + $0x1288] sm:$0xff]
    %v3953 = vld [vmem:[%s4 + $0x1290] sm:$0xff]
    %v3954 = vld [vmem:[%s4 + $0x1298] sm:$0xff]
    %v3955 = vld [vmem:[%s4 + $0x12a0] sm:$0xff]
    %v3956 = vld [vmem:[%s4 + $0x12a8] sm:$0xff]
    %v3957 = vld [vmem:[%s4 + $0x12b0] sm:$0xff]
    %v3958 = vld [vmem:[%s4 + $0x12b8] sm:$0xff]
    %v3959 = vld [vmem:[%s4 + $0x12c0] sm:$0xff]
    %v3960 = vld [vmem:[%s4 + $0x12c8] sm:$0xff]
    %v3961 = vld [vmem:[%s4 + $0x12d0] sm:$0xff]
    %v3962 = vld [vmem:[%s4 + $0x12d8] sm:$0xff]
    %v3963 = vld [vmem:[%s4 + $0x12e0] sm:$0xff]
    %v3964 = vld [vmem:[%s4 + $0x12e8] sm:$0xff]
    %v3965 = vld [vmem:[%s4 + $0x12f0] sm:$0xff]
    %v3966 = vld [vmem:[%s4 + $0x12f8] sm:$0xff]
    %v3967 = vld [vmem:[%s4 + $0x1300] sm:$0xff]
    %v3968 = vld [vmem:[%s4 + $0x1308] sm:$0xff]
    %v3969 = vld [vmem:[%s4 + $0x1310] sm:$0xff]
    %v3970 = vld [vmem:[%s4 + $0x1318] sm:$0xff]
    %v3971 = vld [vmem:[%s4 + $0x1320] sm:$0xff]
    %v3972 = vld [vmem:[%s4 + $0x1328] sm:$0xff]
    %v3973 = vld [vmem:[%s4 + $0x1330] sm:$0xff]
    %v3974 = vld [vmem:[%s4 + $0x1338] sm:$0xff]
    %v3975 = vld [vmem:[%s4 + $0x1340] sm:$0xff]
    %v3976 = vld [vmem:[%s4 + $0x1348] sm:$0xff]
    %v3977 = vld [vmem:[%s4 + $0x1350] sm:$0xff]
    %v3978 = vld [vmem:[%s4 + $0x1358] sm:$0xff]
    %v3979 = vld [vmem:[%s4 + $0x1360] sm:$0xff]
    %v3980 = vld [vmem:[%s4 + $0x1368] sm:$0xff]
    %v3981 = vld [vmem:[%s4 + $0x1370] sm:$0xff]
    %v3982 = vld [vmem:[%s4 + $0x1378] sm:$0xff]
    %v3983 = vld [vmem:[%s4 + $0x1380] sm:$0xff]
    %v3984 = vld [vmem:[%s4 + $0x1388] sm:$0xff]
    %v3985 = vld [vmem:[%s4 + $0x1390] sm:$0xff]
    %v3986 = vld [vmem:[%s4 + $0x1398] sm:$0xff]
    %v3987 = vld [vmem:[%s4 + $0x13a0] sm:$0xff]
    %v3988 = vld [vmem:[%s4 + $0x13a8] sm:$0xff]
    %v3989 = vld [vmem:[%s4 + $0x13b0] sm:$0xff]
    %v3990 = vld [vmem:[%s4 + $0x13b8] sm:$0xff]
    %v3991 = vld [vmem:[%s4 + $0x13c0] sm:$0xff]
    %v3992 = vld [vmem:[%s4 + $0x13c8] sm:$0xff]
    %v3993 = vld [vmem:[%s4 + $0x13d0] sm:$0xff]
    %v3994 = vld [vmem:[%s4 + $0x13d8] sm:$0xff]
    %v3995 = vld [vmem:[%s4 + $0x13e0] sm:$0xff]
    %v3996 = vld [vmem:[%s4 + $0x13e8] sm:$0xff]
    %v3997 = vld [vmem:[%s4 + $0x13f0] sm:$0xff]
    %v3998 = vld [vmem:[%s4 + $0x13f8] sm:$0xff]
    %v3999 = vld [vmem:[%s4 + $0x1400] sm:$0xff]
    %v4000 = vld [vmem:[%s4 + $0x1408] sm:$0xff]
    %v4001 = vld [vmem:[%s4 + $0x1410] sm:$0xff]
    %v4002 = vld [vmem:[%s4 + $0x1418] sm:$0xff]
    %v4003 = vld [vmem:[%s4 + $0x1420] sm:$0xff]
    %v4004 = vld [vmem:[%s4 + $0x1428] sm:$0xff]
    %v4005 = vld [vmem:[%s4 + $0x1430] sm:$0xff]
    %v4006 = vld [vmem:[%s4 + $0x1438] sm:$0xff]
    %v4007 = vld [vmem:[%s4 + $0x1440] sm:$0xff]
    %v4008 = vld [vmem:[%s4 + $0x1448] sm:$0xff]
    %v4009 = vld [vmem:[%s4 + $0x1450] sm:$0xff]
    %v4010 = vld [vmem:[%s4 + $0x1458] sm:$0xff]
    %v4011 = vld [vmem:[%s4 + $0x1460] sm:$0xff]
    %v4012 = vld [vmem:[%s4 + $0x1468] sm:$0xff]
    %v4013 = vld [vmem:[%s4 + $0x1470] sm:$0xff]
    %v4014 = vld [vmem:[%s4 + $0x1478] sm:$0xff]
    %v4015 = vld [vmem:[%s4 + $0x1480] sm:$0xff]
    %v4016 = vld [vmem:[%s4 + $0x1488] sm:$0xff]
    %v4017 = vld [vmem:[%s4 + $0x1490] sm:$0xff]
    %v4018 = vld [vmem:[%s4 + $0x1498] sm:$0xff]
    %v4019 = vld [vmem:[%s4 + $0x14a0] sm:$0xff]
    %v4020 = vld [vmem:[%s4 + $0x14a8] sm:$0xff]
    %v4021 = vld [vmem:[%s4 + $0x14b0] sm:$0xff]
    %v4022 = vld [vmem:[%s4 + $0x14b8] sm:$0xff]
    %v4023 = vld [vmem:[%s4 + $0x14c0] sm:$0xff]
    %v4024 = vld [vmem:[%s4 + $0x14c8] sm:$0xff]
    %v4025 = vld [vmem:[%s4 + $0x14d0] sm:$0xff]
    %v4026 = vld [vmem:[%s4 + $0x14d8] sm:$0xff]
    %v4027 = vld [vmem:[%s4 + $0x14e0] sm:$0xff]
    %v4028 = vld [vmem:[%s4 + $0x14e8] sm:$0xff]
    %v4029 = vld [vmem:[%s4 + $0x14f0] sm:$0xff]
    %v4030 = vld [vmem:[%s4 + $0x14f8] sm:$0xff]
    %v4031 = vld [vmem:[%s4 + $0x1500] sm:$0xff]
    %v4032 = vld [vmem:[%s4 + $0x1508] sm:$0xff]
    %v4033 = vld [vmem:[%s4 + $0x1510] sm:$0xff]
    %v4034 = vld [vmem:[%s4 + $0x1518] sm:$0xff]
    %v4035 = vld [vmem:[%s4 + $0x1520] sm:$0xff]
    %v4036 = vld [vmem:[%s4 + $0x1528] sm:$0xff]
    %v4037 = vld [vmem:[%s4 + $0x1530] sm:$0xff]
    %v4038 = vld [vmem:[%s4 + $0x1538] sm:$0xff]
    %v4039 = vld [vmem:[%s4 + $0x1540] sm:$0xff]
    %v4040 = vld [vmem:[%s4 + $0x1548] sm:$0xff]
    %v4041 = vld [vmem:[%s4 + $0x1550] sm:$0xff]
    %v4042 = vld [vmem:[%s4 + $0x1558] sm:$0xff]
    %v4043 = vld [vmem:[%s4 + $0x1560] sm:$0xff]
    %v4044 = vld [vmem:[%s4 + $0x1568] sm:$0xff]
    %v4047 = vcombine.high %v3945, %v3945
    %v4049 = vunpack.c.l.s4 1983009808
    %v4050 = vunpack.c.0.s8 %v4049
    %v4051 = vlaneseq
    %v4052 = vshrl.u32 %v4051, 7
    %v4053 = vsub.s32 %v4050, %v4052
    %v4054 = vrot.slane %v3945, %v4053
    %v4056 = vunpack.c.l.s4 1983009808
    %v4057 = vunpack.c.0.s8 %v4056
    %v4058 = vlaneseq
    %v4059 = vshrl.u32 %v4058, 7
    %v4060 = vsub.s32 %v4057, %v4059
    %v4061 = vrot.slane %v4047, %v4060
    %v4062 = vcombine.high %v4054, %v4054
    %v4063 = vcombine.high %v4061, %v4061
    %v4064 = vcombine.high %v3946, %v3946
    %v4066 = vunpack.c.l.s4 1983009808
    %v4067 = vunpack.c.0.s8 %v4066
    %v4068 = vlaneseq
    %v4069 = vshrl.u32 %v4068, 7
    %v4070 = vsub.s32 %v4067, %v4069
    %v4071 = vrot.slane %v3946, %v4070
    %v4073 = vunpack.c.l.s4 1983009808
    %v4074 = vunpack.c.0.s8 %v4073
    %v4075 = vlaneseq
    %v4076 = vshrl.u32 %v4075, 7
    %v4077 = vsub.s32 %v4074, %v4076
    %v4078 = vrot.slane %v4064, %v4077
    %v4079 = vcombine.high %v4071, %v4071
    %v4086 = vsel %vm808, %v4078, 0
    %4088 = vmatprep.subr.mxu0 0.0
    %4089 = vmatpush1.msra.mxu0 %v3947
    %4090 = vmatprep.subr.mxu0 0.0
    %4091 = vmatpush1.msra.mxu0 %v3948
    %4092 = vmatprep.subr.mxu0 0.0
    %4093 = vmatpush1.msra.mxu0 %v3949
    %4094 = vmatprep.subr.mxu0 0.0
    %4095 = vmatpush1.msra.mxu0 %v3950
    %4096 = vmatprep.subr.mxu0 0.0
    %4097 = vmatpush1.msra.mxu0 %v3951
    %4098 = vmatprep.subr.mxu0 0.0
    %4099 = vmatpush1.msra.mxu0 %v3952
    %4100 = vmatprep.subr.mxu0 0.0
    %4101 = vmatpush1.msra.mxu0 %v3953
    %4102 = vmatprep.subr.mxu0 0.0
    %4103 = vmatpush1.msra.mxu0 %v3954
    %4104 = vmatprep.subr.mxu0 0.0
    %4105 = vmatpush1.msra.mxu0 %v3955
    %4106 = vmatprep.subr.mxu0 0.0
    %4107 = vmatpush1.msra.mxu0 %v3956
    %4108 = vmatprep.subr.mxu0 0.0
    %4109 = vmatpush1.msra.mxu0 %v3957
    %4110 = vmatprep.subr.mxu0 0.0
    %4111 = vmatpush1.msra.mxu0 %v3958
    %4112 = vmatprep.subr.mxu0 0.0
    %4113 = vmatpush1.msra.mxu0 %v3959
    %4114 = vmatprep.subr.mxu0 0.0
    %4115 = vmatpush1.msra.mxu0 %v3960
    %4116 = vmatprep.subr.mxu0 0.0
    %4117 = vmatpush1.msra.mxu0 %v3961
    %4118 = vmatprep.subr.mxu0 0.0
    %4119 = vmatpush1.msra.mxu0 %v3962
    %4120 = vmatprep.subr.mxu0 0.0
    %4121 = vmatpush1.msra.mxu0 %v3963
    %4122 = vmatprep.subr.mxu0 0.0
    %4123 = vmatpush1.msra.mxu0 %v3964
    %4124 = vmatprep.subr.mxu0 0.0
    %4125 = vmatpush1.msra.mxu0 %v3965
    %4126 = vmatprep.subr.mxu0 0.0
    %4127 = vmatpush1.msra.mxu0 %v3966
    %4128 = vmatprep.subr.mxu0 0.0
    %4129 = vmatpush1.msra.mxu0 %v3967
    %4130 = vmatprep.subr.mxu0 0.0
    %4131 = vmatpush1.msra.mxu0 %v3968
    %4132 = vmatprep.subr.mxu0 0.0
    %4133 = vmatpush1.msra.mxu0 %v3969
    %4134 = vmatprep.subr.mxu0 0.0
    %4135 = vmatpush1.msra.mxu0 %v3970
    %4136 = vmatprep.subr.mxu0 0.0
    %4137 = vmatpush1.msra.mxu0 %v3971
    %4138 = vmatprep.subr.mxu0 0.0
    %4139 = vmatpush1.msra.mxu0 %v3972
    %4140 = vmatprep.subr.mxu0 0.0
    %4141 = vmatpush1.msra.mxu0 %v3973
    %4142 = vmatprep.subr.mxu0 0.0
    %4143 = vmatpush1.msra.mxu0 %v3974
    %4144 = vmatprep.subr.mxu0 0.0
    %4145 = vmatpush1.msra.mxu0 %v3975
    %4146 = vmatprep.subr.mxu0 0.0
    %4147 = vmatpush1.msra.mxu0 %v3976
    %4148 = vmatprep.subr.mxu0 0.0
    %4149 = vmatpush1.msra.mxu0 %v3977
    %4150 = vmatprep.subr.mxu0 0.0
    %4151 = vmatpush1.msra.mxu0 %v3978
    %4152 = vmatprep.mubr.f32.mxu0 %v4062
    %4153 = vmatmul.mubr.f32.gmra.mrb[0].mxu0 %v4054
    %v4154 = vpop.f32.mrb[0].mxu0
    %v4155 = vadd.f32 0.0, %v4154
    %v4156 = vpop.f32.mrb[0].mxu0
    %4157 = vdwg.mxu0
    %4158 = vmatprep.subr.mxu0 0.0
    %4159 = vmatpush1.msra.mxu0 %v3979
    %4160 = vmatprep.subr.mxu0 0.0
    %4161 = vmatpush1.msra.mxu0 %v3980
    %4162 = vmatprep.subr.mxu0 0.0
    %4163 = vmatpush1.msra.mxu0 %v3981
    %4164 = vmatprep.subr.mxu0 0.0
    %4165 = vmatpush1.msra.mxu0 %v3982
    %4166 = vmatprep.subr.mxu0 0.0
    %4167 = vmatpush1.msra.mxu0 %v3983
    %4168 = vmatprep.subr.mxu0 0.0
    %4169 = vmatpush1.msra.mxu0 %v3984
    %4170 = vmatprep.subr.mxu0 0.0
    %4171 = vmatpush1.msra.mxu0 %v3985
    %4172 = vmatprep.subr.mxu0 0.0
    %4173 = vmatpush1.msra.mxu0 %v3986
    %4174 = vmatprep.subr.mxu0 0.0
    %4175 = vmatpush1.msra.mxu0 %v3987
    %4176 = vmatprep.subr.mxu0 0.0
    %4177 = vmatpush1.msra.mxu0 %v3988
    %4178 = vmatprep.subr.mxu0 0.0
    %4179 = vmatpush1.msra.mxu0 %v3989
    %4180 = vmatprep.subr.mxu0 0.0
    %4181 = vmatpush1.msra.mxu0 %v3990
    %4182 = vmatprep.subr.mxu0 0.0
    %4183 = vmatpush1.msra.mxu0 %v3991
    %4184 = vmatprep.subr.mxu0 0.0
    %4185 = vmatpush1.msra.mxu0 %v3992
    %4186 = vmatprep.subr.mxu0 0.0
    %4187 = vmatpush1.msra.mxu0 %v3993
    %4188 = vmatprep.subr.mxu0 0.0
    %4189 = vmatpush1.msra.mxu0 %v3994
    %4190 = vmatprep.subr.mxu0 0.0
    %4191 = vmatpush1.msra.mxu0 %v3995
    %4192 = vmatprep.subr.mxu0 0.0
    %4193 = vmatpush1.msra.mxu0 %v3996
    %4194 = vmatprep.subr.mxu0 0.0
    %4195 = vmatpush1.msra.mxu0 %v3997
    %4196 = vmatprep.subr.mxu0 0.0
    %4197 = vmatpush1.msra.mxu0 %v3998
    %4198 = vmatprep.subr.mxu0 0.0
    %4199 = vmatpush1.msra.mxu0 %v3999
    %4200 = vmatprep.subr.mxu0 0.0
    %4201 = vmatpush1.msra.mxu0 %v4000
    %4202 = vmatprep.subr.mxu0 0.0
    %4203 = vmatpush1.msra.mxu0 %v4001
    %4204 = vmatprep.subr.mxu0 0.0
    %4205 = vmatpush1.msra.mxu0 %v4002
    %4206 = vmatprep.subr.mxu0 0.0
    %4207 = vmatpush1.msra.mxu0 %v4003
    %4208 = vmatprep.subr.mxu0 0.0
    %4209 = vmatpush1.msra.mxu0 %v4004
    %4210 = vmatprep.subr.mxu0 0.0
    %4211 = vmatpush1.msra.mxu0 %v4005
    %4212 = vmatprep.subr.mxu0 0.0
    %4213 = vmatpush1.msra.mxu0 %v4006
    %4214 = vmatprep.subr.mxu0 0.0
    %4215 = vmatpush1.msra.mxu0 %v4007
    %4216 = vmatprep.subr.mxu0 0.0
    %4217 = vmatpush1.msra.mxu0 %v4008
    %4218 = vmatprep.subr.mxu0 0.0
    %4219 = vmatpush1.msra.mxu0 %v4009
    %4220 = vmatprep.subr.mxu0 0.0
    %4221 = vmatpush1.msra.mxu0 %v4010
    %4222 = vmatprep.mubr.f32.mxu0 %v4063
    %4223 = vmatmul.mubr.f32.gmra.mrb[0].mxu0 %v4061
    %v4224 = vpop.f32.mrb[0].mxu0
    %v4225 = vadd.f32 %v4155, %v4224
    %v4226 = vpop.f32.mrb[0].mxu0
    %4227 = vdwg.mxu0
    %4228 = vmatprep.subr.mxu0 0.0
    %4229 = vmatpush1.msra.mxu0 %v4011
    %4230 = vmatprep.subr.mxu0 0.0
    %4231 = vmatpush1.msra.mxu0 %v4012
    %4232 = vmatprep.subr.mxu0 0.0
    %4233 = vmatpush1.msra.mxu0 %v4013
    %4234 = vmatprep.subr.mxu0 0.0
    %4235 = vmatpush1.msra.mxu0 %v4014
    %4236 = vmatprep.subr.mxu0 0.0
    %4237 = vmatpush1.msra.mxu0 %v4015
    %4238 = vmatprep.subr.mxu0 0.0
    %4239 = vmatpush1.msra.mxu0 %v4016
    %4240 = vmatprep.subr.mxu0 0.0
    %4241 = vmatpush1.msra.mxu0 %v4017
    %4242 = vmatprep.subr.mxu0 0.0
    %4243 = vmatpush1.msra.mxu0 %v4018
    %4244 = vmatprep.subr.mxu0 0.0
    %4245 = vmatpush1.msra.mxu0 %v4019
    %4246 = vmatprep.subr.mxu0 0.0
    %4247 = vmatpush1.msra.mxu0 %v4020
    %4248 = vmatprep.subr.mxu0 0.0
    %4249 = vmatpush1.msra.mxu0 %v4021
    %4250 = vmatprep.subr.mxu0 0.0
    %4251 = vmatpush1.msra.mxu0 %v4022
    %4252 = vmatprep.subr.mxu0 0.0
    %4253 = vmatpush1.msra.mxu0 %v4023
    %4254 = vmatprep.subr.mxu0 0.0
    %4255 = vmatpush1.msra.mxu0 %v4024
    %4256 = vmatprep.subr.mxu0 0.0
    %4257 = vmatpush1.msra.mxu0 %v4025
    %4258 = vmatprep.subr.mxu0 0.0
    %4259 = vmatpush1.msra.mxu0 %v4026
    %4260 = vmatprep.subr.mxu0 0.0
    %4261 = vmatpush1.msra.mxu0 %v4027
    %4262 = vmatprep.subr.mxu0 0.0
    %4263 = vmatpush1.msra.mxu0 %v4028
    %4264 = vmatprep.subr.mxu0 0.0
    %4265 = vmatpush1.msra.mxu0 %v4029
    %4266 = vmatprep.subr.mxu0 0.0
    %4267 = vmatpush1.msra.mxu0 %v4030
    %4268 = vmatprep.subr.mxu0 0.0
    %4269 = vmatpush1.msra.mxu0 %v4031
    %4270 = vmatprep.subr.mxu0 0.0
    %4271 = vmatpush1.msra.mxu0 %v4032
    %4272 = vmatprep.subr.mxu0 0.0
    %4273 = vmatpush1.msra.mxu0 %v4033
    %4274 = vmatprep.subr.mxu0 0.0
    %4275 = vmatpush1.msra.mxu0 %v4034
    %4276 = vmatprep.subr.mxu0 0.0
    %4277 = vmatpush1.msra.mxu0 %v4035
    %4278 = vmatprep.subr.mxu0 0.0
    %4279 = vmatpush1.msra.mxu0 %v4036
    %4280 = vmatprep.subr.mxu0 0.0
    %4281 = vmatpush1.msra.mxu0 %v4037
    %4282 = vmatprep.subr.mxu0 0.0
    %4283 = vmatpush1.msra.mxu0 %v4038
    %4284 = vmatprep.subr.mxu0 0.0
    %4285 = vmatpush1.msra.mxu0 %v4039
    %4286 = vmatprep.subr.mxu0 0.0
    %4287 = vmatpush1.msra.mxu0 %v4040
    %4288 = vmatprep.subr.mxu0 0.0
    %4289 = vmatpush1.msra.mxu0 %v4041
    %4290 = vmatprep.subr.mxu0 0.0
    %4291 = vmatpush1.msra.mxu0 %v4042
    %4292 = vmatprep.mubr.f32.mxu0 %v4079
    %4293 = vmatmul.mubr.f32.gmra.mrb[0].mxu0 %v4071
    %v4294 = vpop.f32.mrb[0].mxu0
    %v4295 = vadd.f32 %v4225, %v4294
    %v4296 = vpop.f32.mrb[0].mxu0
    %4297 = vdwg.mxu0
    %4298 = vmatprep.subr.mxu0 0.0
    %4299 = vmatpush1.msra.mxu0 %v4043
    %4300 = vmatprep.subr.mxu0 0.0
    %4301 = vmatpush1.msra.mxu0 %v4044
    %4302 = vmatprep.subr.mxu0 0.0
    %4303 = vmatpush1.msra.mxu0 0.0
    %4304 = vmatprep.subr.mxu0 0.0
    %4305 = vmatpush1.msra.mxu0 0.0
    %4306 = vmatprep.subr.mxu0 0.0
    %4307 = vmatpush1.msra.mxu0 0.0
    %4308 = vmatprep.subr.mxu0 0.0
    %4309 = vmatpush1.msra.mxu0 0.0
    %4310 = vmatprep.subr.mxu0 0.0
    %4311 = vmatpush1.msra.mxu0 0.0
    %4312 = vmatprep.subr.mxu0 0.0
    %4313 = vmatpush1.msra.mxu0 0.0
    %4314 = vmatprep.subr.mxu0 0.0
    %4315 = vmatpush1.msra.mxu0 0.0
    %4316 = vmatprep.subr.mxu0 0.0
    %4317 = vmatpush1.msra.mxu0 0.0
    %4318 = vmatprep.subr.mxu0 0.0
    %4319 = vmatpush1.msra.mxu0 0.0
    %4320 = vmatprep.subr.mxu0 0.0
    %4321 = vmatpush1.msra.mxu0 0.0
    %4322 = vmatprep.subr.mxu0 0.0
    %4323 = vmatpush1.msra.mxu0 0.0
    %4324 = vmatprep.subr.mxu0 0.0
    %4325 = vmatpush1.msra.mxu0 0.0
    %4326 = vmatprep.subr.mxu0 0.0
    %4327 = vmatpush1.msra.mxu0 0.0
    %4328 = vmatprep.subr.mxu0 0.0
    %4329 = vmatpush1.msra.mxu0 0.0
    %4330 = vmatprep.subr.mxu0 0.0
    %4331 = vmatpush1.msra.mxu0 0.0
    %4332 = vmatprep.subr.mxu0 0.0
    %4333 = vmatpush1.msra.mxu0 0.0
    %4334 = vmatprep.subr.mxu0 0.0
    %4335 = vmatpush1.msra.mxu0 0.0
    %4336 = vmatprep.subr.mxu0 0.0
    %4337 = vmatpush1.msra.mxu0 0.0
    %4338 = vmatprep.subr.mxu0 0.0
    %4339 = vmatpush1.msra.mxu0 0.0
    %4340 = vmatprep.subr.mxu0 0.0
    %4341 = vmatpush1.msra.mxu0 0.0
    %4342 = vmatprep.subr.mxu0 0.0
    %4343 = vmatpush1.msra.mxu0 0.0
    %4344 = vmatprep.subr.mxu0 0.0
    %4345 = vmatpush1.msra.mxu0 0.0
    %4346 = vmatprep.subr.mxu0 0.0
    %4347 = vmatpush1.msra.mxu0 0.0
    %4348 = vmatprep.subr.mxu0 0.0
    %4349 = vmatpush1.msra.mxu0 0.0
    %4350 = vmatprep.subr.mxu0 0.0
    %4351 = vmatpush1.msra.mxu0 0.0
    %4352 = vmatprep.subr.mxu0 0.0
    %4353 = vmatpush1.msra.mxu0 0.0
    %4354 = vmatprep.subr.mxu0 0.0
    %4355 = vmatpush1.msra.mxu0 0.0
    %4356 = vmatprep.subr.mxu0 0.0
    %4357 = vmatpush1.msra.mxu0 0.0
    %4358 = vmatprep.subr.mxu0 0.0
    %4359 = vmatpush1.msra.mxu0 0.0
    %4360 = vmatprep.subr.mxu0 0.0
    %4361 = vmatpush1.msra.mxu0 0.0
    %4362 = vmatprep.mubr.f32.mxu0 0.0
    %4363 = vmatmul.mubr.f32.gmra.mrb[0].mxu0 %v4086
    %v4364 = vpop.f32.mrb[0].mxu0
    %v4365 = vadd.f32 %v4295, %v4364
    %v4366 = vpop.f32.mrb[0].mxu0
    %4367 = vdwg.mxu0
    %v4368 = vadd.f32 %v3777, %v4365
    %s4369 = sld [smem:[#allocation2 + $0x380]]
    %v4370 = vstv %s4369
    %v4371 = vmul.f32 %v57, %v4370
    %v4372 = vmul.f32 %v58, %v4370
    %s4373 = sld [smem:[#allocation2 + $0x381]]
    %v4374 = vstv %s4373
    %v4375 = vmul.f32 %v161, %v4374
    %v4376 = vmul.f32 %v162, %v4374
    %v4377 = vmul.f32 %v163, %v4374
    %v4378 = vmul.f32 %v164, %v4374
    %v4379 = vmul.f32 %v165, %v4374
    %v4380 = vmul.f32 %v166, %v4374
    %v4381 = vmul.f32 %v167, %v4374
    %v4389 = vcombine.low %v4375, %v4376
    %v4390 = vcombine.low %v4377, %v4378
    %v4392 = vunpack.c.l.s4 1983009808
    %v4393 = vunpack.c.0.s8 %v4392
    %v4394 = vlaneseq
    %v4395 = vshrl.u32 %v4394, 7
    %v4396 = vsub.s32 %v4393, %v4395
    %v4397 = vrot.slane %v4389, %v4396
    %v4399 = vunpack.c.l.s4 1983009808
    %v4400 = vunpack.c.0.s8 %v4399
    %v4401 = vlaneseq
    %v4402 = vshrl.u32 %v4401, 7
    %v4403 = vsub.s32 %v4400, %v4402
    %v4404 = vrot.slane %v4390, %v4403
    %v4405 = vcombine.low %v4397, %v4404
    %v4406 = vcombine.low %v4379, %v4380
    %v4408 = vunpack.c.l.s4 1983009808
    %v4409 = vunpack.c.0.s8 %v4408
    %v4410 = vlaneseq
    %v4411 = vshrl.u32 %v4410, 7
    %v4412 = vsub.s32 %v4409, %v4411
    %v4413 = vrot.slane %v4406, %v4412
    %v4415 = vunpack.c.l.s4 1983009808
    %v4416 = vunpack.c.0.s8 %v4415
    %v4417 = vlaneseq
    %v4418 = vshrl.u32 %v4417, 7
    %v4419 = vsub.s32 %v4416, %v4418
    %v4420 = vrot.slane %v4381, %v4419
    %v4421 = vcombine.low %v4413, %v4420
    %v4424 = vadd.f32 %v4371, %v4405
    %v4425 = vadd.f32 %v4372, %v4421
    %s4426 = sld [smem:[#allocation2 + $0x382]]
    %v4427 = vstv %s4426
    %v4428 = vmul.f32 %v183, %v4427
    %v4429 = vmul.f32 %v184, %v4427
    %v4430 = vmul.f32 %v185, %v4427
    %v4431 = vmul.f32 %v186, %v4427
    %v4432 = vmul.f32 %v187, %v4427
    %v4433 = vmul.f32 %v196, %v4427
    %v4434 = vmul.f32 %v4427, 0.0
    %v4442 = vcombine.low %v4428, %v4429
    %v4443 = vcombine.low %v4430, %v4431
    %v4445 = vunpack.c.l.s4 1983009808
    %v4446 = vunpack.c.0.s8 %v4445
    %v4447 = vlaneseq
    %v4448 = vshrl.u32 %v4447, 7
    %v4449 = vsub.s32 %v4446, %v4448
    %v4450 = vrot.slane %v4442, %v4449
    %v4452 = vunpack.c.l.s4 1983009808
    %v4453 = vunpack.c.0.s8 %v4452
    %v4454 = vlaneseq
    %v4455 = vshrl.u32 %v4454, 7
    %v4456 = vsub.s32 %v4453, %v4455
    %v4457 = vrot.slane %v4443, %v4456
    %v4458 = vcombine.low %v4450, %v4457
    %v4459 = vcombine.low %v4432, %v4433
    %v4461 = vunpack.c.l.s4 1983009808
    %v4462 = vunpack.c.0.s8 %v4461
    %v4463 = vlaneseq
    %v4464 = vshrl.u32 %v4463, 7
    %v4465 = vsub.s32 %v4462, %v4464
    %v4466 = vrot.slane %v4459, %v4465
    %v4468 = vunpack.c.l.s4 1983009808
    %v4469 = vunpack.c.0.s8 %v4468
    %v4470 = vlaneseq
    %v4471 = vshrl.u32 %v4470, 7
    %v4472 = vsub.s32 %v4469, %v4471
    %v4473 = vrot.slane %v4434, %v4472
    %v4474 = vcombine.low %v4466, %v4473
    %v4477 = vadd.f32 %v4424, %v4458
    %v4478 = vadd.f32 %v4425, %v4474
    %s4479 = sld [smem:[#allocation2 + $0x383]]
    %v4480 = vstv %s4479
    %v4481 = vmul.f32 %v226, %v4480
    %v4482 = vmul.f32 %v227, %v4480
    %v4483 = vmul.f32 %v228, %v4480
    %v4484 = vmul.f32 %v229, %v4480
    %v4485 = vmul.f32 %v230, %v4480
    %v4486 = vmul.f32 %v231, %v4480
    %v4487 = vmul.f32 %v232, %v4480
    %v4495 = vcombine.low %v4481, %v4482
    %v4496 = vcombine.low %v4483, %v4484
    %v4498 = vunpack.c.l.s4 1983009808
    %v4499 = vunpack.c.0.s8 %v4498
    %v4500 = vlaneseq
    %v4501 = vshrl.u32 %v4500, 7
    %v4502 = vsub.s32 %v4499, %v4501
    %v4503 = vrot.slane %v4495, %v4502
    %v4505 = vunpack.c.l.s4 1983009808
    %v4506 = vunpack.c.0.s8 %v4505
    %v4507 = vlaneseq
    %v4508 = vshrl.u32 %v4507, 7
    %v4509 = vsub.s32 %v4506, %v4508
    %v4510 = vrot.slane %v4496, %v4509
    %v4511 = vcombine.low %v4503, %v4510
    %v4512 = vcombine.low %v4485, %v4486
    %v4514 = vunpack.c.l.s4 1983009808
    %v4515 = vunpack.c.0.s8 %v4514
    %v4516 = vlaneseq
    %v4517 = vshrl.u32 %v4516, 7
    %v4518 = vsub.s32 %v4515, %v4517
    %v4519 = vrot.slane %v4512, %v4518
    %v4521 = vunpack.c.l.s4 1983009808
    %v4522 = vunpack.c.0.s8 %v4521
    %v4523 = vlaneseq
    %v4524 = vshrl.u32 %v4523, 7
    %v4525 = vsub.s32 %v4522, %v4524
    %v4526 = vrot.slane %v4487, %v4525
    %v4527 = vcombine.low %v4519, %v4526
    %v4530 = vadd.f32 %v4477, %v4511
    %v4531 = vadd.f32 %v4478, %v4527
    %s4532 = sld [smem:[#allocation5 + $0x7]]
    %v4533 = vstv %s4532
    %v4534 = vadd.f32 %v4530, %v4533
    %v4535 = vadd.f32 %v4531, %v4533
    %v4536 = vmax.f32 %v4534, 0.0
    %v4537 = vmax.f32 %v4535, 0.0
    %v4538 = vld [vmem:[%s4 + $0x1570] sm:$0xff]
    %v4539 = vld [vmem:[%s4 + $0x1578] sm:$0xff]
    %v4540 = vld [vmem:[%s4 + $0x1580] sm:$0xff]
    %v4541 = vld [vmem:[%s4 + $0x1588] sm:$0xff]
    %v4542 = vld [vmem:[%s4 + $0x1590] sm:$0xff]
    %v4543 = vld [vmem:[%s4 + $0x1598] sm:$0xff]
    %v4544 = vld [vmem:[%s4 + $0x15a0] sm:$0xff]
    %v4545 = vld [vmem:[%s4 + $0x15a8] sm:$0xff]
    %v4546 = vld [vmem:[%s4 + $0x15b0] sm:$0xff]
    %v4547 = vld [vmem:[%s4 + $0x15b8] sm:$0xff]
    %v4548 = vld [vmem:[%s4 + $0x15c0] sm:$0xff]
    %v4549 = vld [vmem:[%s4 + $0x15c8] sm:$0xff]
    %v4550 = vld [vmem:[%s4 + $0x15d0] sm:$0xff]
    %v4551 = vld [vmem:[%s4 + $0x15d8] sm:$0xff]
    %v4552 = vld [vmem:[%s4 + $0x15e0] sm:$0xff]
    %v4553 = vld [vmem:[%s4 + $0x15e8] sm:$0xff]
    %v4554 = vld [vmem:[%s4 + $0x15f0] sm:$0xff]
    %v4555 = vld [vmem:[%s4 + $0x15f8] sm:$0xff]
    %v4556 = vld [vmem:[%s4 + $0x1600] sm:$0xff]
    %v4557 = vld [vmem:[%s4 + $0x1608] sm:$0xff]
    %v4558 = vld [vmem:[%s4 + $0x1610] sm:$0xff]
    %v4559 = vld [vmem:[%s4 + $0x1618] sm:$0xff]
    %v4560 = vld [vmem:[%s4 + $0x1620] sm:$0xff]
    %v4561 = vld [vmem:[%s4 + $0x1628] sm:$0xff]
    %v4562 = vld [vmem:[%s4 + $0x1630] sm:$0xff]
    %v4563 = vld [vmem:[%s4 + $0x1638] sm:$0xff]
    %v4564 = vld [vmem:[%s4 + $0x1640] sm:$0xff]
    %v4565 = vld [vmem:[%s4 + $0x1648] sm:$0xff]
    %v4566 = vld [vmem:[%s4 + $0x1650] sm:$0xff]
    %v4567 = vld [vmem:[%s4 + $0x1658] sm:$0xff]
    %v4568 = vld [vmem:[%s4 + $0x1660] sm:$0xff]
    %v4569 = vld [vmem:[%s4 + $0x1668] sm:$0xff]
    %v4570 = vld [vmem:[%s4 + $0x1670] sm:$0xff]
    %v4571 = vld [vmem:[%s4 + $0x1678] sm:$0xff]
    %v4572 = vld [vmem:[%s4 + $0x1680] sm:$0xff]
    %v4573 = vld [vmem:[%s4 + $0x1688] sm:$0xff]
    %v4574 = vld [vmem:[%s4 + $0x1690] sm:$0xff]
    %v4575 = vld [vmem:[%s4 + $0x1698] sm:$0xff]
    %v4576 = vld [vmem:[%s4 + $0x16a0] sm:$0xff]
    %v4577 = vld [vmem:[%s4 + $0x16a8] sm:$0xff]
    %v4578 = vld [vmem:[%s4 + $0x16b0] sm:$0xff]
    %v4579 = vld [vmem:[%s4 + $0x16b8] sm:$0xff]
    %v4580 = vld [vmem:[%s4 + $0x16c0] sm:$0xff]
    %v4581 = vld [vmem:[%s4 + $0x16c8] sm:$0xff]
    %v4582 = vld [vmem:[%s4 + $0x16d0] sm:$0xff]
    %v4583 = vld [vmem:[%s4 + $0x16d8] sm:$0xff]
    %v4584 = vld [vmem:[%s4 + $0x16e0] sm:$0xff]
    %v4585 = vld [vmem:[%s4 + $0x16e8] sm:$0xff]
    %v4586 = vld [vmem:[%s4 + $0x16f0] sm:$0xff]
    %v4587 = vld [vmem:[%s4 + $0x16f8] sm:$0xff]
    %v4588 = vld [vmem:[%s4 + $0x1700] sm:$0xff]
    %v4589 = vld [vmem:[%s4 + $0x1708] sm:$0xff]
    %v4590 = vld [vmem:[%s4 + $0x1710] sm:$0xff]
    %v4591 = vld [vmem:[%s4 + $0x1718] sm:$0xff]
    %v4592 = vld [vmem:[%s4 + $0x1720] sm:$0xff]
    %v4593 = vld [vmem:[%s4 + $0x1728] sm:$0xff]
    %v4594 = vld [vmem:[%s4 + $0x1730] sm:$0xff]
    %v4595 = vld [vmem:[%s4 + $0x1738] sm:$0xff]
    %v4596 = vld [vmem:[%s4 + $0x1740] sm:$0xff]
    %v4597 = vld [vmem:[%s4 + $0x1748] sm:$0xff]
    %v4598 = vld [vmem:[%s4 + $0x1750] sm:$0xff]
    %v4599 = vld [vmem:[%s4 + $0x1758] sm:$0xff]
    %v4600 = vld [vmem:[%s4 + $0x1760] sm:$0xff]
    %v4601 = vld [vmem:[%s4 + $0x1768] sm:$0xff]
    %v4602 = vld [vmem:[%s4 + $0x1770] sm:$0xff]
    %v4603 = vld [vmem:[%s4 + $0x1778] sm:$0xff]
    %v4604 = vld [vmem:[%s4 + $0x1780] sm:$0xff]
    %v4605 = vld [vmem:[%s4 + $0x1788] sm:$0xff]
    %v4606 = vld [vmem:[%s4 + $0x1790] sm:$0xff]
    %v4607 = vld [vmem:[%s4 + $0x1798] sm:$0xff]
    %v4608 = vld [vmem:[%s4 + $0x17a0] sm:$0xff]
    %v4609 = vld [vmem:[%s4 + $0x17a8] sm:$0xff]
    %v4610 = vld [vmem:[%s4 + $0x17b0] sm:$0xff]
    %v4611 = vld [vmem:[%s4 + $0x17b8] sm:$0xff]
    %v4612 = vld [vmem:[%s4 + $0x17c0] sm:$0xff]
    %v4613 = vld [vmem:[%s4 + $0x17c8] sm:$0xff]
    %v4614 = vld [vmem:[%s4 + $0x17d0] sm:$0xff]
    %v4615 = vld [vmem:[%s4 + $0x17d8] sm:$0xff]
    %v4616 = vld [vmem:[%s4 + $0x17e0] sm:$0xff]
    %v4617 = vld [vmem:[%s4 + $0x17e8] sm:$0xff]
    %v4618 = vld [vmem:[%s4 + $0x17f0] sm:$0xff]
    %v4619 = vld [vmem:[%s4 + $0x17f8] sm:$0xff]
    %v4620 = vld [vmem:[%s4 + $0x1800] sm:$0xff]
    %v4621 = vld [vmem:[%s4 + $0x1808] sm:$0xff]
    %v4622 = vld [vmem:[%s4 + $0x1810] sm:$0xff]
    %v4623 = vld [vmem:[%s4 + $0x1818] sm:$0xff]
    %v4624 = vld [vmem:[%s4 + $0x1820] sm:$0xff]
    %v4625 = vld [vmem:[%s4 + $0x1828] sm:$0xff]
    %v4626 = vld [vmem:[%s4 + $0x1830] sm:$0xff]
    %v4627 = vld [vmem:[%s4 + $0x1838] sm:$0xff]
    %v4628 = vld [vmem:[%s4 + $0x1840] sm:$0xff]
    %v4629 = vld [vmem:[%s4 + $0x1848] sm:$0xff]
    %v4630 = vld [vmem:[%s4 + $0x1850] sm:$0xff]
    %v4631 = vld [vmem:[%s4 + $0x1858] sm:$0xff]
    %v4632 = vld [vmem:[%s4 + $0x1860] sm:$0xff]
    %v4633 = vld [vmem:[%s4 + $0x1868] sm:$0xff]
    %v4634 = vld [vmem:[%s4 + $0x1870] sm:$0xff]
    %v4635 = vld [vmem:[%s4 + $0x1878] sm:$0xff]
    %v4638 = vcombine.high %v4536, %v4536
    %v4640 = vunpack.c.l.s4 1983009808
    %v4641 = vunpack.c.0.s8 %v4640
    %v4642 = vlaneseq
    %v4643 = vshrl.u32 %v4642, 7
    %v4644 = vsub.s32 %v4641, %v4643
    %v4645 = vrot.slane %v4536, %v4644
    %v4647 = vunpack.c.l.s4 1983009808
    %v4648 = vunpack.c.0.s8 %v4647
    %v4649 = vlaneseq
    %v4650 = vshrl.u32 %v4649, 7
    %v4651 = vsub.s32 %v4648, %v4650
    %v4652 = vrot.slane %v4638, %v4651
    %v4653 = vcombine.high %v4645, %v4645
    %v4654 = vcombine.high %v4652, %v4652
    %v4655 = vcombine.high %v4537, %v4537
    %v4657 = vunpack.c.l.s4 1983009808
    %v4658 = vunpack.c.0.s8 %v4657
    %v4659 = vlaneseq
    %v4660 = vshrl.u32 %v4659, 7
    %v4661 = vsub.s32 %v4658, %v4660
    %v4662 = vrot.slane %v4537, %v4661
    %v4664 = vunpack.c.l.s4 1983009808
    %v4665 = vunpack.c.0.s8 %v4664
    %v4666 = vlaneseq
    %v4667 = vshrl.u32 %v4666, 7
    %v4668 = vsub.s32 %v4665, %v4667
    %v4669 = vrot.slane %v4655, %v4668
    %v4670 = vcombine.high %v4662, %v4662
    %v4677 = vsel %vm808, %v4669, 0
    %4679 = vmatprep.subr.mxu0 0.0
    %4680 = vmatpush1.msra.mxu0 %v4538
    %4681 = vmatprep.subr.mxu0 0.0
    %4682 = vmatpush1.msra.mxu0 %v4539
    %4683 = vmatprep.subr.mxu0 0.0
    %4684 = vmatpush1.msra.mxu0 %v4540
    %4685 = vmatprep.subr.mxu0 0.0
    %4686 = vmatpush1.msra.mxu0 %v4541
    %4687 = vmatprep.subr.mxu0 0.0
    %4688 = vmatpush1.msra.mxu0 %v4542
    %4689 = vmatprep.subr.mxu0 0.0
    %4690 = vmatpush1.msra.mxu0 %v4543
    %4691 = vmatprep.subr.mxu0 0.0
    %4692 = vmatpush1.msra.mxu0 %v4544
    %4693 = vmatprep.subr.mxu0 0.0
    %4694 = vmatpush1.msra.mxu0 %v4545
    %4695 = vmatprep.subr.mxu0 0.0
    %4696 = vmatpush1.msra.mxu0 %v4546
    %4697 = vmatprep.subr.mxu0 0.0
    %4698 = vmatpush1.msra.mxu0 %v4547
    %4699 = vmatprep.subr.mxu0 0.0
    %4700 = vmatpush1.msra.mxu0 %v4548
    %4701 = vmatprep.subr.mxu0 0.0
    %4702 = vmatpush1.msra.mxu0 %v4549
    %4703 = vmatprep.subr.mxu0 0.0
    %4704 = vmatpush1.msra.mxu0 %v4550
    %4705 = vmatprep.subr.mxu0 0.0
    %4706 = vmatpush1.msra.mxu0 %v4551
    %4707 = vmatprep.subr.mxu0 0.0
    %4708 = vmatpush1.msra.mxu0 %v4552
    %4709 = vmatprep.subr.mxu0 0.0
    %4710 = vmatpush1.msra.mxu0 %v4553
    %4711 = vmatprep.subr.mxu0 0.0
    %4712 = vmatpush1.msra.mxu0 %v4554
    %4713 = vmatprep.subr.mxu0 0.0
    %4714 = vmatpush1.msra.mxu0 %v4555
    %4715 = vmatprep.subr.mxu0 0.0
    %4716 = vmatpush1.msra.mxu0 %v4556
    %4717 = vmatprep.subr.mxu0 0.0
    %4718 = vmatpush1.msra.mxu0 %v4557
    %4719 = vmatprep.subr.mxu0 0.0
    %4720 = vmatpush1.msra.mxu0 %v4558
    %4721 = vmatprep.subr.mxu0 0.0
    %4722 = vmatpush1.msra.mxu0 %v4559
    %4723 = vmatprep.subr.mxu0 0.0
    %4724 = vmatpush1.msra.mxu0 %v4560
    %4725 = vmatprep.subr.mxu0 0.0
    %4726 = vmatpush1.msra.mxu0 %v4561
    %4727 = vmatprep.subr.mxu0 0.0
    %4728 = vmatpush1.msra.mxu0 %v4562
    %4729 = vmatprep.subr.mxu0 0.0
    %4730 = vmatpush1.msra.mxu0 %v4563
    %4731 = vmatprep.subr.mxu0 0.0
    %4732 = vmatpush1.msra.mxu0 %v4564
    %4733 = vmatprep.subr.mxu0 0.0
    %4734 = vmatpush1.msra.mxu0 %v4565
    %4735 = vmatprep.subr.mxu0 0.0
    %4736 = vmatpush1.msra.mxu0 %v4566
    %4737 = vmatprep.subr.mxu0 0.0
    %4738 = vmatpush1.msra.mxu0 %v4567
    %4739 = vmatprep.subr.mxu0 0.0
    %4740 = vmatpush1.msra.mxu0 %v4568
    %4741 = vmatprep.subr.mxu0 0.0
    %4742 = vmatpush1.msra.mxu0 %v4569
    %4743 = vmatprep.mubr.f32.mxu0 %v4653
    %4744 = vmatmul.mubr.f32.gmra.mrb[0].mxu0 %v4645
    %v4745 = vpop.f32.mrb[0].mxu0
    %v4746 = vadd.f32 0.0, %v4745
    %v4747 = vpop.f32.mrb[0].mxu0
    %4748 = vdwg.mxu0
    %4749 = vmatprep.subr.mxu0 0.0
    %4750 = vmatpush1.msra.mxu0 %v4570
    %4751 = vmatprep.subr.mxu0 0.0
    %4752 = vmatpush1.msra.mxu0 %v4571
    %4753 = vmatprep.subr.mxu0 0.0
    %4754 = vmatpush1.msra.mxu0 %v4572
    %4755 = vmatprep.subr.mxu0 0.0
    %4756 = vmatpush1.msra.mxu0 %v4573
    %4757 = vmatprep.subr.mxu0 0.0
    %4758 = vmatpush1.msra.mxu0 %v4574
    %4759 = vmatprep.subr.mxu0 0.0
    %4760 = vmatpush1.msra.mxu0 %v4575
    %4761 = vmatprep.subr.mxu0 0.0
    %4762 = vmatpush1.msra.mxu0 %v4576
    %4763 = vmatprep.subr.mxu0 0.0
    %4764 = vmatpush1.msra.mxu0 %v4577
    %4765 = vmatprep.subr.mxu0 0.0
    %4766 = vmatpush1.msra.mxu0 %v4578
    %4767 = vmatprep.subr.mxu0 0.0
    %4768 = vmatpush1.msra.mxu0 %v4579
    %4769 = vmatprep.subr.mxu0 0.0
    %4770 = vmatpush1.msra.mxu0 %v4580
    %4771 = vmatprep.subr.mxu0 0.0
    %4772 = vmatpush1.msra.mxu0 %v4581
    %4773 = vmatprep.subr.mxu0 0.0
    %4774 = vmatpush1.msra.mxu0 %v4582
    %4775 = vmatprep.subr.mxu0 0.0
    %4776 = vmatpush1.msra.mxu0 %v4583
    %4777 = vmatprep.subr.mxu0 0.0
    %4778 = vmatpush1.msra.mxu0 %v4584
    %4779 = vmatprep.subr.mxu0 0.0
    %4780 = vmatpush1.msra.mxu0 %v4585
    %4781 = vmatprep.subr.mxu0 0.0
    %4782 = vmatpush1.msra.mxu0 %v4586
    %4783 = vmatprep.subr.mxu0 0.0
    %4784 = vmatpush1.msra.mxu0 %v4587
    %4785 = vmatprep.subr.mxu0 0.0
    %4786 = vmatpush1.msra.mxu0 %v4588
    %4787 = vmatprep.subr.mxu0 0.0
    %4788 = vmatpush1.msra.mxu0 %v4589
    %4789 = vmatprep.subr.mxu0 0.0
    %4790 = vmatpush1.msra.mxu0 %v4590
    %4791 = vmatprep.subr.mxu0 0.0
    %4792 = vmatpush1.msra.mxu0 %v4591
    %4793 = vmatprep.subr.mxu0 0.0
    %4794 = vmatpush1.msra.mxu0 %v4592
    %4795 = vmatprep.subr.mxu0 0.0
    %4796 = vmatpush1.msra.mxu0 %v4593
    %4797 = vmatprep.subr.mxu0 0.0
    %4798 = vmatpush1.msra.mxu0 %v4594
    %4799 = vmatprep.subr.mxu0 0.0
    %4800 = vmatpush1.msra.mxu0 %v4595
    %4801 = vmatprep.subr.mxu0 0.0
    %4802 = vmatpush1.msra.mxu0 %v4596
    %4803 = vmatprep.subr.mxu0 0.0
    %4804 = vmatpush1.msra.mxu0 %v4597
    %4805 = vmatprep.subr.mxu0 0.0
    %4806 = vmatpush1.msra.mxu0 %v4598
    %4807 = vmatprep.subr.mxu0 0.0
    %4808 = vmatpush1.msra.mxu0 %v4599
    %4809 = vmatprep.subr.mxu0 0.0
    %4810 = vmatpush1.msra.mxu0 %v4600
    %4811 = vmatprep.subr.mxu0 0.0
    %4812 = vmatpush1.msra.mxu0 %v4601
    %4813 = vmatprep.mubr.f32.mxu0 %v4654
    %4814 = vmatmul.mubr.f32.gmra.mrb[0].mxu0 %v4652
    %v4815 = vpop.f32.mrb[0].mxu0
    %v4816 = vadd.f32 %v4746, %v4815
    %v4817 = vpop.f32.mrb[0].mxu0
    %4818 = vdwg.mxu0
    %4819 = vmatprep.subr.mxu0 0.0
    %4820 = vmatpush1.msra.mxu0 %v4602
    %4821 = vmatprep.subr.mxu0 0.0
    %4822 = vmatpush1.msra.mxu0 %v4603
    %4823 = vmatprep.subr.mxu0 0.0
    %4824 = vmatpush1.msra.mxu0 %v4604
    %4825 = vmatprep.subr.mxu0 0.0
    %4826 = vmatpush1.msra.mxu0 %v4605
    %4827 = vmatprep.subr.mxu0 0.0
    %4828 = vmatpush1.msra.mxu0 %v4606
    %4829 = vmatprep.subr.mxu0 0.0
    %4830 = vmatpush1.msra.mxu0 %v4607
    %4831 = vmatprep.subr.mxu0 0.0
    %4832 = vmatpush1.msra.mxu0 %v4608
    %4833 = vmatprep.subr.mxu0 0.0
    %4834 = vmatpush1.msra.mxu0 %v4609
    %4835 = vmatprep.subr.mxu0 0.0
    %4836 = vmatpush1.msra.mxu0 %v4610
    %4837 = vmatprep.subr.mxu0 0.0
    %4838 = vmatpush1.msra.mxu0 %v4611
    %4839 = vmatprep.subr.mxu0 0.0
    %4840 = vmatpush1.msra.mxu0 %v4612
    %4841 = vmatprep.subr.mxu0 0.0
    %4842 = vmatpush1.msra.mxu0 %v4613
    %4843 = vmatprep.subr.mxu0 0.0
    %4844 = vmatpush1.msra.mxu0 %v4614
    %4845 = vmatprep.subr.mxu0 0.0
    %4846 = vmatpush1.msra.mxu0 %v4615
    %4847 = vmatprep.subr.mxu0 0.0
    %4848 = vmatpush1.msra.mxu0 %v4616
    %4849 = vmatprep.subr.mxu0 0.0
    %4850 = vmatpush1.msra.mxu0 %v4617
    %4851 = vmatprep.subr.mxu0 0.0
    %4852 = vmatpush1.msra.mxu0 %v4618
    %4853 = vmatprep.subr.mxu0 0.0
    %4854 = vmatpush1.msra.mxu0 %v4619
    %4855 = vmatprep.subr.mxu0 0.0
    %4856 = vmatpush1.msra.mxu0 %v4620
    %4857 = vmatprep.subr.mxu0 0.0
    %4858 = vmatpush1.msra.mxu0 %v4621
    %4859 = vmatprep.subr.mxu0 0.0
    %4860 = vmatpush1.msra.mxu0 %v4622
    %4861 = vmatprep.subr.mxu0 0.0
    %4862 = vmatpush1.msra.mxu0 %v4623
    %4863 = vmatprep.subr.mxu0 0.0
    %4864 = vmatpush1.msra.mxu0 %v4624
    %4865 = vmatprep.subr.mxu0 0.0
    %4866 = vmatpush1.msra.mxu0 %v4625
    %4867 = vmatprep.subr.mxu0 0.0
    %4868 = vmatpush1.msra.mxu0 %v4626
    %4869 = vmatprep.subr.mxu0 0.0
    %4870 = vmatpush1.msra.mxu0 %v4627
    %4871 = vmatprep.subr.mxu0 0.0
    %4872 = vmatpush1.msra.mxu0 %v4628
    %4873 = vmatprep.subr.mxu0 0.0
    %4874 = vmatpush1.msra.mxu0 %v4629
    %4875 = vmatprep.subr.mxu0 0.0
    %4876 = vmatpush1.msra.mxu0 %v4630
    %4877 = vmatprep.subr.mxu0 0.0
    %4878 = vmatpush1.msra.mxu0 %v4631
    %4879 = vmatprep.subr.mxu0 0.0
    %4880 = vmatpush1.msra.mxu0 %v4632
    %4881 = vmatprep.subr.mxu0 0.0
    %4882 = vmatpush1.msra.mxu0 %v4633
    %4883 = vmatprep.mubr.f32.mxu0 %v4670
    %4884 = vmatmul.mubr.f32.gmra.mrb[0].mxu0 %v4662
    %v4885 = vpop.f32.mrb[0].mxu0
    %v4886 = vadd.f32 %v4816, %v4885
    %v4887 = vpop.f32.mrb[0].mxu0
    %4888 = vdwg.mxu0
    %4889 = vmatprep.subr.mxu0 0.0
    %4890 = vmatpush1.msra.mxu0 %v4634
    %4891 = vmatprep.subr.mxu0 0.0
    %4892 = vmatpush1.msra.mxu0 %v4635
    %4893 = vmatprep.subr.mxu0 0.0
    %4894 = vmatpush1.msra.mxu0 0.0
    %4895 = vmatprep.subr.mxu0 0.0
    %4896 = vmatpush1.msra.mxu0 0.0
    %4897 = vmatprep.subr.mxu0 0.0
    %4898 = vmatpush1.msra.mxu0 0.0
    %4899 = vmatprep.subr.mxu0 0.0
    %4900 = vmatpush1.msra.mxu0 0.0
    %4901 = vmatprep.subr.mxu0 0.0
    %4902 = vmatpush1.msra.mxu0 0.0
    %4903 = vmatprep.subr.mxu0 0.0
    %4904 = vmatpush1.msra.mxu0 0.0
    %4905 = vmatprep.subr.mxu0 0.0
    %4906 = vmatpush1.msra.mxu0 0.0
    %4907 = vmatprep.subr.mxu0 0.0
    %4908 = vmatpush1.msra.mxu0 0.0
    %4909 = vmatprep.subr.mxu0 0.0
    %4910 = vmatpush1.msra.mxu0 0.0
    %4911 = vmatprep.subr.mxu0 0.0
    %4912 = vmatpush1.msra.mxu0 0.0
    %4913 = vmatprep.subr.mxu0 0.0
    %4914 = vmatpush1.msra.mxu0 0.0
    %4915 = vmatprep.subr.mxu0 0.0
    %4916 = vmatpush1.msra.mxu0 0.0
    %4917 = vmatprep.subr.mxu0 0.0
    %4918 = vmatpush1.msra.mxu0 0.0
    %4919 = vmatprep.subr.mxu0 0.0
    %4920 = vmatpush1.msra.mxu0 0.0
    %4921 = vmatprep.subr.mxu0 0.0
    %4922 = vmatpush1.msra.mxu0 0.0
    %4923 = vmatprep.subr.mxu0 0.0
    %4924 = vmatpush1.msra.mxu0 0.0
    %4925 = vmatprep.subr.mxu0 0.0
    %4926 = vmatpush1.msra.mxu0 0.0
    %4927 = vmatprep.subr.mxu0 0.0
    %4928 = vmatpush1.msra.mxu0 0.0
    %4929 = vmatprep.subr.mxu0 0.0
    %4930 = vmatpush1.msra.mxu0 0.0
    %4931 = vmatprep.subr.mxu0 0.0
    %4932 = vmatpush1.msra.mxu0 0.0
    %4933 = vmatprep.subr.mxu0 0.0
    %4934 = vmatpush1.msra.mxu0 0.0
    %4935 = vmatprep.subr.mxu0 0.0
    %4936 = vmatpush1.msra.mxu0 0.0
    %4937 = vmatprep.subr.mxu0 0.0
    %4938 = vmatpush1.msra.mxu0 0.0
    %4939 = vmatprep.subr.mxu0 0.0
    %4940 = vmatpush1.msra.mxu0 0.0
    %4941 = vmatprep.subr.mxu0 0.0
    %4942 = vmatpush1.msra.mxu0 0.0
    %4943 = vmatprep.subr.mxu0 0.0
    %4944 = vmatpush1.msra.mxu0 0.0
    %4945 = vmatprep.subr.mxu0 0.0
    %4946 = vmatpush1.msra.mxu0 0.0
    %4947 = vmatprep.subr.mxu0 0.0
    %4948 = vmatpush1.msra.mxu0 0.0
    %4949 = vmatprep.subr.mxu0 0.0
    %4950 = vmatpush1.msra.mxu0 0.0
    %4951 = vmatprep.subr.mxu0 0.0
    %4952 = vmatpush1.msra.mxu0 0.0
    %4953 = vmatprep.mubr.f32.mxu0 0.0
    %4954 = vmatmul.mubr.f32.gmra.mrb[0].mxu0 %v4677
    %v4955 = vpop.f32.mrb[0].mxu0
    %v4956 = vadd.f32 %v4886, %v4955
    %v4957 = vpop.f32.mrb[0].mxu0
    %4958 = vdwg.mxu0
    %v4959 = vadd.f32 %v4368, %v4956
    %s4960 = sld [smem:[#allocation2 + $0x400]]
    %v4961 = vstv %s4960
    %v4962 = vmul.f32 %v57, %v4961
    %v4963 = vmul.f32 %v58, %v4961
    %s4964 = sld [smem:[#allocation2 + $0x401]]
    %v4965 = vstv %s4964
    %v4966 = vmul.f32 %v161, %v4965
    %v4967 = vmul.f32 %v162, %v4965
    %v4968 = vmul.f32 %v163, %v4965
    %v4969 = vmul.f32 %v164, %v4965
    %v4970 = vmul.f32 %v165, %v4965
    %v4971 = vmul.f32 %v166, %v4965
    %v4972 = vmul.f32 %v167, %v4965
    %v4980 = vcombine.low %v4966, %v4967
    %v4981 = vcombine.low %v4968, %v4969
    %v4983 = vunpack.c.l.s4 1983009808
    %v4984 = vunpack.c.0.s8 %v4983
    %v4985 = vlaneseq
    %v4986 = vshrl.u32 %v4985, 7
    %v4987 = vsub.s32 %v4984, %v4986
    %v4988 = vrot.slane %v4980, %v4987
    %v4990 = vunpack.c.l.s4 1983009808
    %v4991 = vunpack.c.0.s8 %v4990
    %v4992 = vlaneseq
    %v4993 = vshrl.u32 %v4992, 7
    %v4994 = vsub.s32 %v4991, %v4993
    %v4995 = vrot.slane %v4981, %v4994
    %v4996 = vcombine.low %v4988, %v4995
    %v4997 = vcombine.low %v4970, %v4971
    %v4999 = vunpack.c.l.s4 1983009808
    %v5000 = vunpack.c.0.s8 %v4999
    %v5001 = vlaneseq
    %v5002 = vshrl.u32 %v5001, 7
    %v5003 = vsub.s32 %v5000, %v5002
    %v5004 = vrot.slane %v4997, %v5003
    %v5006 = vunpack.c.l.s4 1983009808
    %v5007 = vunpack.c.0.s8 %v5006
    %v5008 = vlaneseq
    %v5009 = vshrl.u32 %v5008, 7
    %v5010 = vsub.s32 %v5007, %v5009
    %v5011 = vrot.slane %v4972, %v5010
    %v5012 = vcombine.low %v5004, %v5011
    %v5015 = vadd.f32 %v4962, %v4996
    %v5016 = vadd.f32 %v4963, %v5012
    %s5017 = sld [smem:[#allocation2 + $0x402]]
    %v5018 = vstv %s5017
    %v5019 = vmul.f32 %v183, %v5018
    %v5020 = vmul.f32 %v184, %v5018
    %v5021 = vmul.f32 %v185, %v5018
    %v5022 = vmul.f32 %v186, %v5018
    %v5023 = vmul.f32 %v187, %v5018
    %v5024 = vmul.f32 %v196, %v5018
    %v5025 = vmul.f32 %v5018, 0.0
    %v5033 = vcombine.low %v5019, %v5020
    %v5034 = vcombine.low %v5021, %v5022
    %v5036 = vunpack.c.l.s4 1983009808
    %v5037 = vunpack.c.0.s8 %v5036
    %v5038 = vlaneseq
    %v5039 = vshrl.u32 %v5038, 7
    %v5040 = vsub.s32 %v5037, %v5039
    %v5041 = vrot.slane %v5033, %v5040
    %v5043 = vunpack.c.l.s4 1983009808
    %v5044 = vunpack.c.0.s8 %v5043
    %v5045 = vlaneseq
    %v5046 = vshrl.u32 %v5045, 7
    %v5047 = vsub.s32 %v5044, %v5046
    %v5048 = vrot.slane %v5034, %v5047
    %v5049 = vcombine.low %v5041, %v5048
    %v5050 = vcombine.low %v5023, %v5024
    %v5052 = vunpack.c.l.s4 1983009808
    %v5053 = vunpack.c.0.s8 %v5052
    %v5054 = vlaneseq
    %v5055 = vshrl.u32 %v5054, 7
    %v5056 = vsub.s32 %v5053, %v5055
    %v5057 = vrot.slane %v5050, %v5056
    %v5059 = vunpack.c.l.s4 1983009808
    %v5060 = vunpack.c.0.s8 %v5059
    %v5061 = vlaneseq
    %v5062 = vshrl.u32 %v5061, 7
    %v5063 = vsub.s32 %v5060, %v5062
    %v5064 = vrot.slane %v5025, %v5063
    %v5065 = vcombine.low %v5057, %v5064
    %v5068 = vadd.f32 %v5015, %v5049
    %v5069 = vadd.f32 %v5016, %v5065
    %s5070 = sld [smem:[#allocation2 + $0x403]]
    %v5071 = vstv %s5070
    %v5072 = vmul.f32 %v226, %v5071
    %v5073 = vmul.f32 %v227, %v5071
    %v5074 = vmul.f32 %v228, %v5071
    %v5075 = vmul.f32 %v229, %v5071
    %v5076 = vmul.f32 %v230, %v5071
    %v5077 = vmul.f32 %v231, %v5071
    %v5078 = vmul.f32 %v232, %v5071
    %v5086 = vcombine.low %v5072, %v5073
    %v5087 = vcombine.low %v5074, %v5075
    %v5089 = vunpack.c.l.s4 1983009808
    %v5090 = vunpack.c.0.s8 %v5089
    %v5091 = vlaneseq
    %v5092 = vshrl.u32 %v5091, 7
    %v5093 = vsub.s32 %v5090, %v5092
    %v5094 = vrot.slane %v5086, %v5093
    %v5096 = vunpack.c.l.s4 1983009808
    %v5097 = vunpack.c.0.s8 %v5096
    %v5098 = vlaneseq
    %v5099 = vshrl.u32 %v5098, 7
    %v5100 = vsub.s32 %v5097, %v5099
    %v5101 = vrot.slane %v5087, %v5100
    %v5102 = vcombine.low %v5094, %v5101
    %v5103 = vcombine.low %v5076, %v5077
    %v5105 = vunpack.c.l.s4 1983009808
    %v5106 = vunpack.c.0.s8 %v5105
    %v5107 = vlaneseq
    %v5108 = vshrl.u32 %v5107, 7
    %v5109 = vsub.s32 %v5106, %v5108
    %v5110 = vrot.slane %v5103, %v5109
    %v5112 = vunpack.c.l.s4 1983009808
    %v5113 = vunpack.c.0.s8 %v5112
    %v5114 = vlaneseq
    %v5115 = vshrl.u32 %v5114, 7
    %v5116 = vsub.s32 %v5113, %v5115
    %v5117 = vrot.slane %v5078, %v5116
    %v5118 = vcombine.low %v5110, %v5117
    %v5121 = vadd.f32 %v5068, %v5102
    %v5122 = vadd.f32 %v5069, %v5118
    %s5123 = sld [smem:[#allocation5 + $0x8]]
    %v5124 = vstv %s5123
    %v5125 = vadd.f32 %v5121, %v5124
    %v5126 = vadd.f32 %v5122, %v5124
    %v5127 = vmax.f32 %v5125, 0.0
    %v5128 = vmax.f32 %v5126, 0.0
    %v5129 = vld [vmem:[%s4 + $0x1880] sm:$0xff]
    %v5130 = vld [vmem:[%s4 + $0x1888] sm:$0xff]
    %v5131 = vld [vmem:[%s4 + $0x1890] sm:$0xff]
    %v5132 = vld [vmem:[%s4 + $0x1898] sm:$0xff]
    %v5133 = vld [vmem:[%s4 + $0x18a0] sm:$0xff]
    %v5134 = vld [vmem:[%s4 + $0x18a8] sm:$0xff]
    %v5135 = vld [vmem:[%s4 + $0x18b0] sm:$0xff]
    %v5136 = vld [vmem:[%s4 + $0x18b8] sm:$0xff]
    %v5137 = vld [vmem:[%s4 + $0x18c0] sm:$0xff]
    %v5138 = vld [vmem:[%s4 + $0x18c8] sm:$0xff]
    %v5139 = vld [vmem:[%s4 + $0x18d0] sm:$0xff]
    %v5140 = vld [vmem:[%s4 + $0x18d8] sm:$0xff]
    %v5141 = vld [vmem:[%s4 + $0x18e0] sm:$0xff]
    %v5142 = vld [vmem:[%s4 + $0x18e8] sm:$0xff]
    %v5143 = vld [vmem:[%s4 + $0x18f0] sm:$0xff]
    %v5144 = vld [vmem:[%s4 + $0x18f8] sm:$0xff]
    %v5145 = vld [vmem:[%s4 + $0x1900] sm:$0xff]
    %v5146 = vld [vmem:[%s4 + $0x1908] sm:$0xff]
    %v5147 = vld [vmem:[%s4 + $0x1910] sm:$0xff]
    %v5148 = vld [vmem:[%s4 + $0x1918] sm:$0xff]
    %v5149 = vld [vmem:[%s4 + $0x1920] sm:$0xff]
    %v5150 = vld [vmem:[%s4 + $0x1928] sm:$0xff]
    %v5151 = vld [vmem:[%s4 + $0x1930] sm:$0xff]
    %v5152 = vld [vmem:[%s4 + $0x1938] sm:$0xff]
    %v5153 = vld [vmem:[%s4 + $0x1940] sm:$0xff]
    %v5154 = vld [vmem:[%s4 + $0x1948] sm:$0xff]
    %v5155 = vld [vmem:[%s4 + $0x1950] sm:$0xff]
    %v5156 = vld [vmem:[%s4 + $0x1958] sm:$0xff]
    %v5157 = vld [vmem:[%s4 + $0x1960] sm:$0xff]
    %v5158 = vld [vmem:[%s4 + $0x1968] sm:$0xff]
    %v5159 = vld [vmem:[%s4 + $0x1970] sm:$0xff]
    %v5160 = vld [vmem:[%s4 + $0x1978] sm:$0xff]
    %v5161 = vld [vmem:[%s4 + $0x1980] sm:$0xff]
    %v5162 = vld [vmem:[%s4 + $0x1988] sm:$0xff]
    %v5163 = vld [vmem:[%s4 + $0x1990] sm:$0xff]
    %v5164 = vld [vmem:[%s4 + $0x1998] sm:$0xff]
    %v5165 = vld [vmem:[%s4 + $0x19a0] sm:$0xff]
    %v5166 = vld [vmem:[%s4 + $0x19a8] sm:$0xff]
    %v5167 = vld [vmem:[%s4 + $0x19b0] sm:$0xff]
    %v5168 = vld [vmem:[%s4 + $0x19b8] sm:$0xff]
    %v5169 = vld [vmem:[%s4 + $0x19c0] sm:$0xff]
    %v5170 = vld [vmem:[%s4 + $0x19c8] sm:$0xff]
    %v5171 = vld [vmem:[%s4 + $0x19d0] sm:$0xff]
    %v5172 = vld [vmem:[%s4 + $0x19d8] sm:$0xff]
    %v5173 = vld [vmem:[%s4 + $0x19e0] sm:$0xff]
    %v5174 = vld [vmem:[%s4 + $0x19e8] sm:$0xff]
    %v5175 = vld [vmem:[%s4 + $0x19f0] sm:$0xff]
    %v5176 = vld [vmem:[%s4 + $0x19f8] sm:$0xff]
    %v5177 = vld [vmem:[%s4 + $0x1a00] sm:$0xff]
    %v5178 = vld [vmem:[%s4 + $0x1a08] sm:$0xff]
    %v5179 = vld [vmem:[%s4 + $0x1a10] sm:$0xff]
    %v5180 = vld [vmem:[%s4 + $0x1a18] sm:$0xff]
    %v5181 = vld [vmem:[%s4 + $0x1a20] sm:$0xff]
    %v5182 = vld [vmem:[%s4 + $0x1a28] sm:$0xff]
    %v5183 = vld [vmem:[%s4 + $0x1a30] sm:$0xff]
    %v5184 = vld [vmem:[%s4 + $0x1a38] sm:$0xff]
    %v5185 = vld [vmem:[%s4 + $0x1a40] sm:$0xff]
    %v5186 = vld [vmem:[%s4 + $0x1a48] sm:$0xff]
    %v5187 = vld [vmem:[%s4 + $0x1a50] sm:$0xff]
    %v5188 = vld [vmem:[%s4 + $0x1a58] sm:$0xff]
    %v5189 = vld [vmem:[%s4 + $0x1a60] sm:$0xff]
    %v5190 = vld [vmem:[%s4 + $0x1a68] sm:$0xff]
    %v5191 = vld [vmem:[%s4 + $0x1a70] sm:$0xff]
    %v5192 = vld [vmem:[%s4 + $0x1a78] sm:$0xff]
    %v5193 = vld [vmem:[%s4 + $0x1a80] sm:$0xff]
    %v5194 = vld [vmem:[%s4 + $0x1a88] sm:$0xff]
    %v5195 = vld [vmem:[%s4 + $0x1a90] sm:$0xff]
    %v5196 = vld [vmem:[%s4 + $0x1a98] sm:$0xff]
    %v5197 = vld [vmem:[%s4 + $0x1aa0] sm:$0xff]
    %v5198 = vld [vmem:[%s4 + $0x1aa8] sm:$0xff]
    %v5199 = vld [vmem:[%s4 + $0x1ab0] sm:$0xff]
    %v5200 = vld [vmem:[%s4 + $0x1ab8] sm:$0xff]
    %v5201 = vld [vmem:[%s4 + $0x1ac0] sm:$0xff]
    %v5202 = vld [vmem:[%s4 + $0x1ac8] sm:$0xff]
    %v5203 = vld [vmem:[%s4 + $0x1ad0] sm:$0xff]
    %v5204 = vld [vmem:[%s4 + $0x1ad8] sm:$0xff]
    %v5205 = vld [vmem:[%s4 + $0x1ae0] sm:$0xff]
    %v5206 = vld [vmem:[%s4 + $0x1ae8] sm:$0xff]
    %v5207 = vld [vmem:[%s4 + $0x1af0] sm:$0xff]
    %v5208 = vld [vmem:[%s4 + $0x1af8] sm:$0xff]
    %v5209 = vld [vmem:[%s4 + $0x1b00] sm:$0xff]
    %v5210 = vld [vmem:[%s4 + $0x1b08] sm:$0xff]
    %v5211 = vld [vmem:[%s4 + $0x1b10] sm:$0xff]
    %v5212 = vld [vmem:[%s4 + $0x1b18] sm:$0xff]
    %v5213 = vld [vmem:[%s4 + $0x1b20] sm:$0xff]
    %v5214 = vld [vmem:[%s4 + $0x1b28] sm:$0xff]
    %v5215 = vld [vmem:[%s4 + $0x1b30] sm:$0xff]
    %v5216 = vld [vmem:[%s4 + $0x1b38] sm:$0xff]
    %v5217 = vld [vmem:[%s4 + $0x1b40] sm:$0xff]
    %v5218 = vld [vmem:[%s4 + $0x1b48] sm:$0xff]
    %v5219 = vld [vmem:[%s4 + $0x1b50] sm:$0xff]
    %v5220 = vld [vmem:[%s4 + $0x1b58] sm:$0xff]
    %v5221 = vld [vmem:[%s4 + $0x1b60] sm:$0xff]
    %v5222 = vld [vmem:[%s4 + $0x1b68] sm:$0xff]
    %v5223 = vld [vmem:[%s4 + $0x1b70] sm:$0xff]
    %v5224 = vld [vmem:[%s4 + $0x1b78] sm:$0xff]
    %v5225 = vld [vmem:[%s4 + $0x1b80] sm:$0xff]
    %v5226 = vld [vmem:[%s4 + $0x1b88] sm:$0xff]
    %v5229 = vcombine.high %v5127, %v5127
    %v5231 = vunpack.c.l.s4 1983009808
    %v5232 = vunpack.c.0.s8 %v5231
    %v5233 = vlaneseq
    %v5234 = vshrl.u32 %v5233, 7
    %v5235 = vsub.s32 %v5232, %v5234
    %v5236 = vrot.slane %v5127, %v5235
    %v5238 = vunpack.c.l.s4 1983009808
    %v5239 = vunpack.c.0.s8 %v5238
    %v5240 = vlaneseq
    %v5241 = vshrl.u32 %v5240, 7
    %v5242 = vsub.s32 %v5239, %v5241
    %v5243 = vrot.slane %v5229, %v5242
    %v5244 = vcombine.high %v5236, %v5236
    %v5245 = vcombine.high %v5243, %v5243
    %v5246 = vcombine.high %v5128, %v5128
    %v5248 = vunpack.c.l.s4 1983009808
    %v5249 = vunpack.c.0.s8 %v5248
    %v5250 = vlaneseq
    %v5251 = vshrl.u32 %v5250, 7
    %v5252 = vsub.s32 %v5249, %v5251
    %v5253 = vrot.slane %v5128, %v5252
    %v5255 = vunpack.c.l.s4 1983009808
    %v5256 = vunpack.c.0.s8 %v5255
    %v5257 = vlaneseq
    %v5258 = vshrl.u32 %v5257, 7
    %v5259 = vsub.s32 %v5256, %v5258
    %v5260 = vrot.slane %v5246, %v5259
    %v5261 = vcombine.high %v5253, %v5253
    %v5268 = vsel %vm808, %v5260, 0
    %5270 = vmatprep.subr.mxu0 0.0
    %5271 = vmatpush1.msra.mxu0 %v5129
    %5272 = vmatprep.subr.mxu0 0.0
    %5273 = vmatpush1.msra.mxu0 %v5130
    %5274 = vmatprep.subr.mxu0 0.0
    %5275 = vmatpush1.msra.mxu0 %v5131
    %5276 = vmatprep.subr.mxu0 0.0
    %5277 = vmatpush1.msra.mxu0 %v5132
    %5278 = vmatprep.subr.mxu0 0.0
    %5279 = vmatpush1.msra.mxu0 %v5133
    %5280 = vmatprep.subr.mxu0 0.0
    %5281 = vmatpush1.msra.mxu0 %v5134
    %5282 = vmatprep.subr.mxu0 0.0
    %5283 = vmatpush1.msra.mxu0 %v5135
    %5284 = vmatprep.subr.mxu0 0.0
    %5285 = vmatpush1.msra.mxu0 %v5136
    %5286 = vmatprep.subr.mxu0 0.0
    %5287 = vmatpush1.msra.mxu0 %v5137
    %5288 = vmatprep.subr.mxu0 0.0
    %5289 = vmatpush1.msra.mxu0 %v5138
    %5290 = vmatprep.subr.mxu0 0.0
    %5291 = vmatpush1.msra.mxu0 %v5139
    %5292 = vmatprep.subr.mxu0 0.0
    %5293 = vmatpush1.msra.mxu0 %v5140
    %5294 = vmatprep.subr.mxu0 0.0
    %5295 = vmatpush1.msra.mxu0 %v5141
    %5296 = vmatprep.subr.mxu0 0.0
    %5297 = vmatpush1.msra.mxu0 %v5142
    %5298 = vmatprep.subr.mxu0 0.0
    %5299 = vmatpush1.msra.mxu0 %v5143
    %5300 = vmatprep.subr.mxu0 0.0
    %5301 = vmatpush1.msra.mxu0 %v5144
    %5302 = vmatprep.subr.mxu0 0.0
    %5303 = vmatpush1.msra.mxu0 %v5145
    %5304 = vmatprep.subr.mxu0 0.0
    %5305 = vmatpush1.msra.mxu0 %v5146
    %5306 = vmatprep.subr.mxu0 0.0
    %5307 = vmatpush1.msra.mxu0 %v5147
    %5308 = vmatprep.subr.mxu0 0.0
    %5309 = vmatpush1.msra.mxu0 %v5148
    %5310 = vmatprep.subr.mxu0 0.0
    %5311 = vmatpush1.msra.mxu0 %v5149
    %5312 = vmatprep.subr.mxu0 0.0
    %5313 = vmatpush1.msra.mxu0 %v5150
    %5314 = vmatprep.subr.mxu0 0.0
    %5315 = vmatpush1.msra.mxu0 %v5151
    %5316 = vmatprep.subr.mxu0 0.0
    %5317 = vmatpush1.msra.mxu0 %v5152
    %5318 = vmatprep.subr.mxu0 0.0
    %5319 = vmatpush1.msra.mxu0 %v5153
    %5320 = vmatprep.subr.mxu0 0.0
    %5321 = vmatpush1.msra.mxu0 %v5154
    %5322 = vmatprep.subr.mxu0 0.0
    %5323 = vmatpush1.msra.mxu0 %v5155
    %5324 = vmatprep.subr.mxu0 0.0
    %5325 = vmatpush1.msra.mxu0 %v5156
    %5326 = vmatprep.subr.mxu0 0.0
    %5327 = vmatpush1.msra.mxu0 %v5157
    %5328 = vmatprep.subr.mxu0 0.0
    %5329 = vmatpush1.msra.mxu0 %v5158
    %5330 = vmatprep.subr.mxu0 0.0
    %5331 = vmatpush1.msra.mxu0 %v5159
    %5332 = vmatprep.subr.mxu0 0.0
    %5333 = vmatpush1.msra.mxu0 %v5160
    %5334 = vmatprep.mubr.f32.mxu0 %v5244
    %5335 = vmatmul.mubr.f32.gmra.mrb[0].mxu0 %v5236
    %v5336 = vpop.f32.mrb[0].mxu0
    %v5337 = vadd.f32 0.0, %v5336
    %v5338 = vpop.f32.mrb[0].mxu0
    %5339 = vdwg.mxu0
    %5340 = vmatprep.subr.mxu0 0.0
    %5341 = vmatpush1.msra.mxu0 %v5161
    %5342 = vmatprep.subr.mxu0 0.0
    %5343 = vmatpush1.msra.mxu0 %v5162
    %5344 = vmatprep.subr.mxu0 0.0
    %5345 = vmatpush1.msra.mxu0 %v5163
    %5346 = vmatprep.subr.mxu0 0.0
    %5347 = vmatpush1.msra.mxu0 %v5164
    %5348 = vmatprep.subr.mxu0 0.0
    %5349 = vmatpush1.msra.mxu0 %v5165
    %5350 = vmatprep.subr.mxu0 0.0
    %5351 = vmatpush1.msra.mxu0 %v5166
    %5352 = vmatprep.subr.mxu0 0.0
    %5353 = vmatpush1.msra.mxu0 %v5167
    %5354 = vmatprep.subr.mxu0 0.0
    %5355 = vmatpush1.msra.mxu0 %v5168
    %5356 = vmatprep.subr.mxu0 0.0
    %5357 = vmatpush1.msra.mxu0 %v5169
    %5358 = vmatprep.subr.mxu0 0.0
    %5359 = vmatpush1.msra.mxu0 %v5170
    %5360 = vmatprep.subr.mxu0 0.0
    %5361 = vmatpush1.msra.mxu0 %v5171
    %5362 = vmatprep.subr.mxu0 0.0
    %5363 = vmatpush1.msra.mxu0 %v5172
    %5364 = vmatprep.subr.mxu0 0.0
    %5365 = vmatpush1.msra.mxu0 %v5173
    %5366 = vmatprep.subr.mxu0 0.0
    %5367 = vmatpush1.msra.mxu0 %v5174
    %5368 = vmatprep.subr.mxu0 0.0
    %5369 = vmatpush1.msra.mxu0 %v5175
    %5370 = vmatprep.subr.mxu0 0.0
    %5371 = vmatpush1.msra.mxu0 %v5176
    %5372 = vmatprep.subr.mxu0 0.0
    %5373 = vmatpush1.msra.mxu0 %v5177
    %5374 = vmatprep.subr.mxu0 0.0
    %5375 = vmatpush1.msra.mxu0 %v5178
    %5376 = vmatprep.subr.mxu0 0.0
    %5377 = vmatpush1.msra.mxu0 %v5179
    %5378 = vmatprep.subr.mxu0 0.0
    %5379 = vmatpush1.msra.mxu0 %v5180
    %5380 = vmatprep.subr.mxu0 0.0
    %5381 = vmatpush1.msra.mxu0 %v5181
    %5382 = vmatprep.subr.mxu0 0.0
    %5383 = vmatpush1.msra.mxu0 %v5182
    %5384 = vmatprep.subr.mxu0 0.0
    %5385 = vmatpush1.msra.mxu0 %v5183
    %5386 = vmatprep.subr.mxu0 0.0
    %5387 = vmatpush1.msra.mxu0 %v5184
    %5388 = vmatprep.subr.mxu0 0.0
    %5389 = vmatpush1.msra.mxu0 %v5185
    %5390 = vmatprep.subr.mxu0 0.0
    %5391 = vmatpush1.msra.mxu0 %v5186
    %5392 = vmatprep.subr.mxu0 0.0
    %5393 = vmatpush1.msra.mxu0 %v5187
    %5394 = vmatprep.subr.mxu0 0.0
    %5395 = vmatpush1.msra.mxu0 %v5188
    %5396 = vmatprep.subr.mxu0 0.0
    %5397 = vmatpush1.msra.mxu0 %v5189
    %5398 = vmatprep.subr.mxu0 0.0
    %5399 = vmatpush1.msra.mxu0 %v5190
    %5400 = vmatprep.subr.mxu0 0.0
    %5401 = vmatpush1.msra.mxu0 %v5191
    %5402 = vmatprep.subr.mxu0 0.0
    %5403 = vmatpush1.msra.mxu0 %v5192
    %5404 = vmatprep.mubr.f32.mxu0 %v5245
    %5405 = vmatmul.mubr.f32.gmra.mrb[0].mxu0 %v5243
    %v5406 = vpop.f32.mrb[0].mxu0
    %v5407 = vadd.f32 %v5337, %v5406
    %v5408 = vpop.f32.mrb[0].mxu0
    %5409 = vdwg.mxu0
    %5410 = vmatprep.subr.mxu0 0.0
    %5411 = vmatpush1.msra.mxu0 %v5193
    %5412 = vmatprep.subr.mxu0 0.0
    %5413 = vmatpush1.msra.mxu0 %v5194
    %5414 = vmatprep.subr.mxu0 0.0
    %5415 = vmatpush1.msra.mxu0 %v5195
    %5416 = vmatprep.subr.mxu0 0.0
    %5417 = vmatpush1.msra.mxu0 %v5196
    %5418 = vmatprep.subr.mxu0 0.0
    %5419 = vmatpush1.msra.mxu0 %v5197
    %5420 = vmatprep.subr.mxu0 0.0
    %5421 = vmatpush1.msra.mxu0 %v5198
    %5422 = vmatprep.subr.mxu0 0.0
    %5423 = vmatpush1.msra.mxu0 %v5199
    %5424 = vmatprep.subr.mxu0 0.0
    %5425 = vmatpush1.msra.mxu0 %v5200
    %5426 = vmatprep.subr.mxu0 0.0
    %5427 = vmatpush1.msra.mxu0 %v5201
    %5428 = vmatprep.subr.mxu0 0.0
    %5429 = vmatpush1.msra.mxu0 %v5202
    %5430 = vmatprep.subr.mxu0 0.0
    %5431 = vmatpush1.msra.mxu0 %v5203
    %5432 = vmatprep.subr.mxu0 0.0
    %5433 = vmatpush1.msra.mxu0 %v5204
    %5434 = vmatprep.subr.mxu0 0.0
    %5435 = vmatpush1.msra.mxu0 %v5205
    %5436 = vmatprep.subr.mxu0 0.0
    %5437 = vmatpush1.msra.mxu0 %v5206
    %5438 = vmatprep.subr.mxu0 0.0
    %5439 = vmatpush1.msra.mxu0 %v5207
    %5440 = vmatprep.subr.mxu0 0.0
    %5441 = vmatpush1.msra.mxu0 %v5208
    %5442 = vmatprep.subr.mxu0 0.0
    %5443 = vmatpush1.msra.mxu0 %v5209
    %5444 = vmatprep.subr.mxu0 0.0
    %5445 = vmatpush1.msra.mxu0 %v5210
    %5446 = vmatprep.subr.mxu0 0.0
    %5447 = vmatpush1.msra.mxu0 %v5211
    %5448 = vmatprep.subr.mxu0 0.0
    %5449 = vmatpush1.msra.mxu0 %v5212
    %5450 = vmatprep.subr.mxu0 0.0
    %5451 = vmatpush1.msra.mxu0 %v5213
    %5452 = vmatprep.subr.mxu0 0.0
    %5453 = vmatpush1.msra.mxu0 %v5214
    %5454 = vmatprep.subr.mxu0 0.0
    %5455 = vmatpush1.msra.mxu0 %v5215
    %5456 = vmatprep.subr.mxu0 0.0
    %5457 = vmatpush1.msra.mxu0 %v5216
    %5458 = vmatprep.subr.mxu0 0.0
    %5459 = vmatpush1.msra.mxu0 %v5217
    %5460 = vmatprep.subr.mxu0 0.0
    %5461 = vmatpush1.msra.mxu0 %v5218
    %5462 = vmatprep.subr.mxu0 0.0
    %5463 = vmatpush1.msra.mxu0 %v5219
    %5464 = vmatprep.subr.mxu0 0.0
    %5465 = vmatpush1.msra.mxu0 %v5220
    %5466 = vmatprep.subr.mxu0 0.0
    %5467 = vmatpush1.msra.mxu0 %v5221
    %5468 = vmatprep.subr.mxu0 0.0
    %5469 = vmatpush1.msra.mxu0 %v5222
    %5470 = vmatprep.subr.mxu0 0.0
    %5471 = vmatpush1.msra.mxu0 %v5223
    %5472 = vmatprep.subr.mxu0 0.0
    %5473 = vmatpush1.msra.mxu0 %v5224
    %5474 = vmatprep.mubr.f32.mxu0 %v5261
    %5475 = vmatmul.mubr.f32.gmra.mrb[0].mxu0 %v5253
    %v5476 = vpop.f32.mrb[0].mxu0
    %v5477 = vadd.f32 %v5407, %v5476
    %v5478 = vpop.f32.mrb[0].mxu0
    %5479 = vdwg.mxu0
    %5480 = vmatprep.subr.mxu0 0.0
    %5481 = vmatpush1.msra.mxu0 %v5225
    %5482 = vmatprep.subr.mxu0 0.0
    %5483 = vmatpush1.msra.mxu0 %v5226
    %5484 = vmatprep.subr.mxu0 0.0
    %5485 = vmatpush1.msra.mxu0 0.0
    %5486 = vmatprep.subr.mxu0 0.0
    %5487 = vmatpush1.msra.mxu0 0.0
    %5488 = vmatprep.subr.mxu0 0.0
    %5489 = vmatpush1.msra.mxu0 0.0
    %5490 = vmatprep.subr.mxu0 0.0
    %5491 = vmatpush1.msra.mxu0 0.0
    %5492 = vmatprep.subr.mxu0 0.0
    %5493 = vmatpush1.msra.mxu0 0.0
    %5494 = vmatprep.subr.mxu0 0.0
    %5495 = vmatpush1.msra.mxu0 0.0
    %5496 = vmatprep.subr.mxu0 0.0
    %5497 = vmatpush1.msra.mxu0 0.0
    %5498 = vmatprep.subr.mxu0 0.0
    %5499 = vmatpush1.msra.mxu0 0.0
    %5500 = vmatprep.subr.mxu0 0.0
    %5501 = vmatpush1.msra.mxu0 0.0
    %5502 = vmatprep.subr.mxu0 0.0
    %5503 = vmatpush1.msra.mxu0 0.0
    %5504 = vmatprep.subr.mxu0 0.0
    %5505 = vmatpush1.msra.mxu0 0.0
    %5506 = vmatprep.subr.mxu0 0.0
    %5507 = vmatpush1.msra.mxu0 0.0
    %5508 = vmatprep.subr.mxu0 0.0
    %5509 = vmatpush1.msra.mxu0 0.0
    %5510 = vmatprep.subr.mxu0 0.0
    %5511 = vmatpush1.msra.mxu0 0.0
    %5512 = vmatprep.subr.mxu0 0.0
    %5513 = vmatpush1.msra.mxu0 0.0
    %5514 = vmatprep.subr.mxu0 0.0
    %5515 = vmatpush1.msra.mxu0 0.0
    %5516 = vmatprep.subr.mxu0 0.0
    %5517 = vmatpush1.msra.mxu0 0.0
    %5518 = vmatprep.subr.mxu0 0.0
    %5519 = vmatpush1.msra.mxu0 0.0
    %5520 = vmatprep.subr.mxu0 0.0
    %5521 = vmatpush1.msra.mxu0 0.0
    %5522 = vmatprep.subr.mxu0 0.0
    %5523 = vmatpush1.msra.mxu0 0.0
    %5524 = vmatprep.subr.mxu0 0.0
    %5525 = vmatpush1.msra.mxu0 0.0
    %5526 = vmatprep.subr.mxu0 0.0
    %5527 = vmatpush1.msra.mxu0 0.0
    %5528 = vmatprep.subr.mxu0 0.0
    %5529 = vmatpush1.msra.mxu0 0.0
    %5530 = vmatprep.subr.mxu0 0.0
    %5531 = vmatpush1.msra.mxu0 0.0
    %5532 = vmatprep.subr.mxu0 0.0
    %5533 = vmatpush1.msra.mxu0 0.0
    %5534 = vmatprep.subr.mxu0 0.0
    %5535 = vmatpush1.msra.mxu0 0.0
    %5536 = vmatprep.subr.mxu0 0.0
    %5537 = vmatpush1.msra.mxu0 0.0
    %5538 = vmatprep.subr.mxu0 0.0
    %5539 = vmatpush1.msra.mxu0 0.0
    %5540 = vmatprep.subr.mxu0 0.0
    %5541 = vmatpush1.msra.mxu0 0.0
    %5542 = vmatprep.subr.mxu0 0.0
    %5543 = vmatpush1.msra.mxu0 0.0
    %5544 = vmatprep.mubr.f32.mxu0 0.0
    %5545 = vmatmul.mubr.f32.gmra.mrb[0].mxu0 %v5268
    %v5546 = vpop.f32.mrb[0].mxu0
    %v5547 = vadd.f32 %v5477, %v5546
    %v5548 = vpop.f32.mrb[0].mxu0
    %5549 = vdwg.mxu0
    %v5550 = vadd.f32 %v4959, %v5547
    %s5551 = sld [smem:[#allocation2 + $0x480]]
    %v5552 = vstv %s5551
    %v5553 = vmul.f32 %v57, %v5552
    %v5554 = vmul.f32 %v58, %v5552
    %s5555 = sld [smem:[#allocation2 + $0x481]]
    %v5556 = vstv %s5555
    %v5557 = vmul.f32 %v161, %v5556
    %v5558 = vmul.f32 %v162, %v5556
    %v5559 = vmul.f32 %v163, %v5556
    %v5560 = vmul.f32 %v164, %v5556
    %v5561 = vmul.f32 %v165, %v5556
    %v5562 = vmul.f32 %v166, %v5556
    %v5563 = vmul.f32 %v167, %v5556
    %v5571 = vcombine.low %v5557, %v5558
    %v5572 = vcombine.low %v5559, %v5560
    %v5574 = vunpack.c.l.s4 1983009808
    %v5575 = vunpack.c.0.s8 %v5574
    %v5576 = vlaneseq
    %v5577 = vshrl.u32 %v5576, 7
    %v5578 = vsub.s32 %v5575, %v5577
    %v5579 = vrot.slane %v5571, %v5578
    %v5581 = vunpack.c.l.s4 1983009808
    %v5582 = vunpack.c.0.s8 %v5581
    %v5583 = vlaneseq
    %v5584 = vshrl.u32 %v5583, 7
    %v5585 = vsub.s32 %v5582, %v5584
    %v5586 = vrot.slane %v5572, %v5585
    %v5587 = vcombine.low %v5579, %v5586
    %v5588 = vcombine.low %v5561, %v5562
    %v5590 = vunpack.c.l.s4 1983009808
    %v5591 = vunpack.c.0.s8 %v5590
    %v5592 = vlaneseq
    %v5593 = vshrl.u32 %v5592, 7
    %v5594 = vsub.s32 %v5591, %v5593
    %v5595 = vrot.slane %v5588, %v5594
    %v5597 = vunpack.c.l.s4 1983009808
    %v5598 = vunpack.c.0.s8 %v5597
    %v5599 = vlaneseq
    %v5600 = vshrl.u32 %v5599, 7
    %v5601 = vsub.s32 %v5598, %v5600
    %v5602 = vrot.slane %v5563, %v5601
    %v5603 = vcombine.low %v5595, %v5602
    %v5606 = vadd.f32 %v5553, %v5587
    %v5607 = vadd.f32 %v5554, %v5603
    %s5608 = sld [smem:[#allocation2 + $0x482]]
    %v5609 = vstv %s5608
    %v5610 = vmul.f32 %v183, %v5609
    %v5611 = vmul.f32 %v184, %v5609
    %v5612 = vmul.f32 %v185, %v5609
    %v5613 = vmul.f32 %v186, %v5609
    %v5614 = vmul.f32 %v187, %v5609
    %v5615 = vmul.f32 %v196, %v5609
    %v5616 = vmul.f32 %v5609, 0.0
    %v5624 = vcombine.low %v5610, %v5611
    %v5625 = vcombine.low %v5612, %v5613
    %v5627 = vunpack.c.l.s4 1983009808
    %v5628 = vunpack.c.0.s8 %v5627
    %v5629 = vlaneseq
    %v5630 = vshrl.u32 %v5629, 7
    %v5631 = vsub.s32 %v5628, %v5630
    %v5632 = vrot.slane %v5624, %v5631
    %v5634 = vunpack.c.l.s4 1983009808
    %v5635 = vunpack.c.0.s8 %v5634
    %v5636 = vlaneseq
    %v5637 = vshrl.u32 %v5636, 7
    %v5638 = vsub.s32 %v5635, %v5637
    %v5639 = vrot.slane %v5625, %v5638
    %v5640 = vcombine.low %v5632, %v5639
    %v5641 = vcombine.low %v5614, %v5615
    %v5643 = vunpack.c.l.s4 1983009808
    %v5644 = vunpack.c.0.s8 %v5643
    %v5645 = vlaneseq
    %v5646 = vshrl.u32 %v5645, 7
    %v5647 = vsub.s32 %v5644, %v5646
    %v5648 = vrot.slane %v5641, %v5647
    %v5650 = vunpack.c.l.s4 1983009808
    %v5651 = vunpack.c.0.s8 %v5650
    %v5652 = vlaneseq
    %v5653 = vshrl.u32 %v5652, 7
    %v5654 = vsub.s32 %v5651, %v5653
    %v5655 = vrot.slane %v5616, %v5654
    %v5656 = vcombine.low %v5648, %v5655
    %v5659 = vadd.f32 %v5606, %v5640
    %v5660 = vadd.f32 %v5607, %v5656
    %s5661 = sld [smem:[#allocation2 + $0x483]]
    %v5662 = vstv %s5661
    %v5663 = vmul.f32 %v226, %v5662
    %v5664 = vmul.f32 %v227, %v5662
    %v5665 = vmul.f32 %v228, %v5662
    %v5666 = vmul.f32 %v229, %v5662
    %v5667 = vmul.f32 %v230, %v5662
    %v5668 = vmul.f32 %v231, %v5662
    %v5669 = vmul.f32 %v232, %v5662
    %v5677 = vcombine.low %v5663, %v5664
    %v5678 = vcombine.low %v5665, %v5666
    %v5680 = vunpack.c.l.s4 1983009808
    %v5681 = vunpack.c.0.s8 %v5680
    %v5682 = vlaneseq
    %v5683 = vshrl.u32 %v5682, 7
    %v5684 = vsub.s32 %v5681, %v5683
    %v5685 = vrot.slane %v5677, %v5684
    %v5687 = vunpack.c.l.s4 1983009808
    %v5688 = vunpack.c.0.s8 %v5687
    %v5689 = vlaneseq
    %v5690 = vshrl.u32 %v5689, 7
    %v5691 = vsub.s32 %v5688, %v5690
    %v5692 = vrot.slane %v5678, %v5691
    %v5693 = vcombine.low %v5685, %v5692
    %v5694 = vcombine.low %v5667, %v5668
    %v5696 = vunpack.c.l.s4 1983009808
    %v5697 = vunpack.c.0.s8 %v5696
    %v5698 = vlaneseq
    %v5699 = vshrl.u32 %v5698, 7
    %v5700 = vsub.s32 %v5697, %v5699
    %v5701 = vrot.slane %v5694, %v5700
    %v5703 = vunpack.c.l.s4 1983009808
    %v5704 = vunpack.c.0.s8 %v5703
    %v5705 = vlaneseq
    %v5706 = vshrl.u32 %v5705, 7
    %v5707 = vsub.s32 %v5704, %v5706
    %v5708 = vrot.slane %v5669, %v5707
    %v5709 = vcombine.low %v5701, %v5708
    %v5712 = vadd.f32 %v5659, %v5693
    %v5713 = vadd.f32 %v5660, %v5709
    %s5714 = sld [smem:[#allocation5 + $0x9]]
    %v5715 = vstv %s5714
    %v5716 = vadd.f32 %v5712, %v5715
    %v5717 = vadd.f32 %v5713, %v5715
    %v5718 = vmax.f32 %v5716, 0.0
    %v5719 = vmax.f32 %v5717, 0.0
    %v5720 = vld [vmem:[%s4 + $0x1b90] sm:$0xff]
    %v5721 = vld [vmem:[%s4 + $0x1b98] sm:$0xff]
    %v5722 = vld [vmem:[%s4 + $0x1ba0] sm:$0xff]
    %v5723 = vld [vmem:[%s4 + $0x1ba8] sm:$0xff]
    %v5724 = vld [vmem:[%s4 + $0x1bb0] sm:$0xff]
    %v5725 = vld [vmem:[%s4 + $0x1bb8] sm:$0xff]
    %v5726 = vld [vmem:[%s4 + $0x1bc0] sm:$0xff]
    %v5727 = vld [vmem:[%s4 + $0x1bc8] sm:$0xff]
    %v5728 = vld [vmem:[%s4 + $0x1bd0] sm:$0xff]
    %v5729 = vld [vmem:[%s4 + $0x1bd8] sm:$0xff]
    %v5730 = vld [vmem:[%s4 + $0x1be0] sm:$0xff]
    %v5731 = vld [vmem:[%s4 + $0x1be8] sm:$0xff]
    %v5732 = vld [vmem:[%s4 + $0x1bf0] sm:$0xff]
    %v5733 = vld [vmem:[%s4 + $0x1bf8] sm:$0xff]
    %v5734 = vld [vmem:[%s4 + $0x1c00] sm:$0xff]
    %v5735 = vld [vmem:[%s4 + $0x1c08] sm:$0xff]
    %v5736 = vld [vmem:[%s4 + $0x1c10] sm:$0xff]
    %v5737 = vld [vmem:[%s4 + $0x1c18] sm:$0xff]
    %v5738 = vld [vmem:[%s4 + $0x1c20] sm:$0xff]
    %v5739 = vld [vmem:[%s4 + $0x1c28] sm:$0xff]
    %v5740 = vld [vmem:[%s4 + $0x1c30] sm:$0xff]
    %v5741 = vld [vmem:[%s4 + $0x1c38] sm:$0xff]
    %v5742 = vld [vmem:[%s4 + $0x1c40] sm:$0xff]
    %v5743 = vld [vmem:[%s4 + $0x1c48] sm:$0xff]
    %v5744 = vld [vmem:[%s4 + $0x1c50] sm:$0xff]
    %v5745 = vld [vmem:[%s4 + $0x1c58] sm:$0xff]
    %v5746 = vld [vmem:[%s4 + $0x1c60] sm:$0xff]
    %v5747 = vld [vmem:[%s4 + $0x1c68] sm:$0xff]
    %v5748 = vld [vmem:[%s4 + $0x1c70] sm:$0xff]
    %v5749 = vld [vmem:[%s4 + $0x1c78] sm:$0xff]
    %v5750 = vld [vmem:[%s4 + $0x1c80] sm:$0xff]
    %v5751 = vld [vmem:[%s4 + $0x1c88] sm:$0xff]
    %v5752 = vld [vmem:[%s4 + $0x1c90] sm:$0xff]
    %v5753 = vld [vmem:[%s4 + $0x1c98] sm:$0xff]
    %v5754 = vld [vmem:[%s4 + $0x1ca0] sm:$0xff]
    %v5755 = vld [vmem:[%s4 + $0x1ca8] sm:$0xff]
    %v5756 = vld [vmem:[%s4 + $0x1cb0] sm:$0xff]
    %v5757 = vld [vmem:[%s4 + $0x1cb8] sm:$0xff]
    %v5758 = vld [vmem:[%s4 + $0x1cc0] sm:$0xff]
    %v5759 = vld [vmem:[%s4 + $0x1cc8] sm:$0xff]
    %v5760 = vld [vmem:[%s4 + $0x1cd0] sm:$0xff]
    %v5761 = vld [vmem:[%s4 + $0x1cd8] sm:$0xff]
    %v5762 = vld [vmem:[%s4 + $0x1ce0] sm:$0xff]
    %v5763 = vld [vmem:[%s4 + $0x1ce8] sm:$0xff]
    %v5764 = vld [vmem:[%s4 + $0x1cf0] sm:$0xff]
    %v5765 = vld [vmem:[%s4 + $0x1cf8] sm:$0xff]
    %v5766 = vld [vmem:[%s4 + $0x1d00] sm:$0xff]
    %v5767 = vld [vmem:[%s4 + $0x1d08] sm:$0xff]
    %v5768 = vld [vmem:[%s4 + $0x1d10] sm:$0xff]
    %v5769 = vld [vmem:[%s4 + $0x1d18] sm:$0xff]
    %v5770 = vld [vmem:[%s4 + $0x1d20] sm:$0xff]
    %v5771 = vld [vmem:[%s4 + $0x1d28] sm:$0xff]
    %v5772 = vld [vmem:[%s4 + $0x1d30] sm:$0xff]
    %v5773 = vld [vmem:[%s4 + $0x1d38] sm:$0xff]
    %v5774 = vld [vmem:[%s4 + $0x1d40] sm:$0xff]
    %v5775 = vld [vmem:[%s4 + $0x1d48] sm:$0xff]
    %v5776 = vld [vmem:[%s4 + $0x1d50] sm:$0xff]
    %v5777 = vld [vmem:[%s4 + $0x1d58] sm:$0xff]
    %v5778 = vld [vmem:[%s4 + $0x1d60] sm:$0xff]
    %v5779 = vld [vmem:[%s4 + $0x1d68] sm:$0xff]
    %v5780 = vld [vmem:[%s4 + $0x1d70] sm:$0xff]
    %v5781 = vld [vmem:[%s4 + $0x1d78] sm:$0xff]
    %v5782 = vld [vmem:[%s4 + $0x1d80] sm:$0xff]
    %v5783 = vld [vmem:[%s4 + $0x1d88] sm:$0xff]
    %v5784 = vld [vmem:[%s4 + $0x1d90] sm:$0xff]
    %v5785 = vld [vmem:[%s4 + $0x1d98] sm:$0xff]
    %v5786 = vld [vmem:[%s4 + $0x1da0] sm:$0xff]
    %v5787 = vld [vmem:[%s4 + $0x1da8] sm:$0xff]
    %v5788 = vld [vmem:[%s4 + $0x1db0] sm:$0xff]
    %v5789 = vld [vmem:[%s4 + $0x1db8] sm:$0xff]
    %v5790 = vld [vmem:[%s4 + $0x1dc0] sm:$0xff]
    %v5791 = vld [vmem:[%s4 + $0x1dc8] sm:$0xff]
    %v5792 = vld [vmem:[%s4 + $0x1dd0] sm:$0xff]
    %v5793 = vld [vmem:[%s4 + $0x1dd8] sm:$0xff]
    %v5794 = vld [vmem:[%s4 + $0x1de0] sm:$0xff]
    %v5795 = vld [vmem:[%s4 + $0x1de8] sm:$0xff]
    %v5796 = vld [vmem:[%s4 + $0x1df0] sm:$0xff]
    %v5797 = vld [vmem:[%s4 + $0x1df8] sm:$0xff]
    %v5798 = vld [vmem:[%s4 + $0x1e00] sm:$0xff]
    %v5799 = vld [vmem:[%s4 + $0x1e08] sm:$0xff]
    %v5800 = vld [vmem:[%s4 + $0x1e10] sm:$0xff]
    %v5801 = vld [vmem:[%s4 + $0x1e18] sm:$0xff]
    %v5802 = vld [vmem:[%s4 + $0x1e20] sm:$0xff]
    %v5803 = vld [vmem:[%s4 + $0x1e28] sm:$0xff]
    %v5804 = vld [vmem:[%s4 + $0x1e30] sm:$0xff]
    %v5805 = vld [vmem:[%s4 + $0x1e38] sm:$0xff]
    %v5806 = vld [vmem:[%s4 + $0x1e40] sm:$0xff]
    %v5807 = vld [vmem:[%s4 + $0x1e48] sm:$0xff]
    %v5808 = vld [vmem:[%s4 + $0x1e50] sm:$0xff]
    %v5809 = vld [vmem:[%s4 + $0x1e58] sm:$0xff]
    %v5810 = vld [vmem:[%s4 + $0x1e60] sm:$0xff]
    %v5811 = vld [vmem:[%s4 + $0x1e68] sm:$0xff]
    %v5812 = vld [vmem:[%s4 + $0x1e70] sm:$0xff]
    %v5813 = vld [vmem:[%s4 + $0x1e78] sm:$0xff]
    %v5814 = vld [vmem:[%s4 + $0x1e80] sm:$0xff]
    %v5815 = vld [vmem:[%s4 + $0x1e88] sm:$0xff]
    %v5816 = vld [vmem:[%s4 + $0x1e90] sm:$0xff]
    %v5817 = vld [vmem:[%s4 + $0x1e98] sm:$0xff]
    %v5820 = vcombine.high %v5718, %v5718
    %v5822 = vunpack.c.l.s4 1983009808
    %v5823 = vunpack.c.0.s8 %v5822
    %v5824 = vlaneseq
    %v5825 = vshrl.u32 %v5824, 7
    %v5826 = vsub.s32 %v5823, %v5825
    %v5827 = vrot.slane %v5718, %v5826
    %v5829 = vunpack.c.l.s4 1983009808
    %v5830 = vunpack.c.0.s8 %v5829
    %v5831 = vlaneseq
    %v5832 = vshrl.u32 %v5831, 7
    %v5833 = vsub.s32 %v5830, %v5832
    %v5834 = vrot.slane %v5820, %v5833
    %v5835 = vcombine.high %v5827, %v5827
    %v5836 = vcombine.high %v5834, %v5834
    %v5837 = vcombine.high %v5719, %v5719
    %v5839 = vunpack.c.l.s4 1983009808
    %v5840 = vunpack.c.0.s8 %v5839
    %v5841 = vlaneseq
    %v5842 = vshrl.u32 %v5841, 7
    %v5843 = vsub.s32 %v5840, %v5842
    %v5844 = vrot.slane %v5719, %v5843
    %v5846 = vunpack.c.l.s4 1983009808
    %v5847 = vunpack.c.0.s8 %v5846
    %v5848 = vlaneseq
    %v5849 = vshrl.u32 %v5848, 7
    %v5850 = vsub.s32 %v5847, %v5849
    %v5851 = vrot.slane %v5837, %v5850
    %v5852 = vcombine.high %v5844, %v5844
    %v5859 = vsel %vm808, %v5851, 0
    %5861 = vmatprep.subr.mxu0 0.0
    %5862 = vmatpush1.msra.mxu0 %v5720
    %5863 = vmatprep.subr.mxu0 0.0
    %5864 = vmatpush1.msra.mxu0 %v5721
    %5865 = vmatprep.subr.mxu0 0.0
    %5866 = vmatpush1.msra.mxu0 %v5722
    %5867 = vmatprep.subr.mxu0 0.0
    %5868 = vmatpush1.msra.mxu0 %v5723
    %5869 = vmatprep.subr.mxu0 0.0
    %5870 = vmatpush1.msra.mxu0 %v5724
    %5871 = vmatprep.subr.mxu0 0.0
    %5872 = vmatpush1.msra.mxu0 %v5725
    %5873 = vmatprep.subr.mxu0 0.0
    %5874 = vmatpush1.msra.mxu0 %v5726
    %5875 = vmatprep.subr.mxu0 0.0
    %5876 = vmatpush1.msra.mxu0 %v5727
    %5877 = vmatprep.subr.mxu0 0.0
    %5878 = vmatpush1.msra.mxu0 %v5728
    %5879 = vmatprep.subr.mxu0 0.0
    %5880 = vmatpush1.msra.mxu0 %v5729
    %5881 = vmatprep.subr.mxu0 0.0
    %5882 = vmatpush1.msra.mxu0 %v5730
    %5883 = vmatprep.subr.mxu0 0.0
    %5884 = vmatpush1.msra.mxu0 %v5731
    %5885 = vmatprep.subr.mxu0 0.0
    %5886 = vmatpush1.msra.mxu0 %v5732
    %5887 = vmatprep.subr.mxu0 0.0
    %5888 = vmatpush1.msra.mxu0 %v5733
    %5889 = vmatprep.subr.mxu0 0.0
    %5890 = vmatpush1.msra.mxu0 %v5734
    %5891 = vmatprep.subr.mxu0 0.0
    %5892 = vmatpush1.msra.mxu0 %v5735
    %5893 = vmatprep.subr.mxu0 0.0
    %5894 = vmatpush1.msra.mxu0 %v5736
    %5895 = vmatprep.subr.mxu0 0.0
    %5896 = vmatpush1.msra.mxu0 %v5737
    %5897 = vmatprep.subr.mxu0 0.0
    %5898 = vmatpush1.msra.mxu0 %v5738
    %5899 = vmatprep.subr.mxu0 0.0
    %5900 = vmatpush1.msra.mxu0 %v5739
    %5901 = vmatprep.subr.mxu0 0.0
    %5902 = vmatpush1.msra.mxu0 %v5740
    %5903 = vmatprep.subr.mxu0 0.0
    %5904 = vmatpush1.msra.mxu0 %v5741
    %5905 = vmatprep.subr.mxu0 0.0
    %5906 = vmatpush1.msra.mxu0 %v5742
    %5907 = vmatprep.subr.mxu0 0.0
    %5908 = vmatpush1.msra.mxu0 %v5743
    %5909 = vmatprep.subr.mxu0 0.0
    %5910 = vmatpush1.msra.mxu0 %v5744
    %5911 = vmatprep.subr.mxu0 0.0
    %5912 = vmatpush1.msra.mxu0 %v5745
    %5913 = vmatprep.subr.mxu0 0.0
    %5914 = vmatpush1.msra.mxu0 %v5746
    %5915 = vmatprep.subr.mxu0 0.0
    %5916 = vmatpush1.msra.mxu0 %v5747
    %5917 = vmatprep.subr.mxu0 0.0
    %5918 = vmatpush1.msra.mxu0 %v5748
    %5919 = vmatprep.subr.mxu0 0.0
    %5920 = vmatpush1.msra.mxu0 %v5749
    %5921 = vmatprep.subr.mxu0 0.0
    %5922 = vmatpush1.msra.mxu0 %v5750
    %5923 = vmatprep.subr.mxu0 0.0
    %5924 = vmatpush1.msra.mxu0 %v5751
    %5925 = vmatprep.mubr.f32.mxu0 %v5835
    %5926 = vmatmul.mubr.f32.gmra.mrb[0].mxu0 %v5827
    %v5927 = vpop.f32.mrb[0].mxu0
    %v5928 = vadd.f32 0.0, %v5927
    %v5929 = vpop.f32.mrb[0].mxu0
    %5930 = vdwg.mxu0
    %5931 = vmatprep.subr.mxu0 0.0
    %5932 = vmatpush1.msra.mxu0 %v5752
    %5933 = vmatprep.subr.mxu0 0.0
    %5934 = vmatpush1.msra.mxu0 %v5753
    %5935 = vmatprep.subr.mxu0 0.0
    %5936 = vmatpush1.msra.mxu0 %v5754
    %5937 = vmatprep.subr.mxu0 0.0
    %5938 = vmatpush1.msra.mxu0 %v5755
    %5939 = vmatprep.subr.mxu0 0.0
    %5940 = vmatpush1.msra.mxu0 %v5756
    %5941 = vmatprep.subr.mxu0 0.0
    %5942 = vmatpush1.msra.mxu0 %v5757
    %5943 = vmatprep.subr.mxu0 0.0
    %5944 = vmatpush1.msra.mxu0 %v5758
    %5945 = vmatprep.subr.mxu0 0.0
    %5946 = vmatpush1.msra.mxu0 %v5759
    %5947 = vmatprep.subr.mxu0 0.0
    %5948 = vmatpush1.msra.mxu0 %v5760
    %5949 = vmatprep.subr.mxu0 0.0
    %5950 = vmatpush1.msra.mxu0 %v5761
    %5951 = vmatprep.subr.mxu0 0.0
    %5952 = vmatpush1.msra.mxu0 %v5762
    %5953 = vmatprep.subr.mxu0 0.0
    %5954 = vmatpush1.msra.mxu0 %v5763
    %5955 = vmatprep.subr.mxu0 0.0
    %5956 = vmatpush1.msra.mxu0 %v5764
    %5957 = vmatprep.subr.mxu0 0.0
    %5958 = vmatpush1.msra.mxu0 %v5765
    %5959 = vmatprep.subr.mxu0 0.0
    %5960 = vmatpush1.msra.mxu0 %v5766
    %5961 = vmatprep.subr.mxu0 0.0
    %5962 = vmatpush1.msra.mxu0 %v5767
    %5963 = vmatprep.subr.mxu0 0.0
    %5964 = vmatpush1.msra.mxu0 %v5768
    %5965 = vmatprep.subr.mxu0 0.0
    %5966 = vmatpush1.msra.mxu0 %v5769
    %5967 = vmatprep.subr.mxu0 0.0
    %5968 = vmatpush1.msra.mxu0 %v5770
    %5969 = vmatprep.subr.mxu0 0.0
    %5970 = vmatpush1.msra.mxu0 %v5771
    %5971 = vmatprep.subr.mxu0 0.0
    %5972 = vmatpush1.msra.mxu0 %v5772
    %5973 = vmatprep.subr.mxu0 0.0
    %5974 = vmatpush1.msra.mxu0 %v5773
    %5975 = vmatprep.subr.mxu0 0.0
    %5976 = vmatpush1.msra.mxu0 %v5774
    %5977 = vmatprep.subr.mxu0 0.0
    %5978 = vmatpush1.msra.mxu0 %v5775
    %5979 = vmatprep.subr.mxu0 0.0
    %5980 = vmatpush1.msra.mxu0 %v5776
    %5981 = vmatprep.subr.mxu0 0.0
    %5982 = vmatpush1.msra.mxu0 %v5777
    %5983 = vmatprep.subr.mxu0 0.0
    %5984 = vmatpush1.msra.mxu0 %v5778
    %5985 = vmatprep.subr.mxu0 0.0
    %5986 = vmatpush1.msra.mxu0 %v5779
    %5987 = vmatprep.subr.mxu0 0.0
    %5988 = vmatpush1.msra.mxu0 %v5780
    %5989 = vmatprep.subr.mxu0 0.0
    %5990 = vmatpush1.msra.mxu0 %v5781
    %5991 = vmatprep.subr.mxu0 0.0
    %5992 = vmatpush1.msra.mxu0 %v5782
    %5993 = vmatprep.subr.mxu0 0.0
    %5994 = vmatpush1.msra.mxu0 %v5783
    %5995 = vmatprep.mubr.f32.mxu0 %v5836
    %5996 = vmatmul.mubr.f32.gmra.mrb[0].mxu0 %v5834
    %v5997 = vpop.f32.mrb[0].mxu0
    %v5998 = vadd.f32 %v5928, %v5997
    %v5999 = vpop.f32.mrb[0].mxu0
    %6000 = vdwg.mxu0
    %6001 = vmatprep.subr.mxu0 0.0
    %6002 = vmatpush1.msra.mxu0 %v5784
    %6003 = vmatprep.subr.mxu0 0.0
    %6004 = vmatpush1.msra.mxu0 %v5785
    %6005 = vmatprep.subr.mxu0 0.0
    %6006 = vmatpush1.msra.mxu0 %v5786
    %6007 = vmatprep.subr.mxu0 0.0
    %6008 = vmatpush1.msra.mxu0 %v5787
    %6009 = vmatprep.subr.mxu0 0.0
    %6010 = vmatpush1.msra.mxu0 %v5788
    %6011 = vmatprep.subr.mxu0 0.0
    %6012 = vmatpush1.msra.mxu0 %v5789
    %6013 = vmatprep.subr.mxu0 0.0
    %6014 = vmatpush1.msra.mxu0 %v5790
    %6015 = vmatprep.subr.mxu0 0.0
    %6016 = vmatpush1.msra.mxu0 %v5791
    %6017 = vmatprep.subr.mxu0 0.0
    %6018 = vmatpush1.msra.mxu0 %v5792
    %6019 = vmatprep.subr.mxu0 0.0
    %6020 = vmatpush1.msra.mxu0 %v5793
    %6021 = vmatprep.subr.mxu0 0.0
    %6022 = vmatpush1.msra.mxu0 %v5794
    %6023 = vmatprep.subr.mxu0 0.0
    %6024 = vmatpush1.msra.mxu0 %v5795
    %6025 = vmatprep.subr.mxu0 0.0
    %6026 = vmatpush1.msra.mxu0 %v5796
    %6027 = vmatprep.subr.mxu0 0.0
    %6028 = vmatpush1.msra.mxu0 %v5797
    %6029 = vmatprep.subr.mxu0 0.0
    %6030 = vmatpush1.msra.mxu0 %v5798
    %6031 = vmatprep.subr.mxu0 0.0
    %6032 = vmatpush1.msra.mxu0 %v5799
    %6033 = vmatprep.subr.mxu0 0.0
    %6034 = vmatpush1.msra.mxu0 %v5800
    %6035 = vmatprep.subr.mxu0 0.0
    %6036 = vmatpush1.msra.mxu0 %v5801
    %6037 = vmatprep.subr.mxu0 0.0
    %6038 = vmatpush1.msra.mxu0 %v5802
    %6039 = vmatprep.subr.mxu0 0.0
    %6040 = vmatpush1.msra.mxu0 %v5803
    %6041 = vmatprep.subr.mxu0 0.0
    %6042 = vmatpush1.msra.mxu0 %v5804
    %6043 = vmatprep.subr.mxu0 0.0
    %6044 = vmatpush1.msra.mxu0 %v5805
    %6045 = vmatprep.subr.mxu0 0.0
    %6046 = vmatpush1.msra.mxu0 %v5806
    %6047 = vmatprep.subr.mxu0 0.0
    %6048 = vmatpush1.msra.mxu0 %v5807
    %6049 = vmatprep.subr.mxu0 0.0
    %6050 = vmatpush1.msra.mxu0 %v5808
    %6051 = vmatprep.subr.mxu0 0.0
    %6052 = vmatpush1.msra.mxu0 %v5809
    %6053 = vmatprep.subr.mxu0 0.0
    %6054 = vmatpush1.msra.mxu0 %v5810
    %6055 = vmatprep.subr.mxu0 0.0
    %6056 = vmatpush1.msra.mxu0 %v5811
    %6057 = vmatprep.subr.mxu0 0.0
    %6058 = vmatpush1.msra.mxu0 %v5812
    %6059 = vmatprep.subr.mxu0 0.0
    %6060 = vmatpush1.msra.mxu0 %v5813
    %6061 = vmatprep.subr.mxu0 0.0
    %6062 = vmatpush1.msra.mxu0 %v5814
    %6063 = vmatprep.subr.mxu0 0.0
    %6064 = vmatpush1.msra.mxu0 %v5815
    %6065 = vmatprep.mubr.f32.mxu0 %v5852
    %6066 = vmatmul.mubr.f32.gmra.mrb[0].mxu0 %v5844
    %v6067 = vpop.f32.mrb[0].mxu0
    %v6068 = vadd.f32 %v5998, %v6067
    %v6069 = vpop.f32.mrb[0].mxu0
    %6070 = vdwg.mxu0
    %6071 = vmatprep.subr.mxu0 0.0
    %6072 = vmatpush1.msra.mxu0 %v5816
    %6073 = vmatprep.subr.mxu0 0.0
    %6074 = vmatpush1.msra.mxu0 %v5817
    %6075 = vmatprep.subr.mxu0 0.0
    %6076 = vmatpush1.msra.mxu0 0.0
    %6077 = vmatprep.subr.mxu0 0.0
    %6078 = vmatpush1.msra.mxu0 0.0
    %6079 = vmatprep.subr.mxu0 0.0
    %6080 = vmatpush1.msra.mxu0 0.0
    %6081 = vmatprep.subr.mxu0 0.0
    %6082 = vmatpush1.msra.mxu0 0.0
    %6083 = vmatprep.subr.mxu0 0.0
    %6084 = vmatpush1.msra.mxu0 0.0
    %6085 = vmatprep.subr.mxu0 0.0
    %6086 = vmatpush1.msra.mxu0 0.0
    %6087 = vmatprep.subr.mxu0 0.0
    %6088 = vmatpush1.msra.mxu0 0.0
    %6089 = vmatprep.subr.mxu0 0.0
    %6090 = vmatpush1.msra.mxu0 0.0
    %6091 = vmatprep.subr.mxu0 0.0
    %6092 = vmatpush1.msra.mxu0 0.0
    %6093 = vmatprep.subr.mxu0 0.0
    %6094 = vmatpush1.msra.mxu0 0.0
    %6095 = vmatprep.subr.mxu0 0.0
    %6096 = vmatpush1.msra.mxu0 0.0
    %6097 = vmatprep.subr.mxu0 0.0
    %6098 = vmatpush1.msra.mxu0 0.0
    %6099 = vmatprep.subr.mxu0 0.0
    %6100 = vmatpush1.msra.mxu0 0.0
    %6101 = vmatprep.subr.mxu0 0.0
    %6102 = vmatpush1.msra.mxu0 0.0
    %6103 = vmatprep.subr.mxu0 0.0
    %6104 = vmatpush1.msra.mxu0 0.0
    %6105 = vmatprep.subr.mxu0 0.0
    %6106 = vmatpush1.msra.mxu0 0.0
    %6107 = vmatprep.subr.mxu0 0.0
    %6108 = vmatpush1.msra.mxu0 0.0
    %6109 = vmatprep.subr.mxu0 0.0
    %6110 = vmatpush1.msra.mxu0 0.0
    %6111 = vmatprep.subr.mxu0 0.0
    %6112 = vmatpush1.msra.mxu0 0.0
    %6113 = vmatprep.subr.mxu0 0.0
    %6114 = vmatpush1.msra.mxu0 0.0
    %6115 = vmatprep.subr.mxu0 0.0
    %6116 = vmatpush1.msra.mxu0 0.0
    %6117 = vmatprep.subr.mxu0 0.0
    %6118 = vmatpush1.msra.mxu0 0.0
    %6119 = vmatprep.subr.mxu0 0.0
    %6120 = vmatpush1.msra.mxu0 0.0
    %6121 = vmatprep.subr.mxu0 0.0
    %6122 = vmatpush1.msra.mxu0 0.0
    %6123 = vmatprep.subr.mxu0 0.0
    %6124 = vmatpush1.msra.mxu0 0.0
    %6125 = vmatprep.subr.mxu0 0.0
    %6126 = vmatpush1.msra.mxu0 0.0
    %6127 = vmatprep.subr.mxu0 0.0
    %6128 = vmatpush1.msra.mxu0 0.0
    %6129 = vmatprep.subr.mxu0 0.0
    %6130 = vmatpush1.msra.mxu0 0.0
    %6131 = vmatprep.subr.mxu0 0.0
    %6132 = vmatpush1.msra.mxu0 0.0
    %6133 = vmatprep.subr.mxu0 0.0
    %6134 = vmatpush1.msra.mxu0 0.0
    %6135 = vmatprep.mubr.f32.mxu0 0.0
    %6136 = vmatmul.mubr.f32.gmra.mrb[0].mxu0 %v5859
    %v6137 = vpop.f32.mrb[0].mxu0
    %v6138 = vadd.f32 %v6068, %v6137
    %v6139 = vpop.f32.mrb[0].mxu0
    %6140 = vdwg.mxu0
    %v6141 = vadd.f32 %v5550, %v6138
    %v6142 = vld [vmem:[%s5] sm:$0x1]
    %v6144 = vlaneseq
    %v6145 = vshrl.u32 %v6144, 7
    %v6146 = vsub.s32 0, %v6145
    %v6147 = vrot.slane %v6142, %v6146
    %v6149 = vadd.f32 %v6141, %v6147
    %v6150 = vmax.f32 %v6149, 0.0
    %v6151 = vld [vmem:[%s6] sm:$0xff]
    %v6152 = vld [vmem:[%s6 + $0x8] sm:$0xff]
    %v6153 = vld [vmem:[%s6 + $0x10] sm:$0xff]
    %v6154 = vld [vmem:[%s6 + $0x18] sm:$0xff]
    %v6155 = vld [vmem:[%s6 + $0x20] sm:$0xff]
    %v6156 = vld [vmem:[%s6 + $0x28] sm:$0xff]
    %v6157 = vld [vmem:[%s6 + $0x30] sm:$0xff]
    %v6158 = vld [vmem:[%s6 + $0x38] sm:$0xff]
    %v6159 = vld [vmem:[%s7] sm:$0x1]
    %v6161 = vlaneseq
    %v6162 = vshrl.u32 %v6161, 7
    %v6163 = vsub.s32 0, %v6162
    %v6164 = vrot.slane %v6159, %v6163
    %vm6166 = vcmask 523264
    %v6168 = vsel %vm6166, %v6150, 0
    %6170 = vmatprep.subr.mxu0 0.0
    %6171 = vmatpush1.msra.mxu0 %v6151
    %6172 = vmatprep.subr.mxu0 0.0
    %6173 = vmatpush1.msra.mxu0 %v6152
    %6174 = vmatprep.subr.mxu0 0.0
    %6175 = vmatpush1.msra.mxu0 %v6153
    %6176 = vmatprep.subr.mxu0 0.0
    %6177 = vmatpush1.msra.mxu0 %v6154
    %6178 = vmatprep.subr.mxu0 0.0
    %6179 = vmatpush1.msra.mxu0 %v6155
    %6180 = vmatprep.subr.mxu0 0.0
    %6181 = vmatpush1.msra.mxu0 %v6156
    %6182 = vmatprep.subr.mxu0 0.0
    %6183 = vmatpush1.msra.mxu0 %v6157
    %6184 = vmatprep.subr.mxu0 0.0
    %6185 = vmatpush1.msra.mxu0 %v6158
    %6186 = vmatprep.subr.mxu0 0.0
    %6187 = vmatpush1.msra.mxu0 0.0
    %6188 = vmatprep.subr.mxu0 0.0
    %6189 = vmatpush1.msra.mxu0 0.0
    %6190 = vmatprep.subr.mxu0 0.0
    %6191 = vmatpush1.msra.mxu0 0.0
    %6192 = vmatprep.subr.mxu0 0.0
    %6193 = vmatpush1.msra.mxu0 0.0
    %6194 = vmatprep.subr.mxu0 0.0
    %6195 = vmatpush1.msra.mxu0 0.0
    %6196 = vmatprep.subr.mxu0 0.0
    %6197 = vmatpush1.msra.mxu0 0.0
    %6198 = vmatprep.subr.mxu0 0.0
    %6199 = vmatpush1.msra.mxu0 0.0
    %6200 = vmatprep.subr.mxu0 0.0
    %6201 = vmatpush1.msra.mxu0 0.0
    %6202 = vmatprep.subr.mxu0 0.0
    %6203 = vmatpush1.msra.mxu0 0.0
    %6204 = vmatprep.subr.mxu0 0.0
    %6205 = vmatpush1.msra.mxu0 0.0
    %6206 = vmatprep.subr.mxu0 0.0
    %6207 = vmatpush1.msra.mxu0 0.0
    %6208 = vmatprep.subr.mxu0 0.0
    %6209 = vmatpush1.msra.mxu0 0.0
    %6210 = vmatprep.subr.mxu0 0.0
    %6211 = vmatpush1.msra.mxu0 0.0
    %6212 = vmatprep.subr.mxu0 0.0
    %6213 = vmatpush1.msra.mxu0 0.0
    %6214 = vmatprep.subr.mxu0 0.0
    %6215 = vmatpush1.msra.mxu0 0.0
    %6216 = vmatprep.subr.mxu0 0.0
    %6217 = vmatpush1.msra.mxu0 0.0
    %6218 = vmatprep.subr.mxu0 0.0
    %6219 = vmatpush1.msra.mxu0 0.0
    %6220 = vmatprep.subr.mxu0 0.0
    %6221 = vmatpush1.msra.mxu0 0.0
    %6222 = vmatprep.subr.mxu0 0.0
    %6223 = vmatpush1.msra.mxu0 0.0
    %6224 = vmatprep.subr.mxu0 0.0
    %6225 = vmatpush1.msra.mxu0 0.0
    %6226 = vmatprep.subr.mxu0 0.0
    %6227 = vmatpush1.msra.mxu0 0.0
    %6228 = vmatprep.subr.mxu0 0.0
    %6229 = vmatpush1.msra.mxu0 0.0
    %6230 = vmatprep.subr.mxu0 0.0
    %6231 = vmatpush1.msra.mxu0 0.0
    %6232 = vmatprep.subr.mxu0 0.0
    %6233 = vmatpush1.msra.mxu0 0.0
    %6234 = vmatprep.mubr.f32.mxu0 0.0
    %6235 = vmatmul.mubr.f32.gmra.mrb[0].mxu0 %v6168
    %v6236 = vpop.f32.mrb[0].mxu0
    %v6237 = vadd.f32 %v6164, %v6236
    %v6238 = vpop.f32.mrb[0].mxu0
    %6239 = vdwg.mxu0
    %vm6240 = vcmask 74752
    %6241 = vst.msk [vmem:[#allocation7] sm:$0x3] %vm6240, %v6237
    // Predicated region
    $region42: #{model1_forward.1} parent=1 // pred_check
      _
    $region43: #{model1_forward.1} parent=1 // pred_check_branch
      %6243 = sbr.rel (0) target = $region45
    $region44: #{model1_forward.1} parent=1 // pred_region
      %s6245 = ssub.s32 32, 32
      %6246 = vsyncadd [#allocation3], %s6245
      %s6248 = sshll.u32 [#allocation7], 4
      %s6249 = int_to_ptr.vmem [resolvable:$true] %s6248
      %6251 = dma.vmem_to_hbm [thread:$0]  %s6249, 32, %s8, [#allocation3]
    $region45: #{model1_forward.1} parent=1 // pred_fallthru
      _
    // Predicated region
    $region46: #{model1_forward.1} parent=1 // pred_check
      _
    $region47: #{model1_forward.1} parent=1 // pred_check_branch
      %6253 = sbr.rel (0) target = $region49
    $region48: #{model1_forward.1} parent=1 // pred_region
      %6254 = dma.done [#allocation3], 32
    $region49: #{model1_forward.1} parent=1 // pred_fallthru
      _
    %6255 = vsyncpa [#allocation3], 1
    %6256 = vsyncpa [#allocation4], 1
    %6257 = vsyncpa [#allocation6], 1

</llo_original>
